<compile_context>
chip_gen: v5e
topology: v5e:2x2
jax: 0.10.0
libtpu: 0.0.40
codegen_flags: <defaults>
</compile_context>

<pallas_src>
import functools
import math

import numpy as np
import jax
import jax.numpy as jnp
from jax import lax
from jax.experimental import pallas as pl
from jax.experimental.pallas import tpu as pltpu


# ----------------------------------------------------------------------------
# Small helpers
# ----------------------------------------------------------------------------

def _bn_scale_shift(bn, eps=1e-5):
    gamma, beta, rmean, rvar = bn
    scale = gamma / jnp.sqrt(rvar + eps)
    shift = beta - rmean * scale
    return scale, shift


def _col(v):
    """(C,) -> (C, 1) f32 column for per-output-channel broadcast along lanes."""
    return v.reshape(v.shape[0], 1).astype(jnp.float32)


def _bcast_spec(shape):
    """Whole-array block, constant across the batch grid axis."""
    zeros = (0,) * len(shape)
    return pl.BlockSpec(tuple(shape), lambda n, _z=zeros: _z)


def _batch_spec(shape):
    """One image per grid step; full extent on the remaining (channel, spatial) dims."""
    nd = len(shape)
    return pl.BlockSpec((1,) + tuple(shape[1:]), lambda n, _nd=nd: (n,) + (0,) * (_nd - 1))


def _phase_flatten_cm(x_nchw, kh, kw, stride, pad, pad_value):
    """Pad, split into stride^2 phases, flatten spatial dims (channel-major).

    Result (N, C, P*Lq): every conv/pool tap's input window is a CONTIGUOUS length-Lo
    slab at a static per-tap lane offset (no im2col in HBM).  Output columns in
    [Wo, Wq) of each row are row-wrap garbage cropped by the caller.
    """
    N, C, H, W = x_nchw.shape
    s = stride
    Ho = (H + 2 * pad - kh) // s + 1
    Wo = (W + 2 * pad - kw) // s + 1
    Hp, Wp = H + 2 * pad, W + 2 * pad
    extra_h = (-Hp) % s + s      # make H a multiple of s, + s slack rows for tap overrun
    extra_w = (-Wp) % s
    xp = jnp.pad(x_nchw, ((0, 0), (0, 0), (pad, pad + extra_h), (pad, pad + extra_w)),
                 constant_values=pad_value)
    Hq, Wq = (Hp + extra_h) // s, (Wp + extra_w) // s
    if s == 1:
        xph = xp[:, :, None]                                           # (N, C, 1, Hq, Wq)
    else:
        xph = jnp.stack([xp[:, :, a::s, b::s] for a in range(s) for b in range(s)],
                        axis=2)                                        # (N, C, s*s, Hq, Wq)
    P = s * s
    Lq = Hq * Wq
    Lo = Ho * Wq
    xflat = xph.reshape(N, C, P * Lq)
    taps = []
    for di in range(kh):
        for dj in range(kw):
            p = (di % s) * s + (dj % s)
            within = (di // s) * Wq + (dj // s)
            # VMEM value slices have no runtime OOB check -> guarantee bounds here.
            assert within + Lo <= Lq, "conv/pool tap window overruns its phase slab"
            taps.append(p * Lq + within)
    geom = dict(Ho=Ho, Wo=Wo, Wq=Wq, Lo=Lo, flatL=P * Lq, taps=tuple(taps))
    return xflat, geom


# ----------------------------------------------------------------------------
# Pallas kernels
# ----------------------------------------------------------------------------

def _stem_conv_kernel(x_ref, w_ref, s_ref, b_ref, o_ref, *, taps, lo):
    """conv0 (7x7 s2 p3, no bias) + norm0 + relu0, taps folded into one MXU contraction.

    The phase-split flattened image is loaded once; each of the 49 taps is a static
    lane-offset slice, all concatenated along the contraction (sublane) axis so the
    whole conv is a single bf16 matmul with K = 49*Cin.  Output is channel-major with
    the long spatial dim on lanes (lane-dense stores).
    """
    xv = x_ref[0]                                                   # (Cin, flatL) f32
    stack = jnp.concatenate([xv[:, off:off + lo] for off in taps], axis=0)
    y = jnp.dot(w_ref[...], stack.astype(jnp.bfloat16),
                preferred_element_type=jnp.float32)                 # (Cout, Lo) f32
    o_ref[0] = jnp.maximum(y * s_ref[...] + b_ref[...], 0.0)        # fused BN + ReLU


def _maxpool_kernel(x_ref, o_ref, *, taps, lo):
    """MaxPool via a static in-kernel tap reduction over the resident block."""
    xv = x_ref[0]                                                   # (C, flatL) f32
    acc = xv[:, taps[0]:taps[0] + lo]
    for off in taps[1:]:
        acc = jnp.maximum(acc, xv[:, off:off + lo])
    o_ref[0] = acc


def _conv3x3_same(y, w_ref, width, length):
    """3x3 / stride-1 / pad-1 conv on a VMEM-resident (C, H*W) value.

    Tap windows are static lane shifts of a zero-extended copy plus a column-validity
    mask (handles zero padding and row wrap exactly, no spatial reshapes); the nine
    shifted slabs are concatenated along the contraction axis -> one MXU matmul, K=9*C.
    """
    c = y.shape[0]
    lane = lax.broadcasted_iota(jnp.int32, (1, length), 1) % width
    cmask = (lane >= 1, None, lane <= width - 2)                    # dj = 0, 1, 2
    zpad = jnp.zeros((c, width + 1), jnp.float32)
    yp = jnp.concatenate([zpad, y, zpad], axis=1)                   # (c, L + 2W + 2)
    slabs = []
    for di in range(3):
        for dj in range(3):
            delta = (di - 1) * width + (dj - 1)
            sl = yp[:, width + 1 + delta: width + 1 + delta + length]
            m = cmask[dj]
            if m is not None:
                sl = jnp.where(m, sl, 0.0)
            slabs.append(sl)
    stack = jnp.concatenate(slabs, axis=0).astype(jnp.bfloat16)     # (9c, L)
    return jnp.dot(w_ref[...], stack, preferred_element_type=jnp.float32)   # (G, L) f32


def _dense_block_kernel(*refs, n_layers, width, length, mode):
    """One fused pallas_call per dense block.

    Per layer (torchvision _DenseLayer): norm1 -> relu -> 1x1 conv -> norm2 -> relu ->
    3x3 conv (pad 1); new features are concatenated as VMEM values (never spilled to
    HBM per layer).  Tail: either a fused _Transition (norm -> relu -> 1x1 conv ->
    AvgPool2d(2,2) done as one matmul against a constant 0/0.25 pooling matrix) or the
    final norm5 affine (no ReLU).
    """
    n_tail = 4 if mode == "transition" else 2
    x_ref = refs[0]
    layer_refs = refs[1:1 + 6 * n_layers]
    tail = refs[1 + 6 * n_layers:1 + 6 * n_layers + n_tail]
    o_ref = refs[1 + 6 * n_layers + n_tail]

    feats = [x_ref[0].astype(jnp.float32)]                          # growing list of (c, L)
    for li in range(n_layers):
        s1, b1, w1, s2, b2, w2 = layer_refs[6 * li:6 * li + 6]
        cur = feats[0] if len(feats) == 1 else jnp.concatenate(feats, axis=0)
        a = jnp.maximum(cur * s1[...] + b1[...], 0.0)               # norm1 + relu1 (f32 VPU)
        y = jnp.dot(w1[...], a.astype(jnp.bfloat16),
                    preferred_element_type=jnp.float32)             # 1x1 bottleneck conv
        y = jnp.maximum(y * s2[...] + b2[...], 0.0)                 # norm2 + relu2
        feats.append(_conv3x3_same(y, w2, width, length))           # conv2 (raw new features)

    full = jnp.concatenate(feats, axis=0)                           # (c_tot, L)
    if mode == "transition":
        ts, tb, wt, pmat = tail
        t = jnp.maximum(full * ts[...] + tb[...], 0.0)              # transition norm + relu
        z = jnp.dot(wt[...], t.astype(jnp.bfloat16),
                    preferred_element_type=jnp.float32)             # 1x1 conv (halve channels)
        o_ref[0] = jnp.dot(z.astype(jnp.bfloat16), pmat[...],
                           preferred_element_type=jnp.float32)      # fused exact AvgPool2d(2,2)
    else:
        s5, b5 = tail
        o_ref[0] = full * s5[...] + b5[...]                         # norm5 (no ReLU)


# ----------------------------------------------------------------------------
# Wrappers (layout plumbing in JAX, all FLOPs / reductions in Pallas)
# ----------------------------------------------------------------------------

def stem_conv(x_nchw, w_oihw, scale, shift):
    cout, cin, kh, kw = w_oihw.shape
    xflat, g = _phase_flatten_cm(x_nchw, kh, kw, stride=2, pad=3, pad_value=0.0)
    N = xflat.shape[0]
    lo, flatL = g["Lo"], g["flatL"]
    ntaps = kh * kw
    # Weight column order must match the in-kernel (tap, channel) concat order.
    w_mat = jnp.transpose(w_oihw, (0, 2, 3, 1)).reshape(cout, ntaps * cin).astype(jnp.bfloat16)
    out = pl.pallas_call(
        functools.partial(_stem_conv_kernel, taps=g["taps"], lo=lo),
        out_shape=jax.ShapeDtypeStruct((N, cout, lo), jnp.float32),
        grid=(N,),
        in_specs=[_batch_spec((N, cin, flatL)),
                  _bcast_spec((cout, ntaps * cin)),
                  _bcast_spec((cout, 1)),
                  _bcast_spec((cout, 1))],
        out_specs=_batch_spec((N, cout, lo)),
        compiler_params=pltpu.CompilerParams(dimension_semantics=("parallel",)),
        cost_estimate=pl.CostEstimate(
            flops=2 * N * lo * ntaps * cin * cout, transcendentals=0,
            bytes_accessed=4 * N * cin * flatL + 2 * cout * ntaps * cin + 4 * N * cout * lo),
    )(xflat, w_mat, _col(scale), _col(shift))
    return out.reshape(N, cout, g["Ho"], g["Wq"])[:, :, :, :g["Wo"]]


def maxpool2d(x_nchw, k, stride, pad):
    neg = float(jnp.finfo(jnp.float32).min)
    xflat, g = _phase_flatten_cm(x_nchw, k, k, stride, pad, neg)
    N, C = xflat.shape[0], xflat.shape[1]
    lo, flatL = g["Lo"], g["flatL"]
    out = pl.pallas_call(
        functools.partial(_maxpool_kernel, taps=g["taps"], lo=lo),
        out_shape=jax.ShapeDtypeStruct((N, C, lo), jnp.float32),
        grid=(N,),
        in_specs=[_batch_spec((N, C, flatL))],
        out_specs=_batch_spec((N, C, lo)),
        compiler_params=pltpu.CompilerParams(dimension_semantics=("parallel",)),
    )(xflat)
    return out.reshape(N, C, g["Ho"], g["Wq"])[:, :, :, :g["Wo"]]


def _avgpool2x2_matrix(h, w):
    """Exact AvgPool2d(2, stride=2) as a constant (H*W, H*W/4) 0/0.25 matrix."""
    ho, wo = h // 2, w // 2
    m = np.zeros((h * w, ho * wo), np.float32)
    for ih in range(h):
        for iw in range(w):
            m[ih * w + iw, (ih // 2) * wo + (iw // 2)] = 0.25
    return jnp.asarray(m, jnp.bfloat16)


def dense_block(x_nchw, layers, transition=None, norm5=None):
    """Whole _DenseBlock (+ following _Transition incl. avg-pool, or + norm5): ONE pallas_call."""
    N, c_in, H, W = x_nchw.shape
    L = H * W
    G = GROWTH_RATE
    n_layers = len(layers)
    args = [x_nchw.reshape(N, c_in, L)]
    specs = [_batch_spec((N, c_in, L))]

    c_used = c_in
    for lp in layers:
        s1, b1 = _bn_scale_shift(lp["norm1"])
        s2, b2 = _bn_scale_shift(lp["norm2"])
        c_bott = lp["conv1"].shape[0]
        w1 = lp["conv1"].reshape(c_bott, c_used).astype(jnp.bfloat16)
        # 3x3 weight columns ordered (tap, channel) to match _conv3x3_same's concat.
        w2 = jnp.transpose(lp["conv2"], (0, 2, 3, 1)).reshape(G, 9 * c_bott).astype(jnp.bfloat16)
        for arr in (_col(s1), _col(b1), w1, _col(s2), _col(b2), w2):
            args.append(arr)
            specs.append(_bcast_spec(arr.shape))
        c_used += G

    if transition is not None:
        mode = "transition"
        ts, tb = _bn_scale_shift(transition["norm"])
        c_half = transition["conv"].shape[0]
        wt = transition["conv"].reshape(c_half, c_used).astype(jnp.bfloat16)
        tail = (_col(ts), _col(tb), wt, _avgpool2x2_matrix(H, W))
        c_out, H_out, W_out = c_half, H // 2, W // 2
    else:
        mode = "norm5"
        s5, b5 = _bn_scale_shift(norm5)
        tail = (_col(s5), _col(b5))
        c_out, H_out, W_out = c_used, H, W
    for arr in tail:
        args.append(arr)
        specs.append(_bcast_spec(arr.shape))

    L_out = H_out * W_out
    out = pl.pallas_call(
        functools.partial(_dense_block_kernel, n_layers=n_layers, width=W, length=L, mode=mode),
        out_shape=jax.ShapeDtypeStruct((N, c_out, L_out), jnp.float32),
        grid=(N,),
        in_specs=specs,
        out_specs=_batch_spec((N, c_out, L_out)),
        compiler_params=pltpu.CompilerParams(dimension_semantics=("parallel",)),
    )(*args)
    return out.reshape(N, c_out, H_out, W_out)


# ----------------------------------------------------------------------------
# Deterministic mini-DenseNet parameters
# ----------------------------------------------------------------------------

GROWTH_RATE = 4
BN_SIZE = 2
INIT_FEATURES = 8
BLOCK_CONFIG = (2, 2, 2)   # transitions after blocks 1 and 2, norm5 at the end


def _conv_init(key, cout, cin, kh, kw):
    fan_in = cin * kh * kw
    return jax.random.normal(key, (cout, cin, kh, kw), jnp.float32) / math.sqrt(fan_in)


def _bn_init(key, c):
    k1, k2, k3 = jax.random.split(key, 3)
    gamma = 1.0 + 0.1 * jax.random.normal(k1, (c,), jnp.float32)
    beta = 0.1 * jax.random.normal(k2, (c,), jnp.float32)
    rmean = 0.05 * jax.random.normal(k3, (c,), jnp.float32)
    rvar = jnp.ones((c,), jnp.float32)
    return (gamma, beta, rmean, rvar)


def build_params(key):
    ks = iter(jax.random.split(key, 256))
    p = {}
    p["conv0"] = _conv_init(next(ks), INIT_FEATURES, 3, 7, 7)
    p["norm0"] = _bn_init(next(ks), INIT_FEATURES)
    c = INIT_FEATURES
    blocks, transitions = [], []
    for bi, nlayers in enumerate(BLOCK_CONFIG):
        layers = []
        for li in range(nlayers):
            in_c = c + li * GROWTH_RATE
            layers.append({
                "norm1": _bn_init(next(ks), in_c),
                "conv1": _conv_init(next(ks), BN_SIZE * GROWTH_RATE, in_c, 1, 1),
                "norm2": _bn_init(next(ks), BN_SIZE * GROWTH_RATE),
                "conv2": _conv_init(next(ks), GROWTH_RATE, BN_SIZE * GROWTH_RATE, 3, 3),
            })
        blocks.append(layers)
        c += nlayers * GROWTH_RATE
        if bi != len(BLOCK_CONFIG) - 1:
            transitions.append({
                "norm": _bn_init(next(ks), c),
                "conv": _conv_init(next(ks), c // 2, c, 1, 1),
            })
            c //= 2
    p["blocks"] = blocks
    p["transitions"] = transitions
    p["norm5"] = _bn_init(next(ks), c)
    return p


# ----------------------------------------------------------------------------
# Forward pass (Encoder.forward semantics)
# ----------------------------------------------------------------------------

def encoder_forward(x_nchw, p):
    """Returns (x, res_list): res_list collects every _Transition output (post avg-pool)."""
    x = x_nchw.astype(jnp.float32)
    s0, b0 = _bn_scale_shift(p["norm0"])
    x = stem_conv(x, p["conv0"], s0, b0)          # conv0 + norm0 + relu0 (fused)
    x = maxpool2d(x, 3, 2, 1)                     # pool0
    res_list = []
    n_blocks = len(p["blocks"])
    for bi, layers in enumerate(p["blocks"]):
        if bi < n_blocks - 1:
            x = dense_block(x, layers, transition=p["transitions"][bi])
            res_list.append(x)                    # output right after the _Transition layer
        else:
            x = dense_block(x, layers, norm5=p["norm5"])   # last block + features.norm5
    return x, res_list


# ----------------------------------------------------------------------------

if __name__ == "__main__":
    key = jax.random.PRNGKey(0)
    kp, kx = jax.random.split(key)
    params = build_params(kp)
    x = jax.random.normal(kx, (2, 3, 32, 32), jnp.float32)   # NCHW like the PyTorch spec

    fwd = jax.jit(encoder_forward)
    out, res_list = fwd(x, params)
    out = jax.block_until_ready(out)
    res_list = [jax.block_until_ready(r) for r in res_list]

    # sanity on shapes implied by the mini-DenseNet config
    assert out.shape == (2, 16, 2, 2), out.shape
    assert res_list[0].shape == (2, 8, 4, 4), res_list[0].shape
    assert res_list[1].shape == (2, 8, 2, 2), res_list[1].shape
    assert all(bool(jnp.all(jnp.isfinite(r))) for r in [out] + res_list)
    print("KERNEL_OK")
</pallas_src>

<mosaic_0001>
module attributes {stable_mosaic.version = 11 : i64} {
  func.func @_stem_conv_kernel(%arg0: i32, %arg1: memref<1x3x1520xf32, #tpu.memory_space<vmem>>, %arg2: memref<8x147xbf16, #tpu.memory_space<vmem>>, %arg3: memref<8x1xf32, #tpu.memory_space<vmem>>, %arg4: memref<8x1xf32, #tpu.memory_space<vmem>>, %arg5: memref<1x8x304xf32, #tpu.memory_space<vmem>>) attributes {dimension_semantics = [#tpu.dimension_semantics<parallel>], iteration_bounds = array<i64: 2>, scalar_prefetch = 0 : i64, scratch_operands = 0 : i64, tpu.core_type = #tpu.core_type<tc>, window_params = [{transform_indices = @transform_0, window_bounds = array<i64: 1, 3, 1520>}, {pipeline_mode = #tpu.pipeline_mode<synchronous>, transform_indices = @transform_1, window_bounds = array<i64: 8, 147>}, {pipeline_mode = #tpu.pipeline_mode<synchronous>, transform_indices = @transform_2, window_bounds = array<i64: 8, 1>}, {pipeline_mode = #tpu.pipeline_mode<synchronous>, transform_indices = @transform_3, window_bounds = array<i64: 8, 1>}, {transform_indices = @transform_4, window_bounds = array<i64: 1, 8, 304>}]} {
    %c0 = arith.constant 0 : index
    %c0_0 = arith.constant 0 : index
    %c0_1 = arith.constant 0 : index
    %0 = vector.load %arg1[%c0, %c0_0, %c0_1] : memref<1x3x1520xf32, #tpu.memory_space<vmem>>, vector<1x3x1520xf32>
    %1 = vector.shape_cast %0 : vector<1x3x1520xf32> to vector<3x1520xf32>
    %2 = vector.extract_strided_slice %1 {offsets = [0, 0], sizes = [3, 304], strides = [1, 1]} : vector<3x1520xf32> to vector<3x304xf32>
    %3 = vector.extract_strided_slice %1 {offsets = [0, 380], sizes = [3, 304], strides = [1, 1]} : vector<3x1520xf32> to vector<3x304xf32>
    %4 = vector.extract_strided_slice %1 {offsets = [0, 1], sizes = [3, 304], strides = [1, 1]} : vector<3x1520xf32> to vector<3x304xf32>
    %5 = vector.extract_strided_slice %1 {offsets = [0, 381], sizes = [3, 304], strides = [1, 1]} : vector<3x1520xf32> to vector<3x304xf32>
    %6 = vector.extract_strided_slice %1 {offsets = [0, 2], sizes = [3, 304], strides = [1, 1]} : vector<3x1520xf32> to vector<3x304xf32>
    %7 = vector.extract_strided_slice %1 {offsets = [0, 382], sizes = [3, 304], strides = [1, 1]} : vector<3x1520xf32> to vector<3x304xf32>
    %8 = vector.extract_strided_slice %1 {offsets = [0, 3], sizes = [3, 304], strides = [1, 1]} : vector<3x1520xf32> to vector<3x304xf32>
    %9 = vector.extract_strided_slice %1 {offsets = [0, 760], sizes = [3, 304], strides = [1, 1]} : vector<3x1520xf32> to vector<3x304xf32>
    %10 = vector.extract_strided_slice %1 {offsets = [0, 1140], sizes = [3, 304], strides = [1, 1]} : vector<3x1520xf32> to vector<3x304xf32>
    %11 = vector.extract_strided_slice %1 {offsets = [0, 761], sizes = [3, 304], strides = [1, 1]} : vector<3x1520xf32> to vector<3x304xf32>
    %12 = vector.extract_strided_slice %1 {offsets = [0, 1141], sizes = [3, 304], strides = [1, 1]} : vector<3x1520xf32> to vector<3x304xf32>
    %13 = vector.extract_strided_slice %1 {offsets = [0, 762], sizes = [3, 304], strides = [1, 1]} : vector<3x1520xf32> to vector<3x304xf32>
    %14 = vector.extract_strided_slice %1 {offsets = [0, 1142], sizes = [3, 304], strides = [1, 1]} : vector<3x1520xf32> to vector<3x304xf32>
    %15 = vector.extract_strided_slice %1 {offsets = [0, 763], sizes = [3, 304], strides = [1, 1]} : vector<3x1520xf32> to vector<3x304xf32>
    %16 = vector.extract_strided_slice %1 {offsets = [0, 19], sizes = [3, 304], strides = [1, 1]} : vector<3x1520xf32> to vector<3x304xf32>
    %17 = vector.extract_strided_slice %1 {offsets = [0, 399], sizes = [3, 304], strides = [1, 1]} : vector<3x1520xf32> to vector<3x304xf32>
    %18 = vector.extract_strided_slice %1 {offsets = [0, 20], sizes = [3, 304], strides = [1, 1]} : vector<3x1520xf32> to vector<3x304xf32>
    %19 = vector.extract_strided_slice %1 {offsets = [0, 400], sizes = [3, 304], strides = [1, 1]} : vector<3x1520xf32> to vector<3x304xf32>
    %20 = vector.extract_strided_slice %1 {offsets = [0, 21], sizes = [3, 304], strides = [1, 1]} : vector<3x1520xf32> to vector<3x304xf32>
    %21 = vector.extract_strided_slice %1 {offsets = [0, 401], sizes = [3, 304], strides = [1, 1]} : vector<3x1520xf32> to vector<3x304xf32>
    %22 = vector.extract_strided_slice %1 {offsets = [0, 22], sizes = [3, 304], strides = [1, 1]} : vector<3x1520xf32> to vector<3x304xf32>
    %23 = vector.extract_strided_slice %1 {offsets = [0, 779], sizes = [3, 304], strides = [1, 1]} : vector<3x1520xf32> to vector<3x304xf32>
    %24 = vector.extract_strided_slice %1 {offsets = [0, 1159], sizes = [3, 304], strides = [1, 1]} : vector<3x1520xf32> to vector<3x304xf32>
    %25 = vector.extract_strided_slice %1 {offsets = [0, 780], sizes = [3, 304], strides = [1, 1]} : vector<3x1520xf32> to vector<3x304xf32>
    %26 = vector.extract_strided_slice %1 {offsets = [0, 1160], sizes = [3, 304], strides = [1, 1]} : vector<3x1520xf32> to vector<3x304xf32>
    %27 = vector.extract_strided_slice %1 {offsets = [0, 781], sizes = [3, 304], strides = [1, 1]} : vector<3x1520xf32> to vector<3x304xf32>
    %28 = vector.extract_strided_slice %1 {offsets = [0, 1161], sizes = [3, 304], strides = [1, 1]} : vector<3x1520xf32> to vector<3x304xf32>
    %29 = vector.extract_strided_slice %1 {offsets = [0, 782], sizes = [3, 304], strides = [1, 1]} : vector<3x1520xf32> to vector<3x304xf32>
    %30 = vector.extract_strided_slice %1 {offsets = [0, 38], sizes = [3, 304], strides = [1, 1]} : vector<3x1520xf32> to vector<3x304xf32>
    %31 = vector.extract_strided_slice %1 {offsets = [0, 418], sizes = [3, 304], strides = [1, 1]} : vector<3x1520xf32> to vector<3x304xf32>
    %32 = vector.extract_strided_slice %1 {offsets = [0, 39], sizes = [3, 304], strides = [1, 1]} : vector<3x1520xf32> to vector<3x304xf32>
    %33 = vector.extract_strided_slice %1 {offsets = [0, 419], sizes = [3, 304], strides = [1, 1]} : vector<3x1520xf32> to vector<3x304xf32>
    %34 = vector.extract_strided_slice %1 {offsets = [0, 40], sizes = [3, 304], strides = [1, 1]} : vector<3x1520xf32> to vector<3x304xf32>
    %35 = vector.extract_strided_slice %1 {offsets = [0, 420], sizes = [3, 304], strides = [1, 1]} : vector<3x1520xf32> to vector<3x304xf32>
    %36 = vector.extract_strided_slice %1 {offsets = [0, 41], sizes = [3, 304], strides = [1, 1]} : vector<3x1520xf32> to vector<3x304xf32>
    %37 = vector.extract_strided_slice %1 {offsets = [0, 798], sizes = [3, 304], strides = [1, 1]} : vector<3x1520xf32> to vector<3x304xf32>
    %38 = vector.extract_strided_slice %1 {offsets = [0, 1178], sizes = [3, 304], strides = [1, 1]} : vector<3x1520xf32> to vector<3x304xf32>
    %39 = vector.extract_strided_slice %1 {offsets = [0, 799], sizes = [3, 304], strides = [1, 1]} : vector<3x1520xf32> to vector<3x304xf32>
    %40 = vector.extract_strided_slice %1 {offsets = [0, 1179], sizes = [3, 304], strides = [1, 1]} : vector<3x1520xf32> to vector<3x304xf32>
    %41 = vector.extract_strided_slice %1 {offsets = [0, 800], sizes = [3, 304], strides = [1, 1]} : vector<3x1520xf32> to vector<3x304xf32>
    %42 = vector.extract_strided_slice %1 {offsets = [0, 1180], sizes = [3, 304], strides = [1, 1]} : vector<3x1520xf32> to vector<3x304xf32>
    %43 = vector.extract_strided_slice %1 {offsets = [0, 801], sizes = [3, 304], strides = [1, 1]} : vector<3x1520xf32> to vector<3x304xf32>
    %44 = vector.extract_strided_slice %1 {offsets = [0, 57], sizes = [3, 304], strides = [1, 1]} : vector<3x1520xf32> to vector<3x304xf32>
    %45 = vector.extract_strided_slice %1 {offsets = [0, 437], sizes = [3, 304], strides = [1, 1]} : vector<3x1520xf32> to vector<3x304xf32>
    %46 = vector.extract_strided_slice %1 {offsets = [0, 58], sizes = [3, 304], strides = [1, 1]} : vector<3x1520xf32> to vector<3x304xf32>
    %47 = vector.extract_strided_slice %1 {offsets = [0, 438], sizes = [3, 304], strides = [1, 1]} : vector<3x1520xf32> to vector<3x304xf32>
    %48 = vector.extract_strided_slice %1 {offsets = [0, 59], sizes = [3, 304], strides = [1, 1]} : vector<3x1520xf32> to vector<3x304xf32>
    %49 = vector.extract_strided_slice %1 {offsets = [0, 439], sizes = [3, 304], strides = [1, 1]} : vector<3x1520xf32> to vector<3x304xf32>
    %50 = vector.extract_strided_slice %1 {offsets = [0, 60], sizes = [3, 304], strides = [1, 1]} : vector<3x1520xf32> to vector<3x304xf32>
    %51 = tpu.concatenate %2, %3, %4, %5, %6, %7, %8, %9, %10, %11, %12, %13, %14, %15, %16, %17 in 0 : vector<3x304xf32>, vector<3x304xf32>, vector<3x304xf32>, vector<3x304xf32>, vector<3x304xf32>, vector<3x304xf32>, vector<3x304xf32>, vector<3x304xf32>, vector<3x304xf32>, vector<3x304xf32>, vector<3x304xf32>, vector<3x304xf32>, vector<3x304xf32>, vector<3x304xf32>, vector<3x304xf32>, vector<3x304xf32> -> vector<48x304xf32>
    %52 = tpu.concatenate %18, %19, %20, %21, %22, %23, %24, %25, %26, %27, %28, %29, %30, %31, %32, %33 in 0 : vector<3x304xf32>, vector<3x304xf32>, vector<3x304xf32>, vector<3x304xf32>, vector<3x304xf32>, vector<3x304xf32>, vector<3x304xf32>, vector<3x304xf32>, vector<3x304xf32>, vector<3x304xf32>, vector<3x304xf32>, vector<3x304xf32>, vector<3x304xf32>, vector<3x304xf32>, vector<3x304xf32>, vector<3x304xf32> -> vector<48x304xf32>
    %53 = tpu.concatenate %34, %35, %36, %37, %38, %39, %40, %41, %42, %43, %44, %45, %46, %47, %48, %49 in 0 : vector<3x304xf32>, vector<3x304xf32>, vector<3x304xf32>, vector<3x304xf32>, vector<3x304xf32>, vector<3x304xf32>, vector<3x304xf32>, vector<3x304xf32>, vector<3x304xf32>, vector<3x304xf32>, vector<3x304xf32>, vector<3x304xf32>, vector<3x304xf32>, vector<3x304xf32>, vector<3x304xf32>, vector<3x304xf32> -> vector<48x304xf32>
    %54 = tpu.concatenate %51, %52, %53, %50 in 0 : vector<48x304xf32>, vector<48x304xf32>, vector<48x304xf32>, vector<3x304xf32> -> vector<147x304xf32>
    %c0_2 = arith.constant 0 : index
    %c0_3 = arith.constant 0 : index
    %55 = vector.load %arg2[%c0_2, %c0_3] : memref<8x147xbf16, #tpu.memory_space<vmem>>, vector<8x147xbf16>
    %56 = arith.truncf %54 : vector<147x304xf32> to vector<147x304xbf16>
    %cst = arith.constant dense<0.000000e+00> : vector<8x304xf32>
    %57 = tpu.matmul %55, %56, %cst {dimension_numbers = #tpu.dot_dimension_numbers<[1], [0], [0], [1], [0, 0, 1, 1], [], []>} : vector<8x147xbf16>, vector<147x304xbf16>, vector<8x304xf32> -> vector<8x304xf32>
    %c0_4 = arith.constant 0 : index
    %c0_5 = arith.constant 0 : index
    %58 = vector.load %arg3[%c0_4, %c0_5] : memref<8x1xf32, #tpu.memory_space<vmem>>, vector<8x1xf32>
    %59 = vector.broadcast %58 : vector<8x1xf32> to vector<8x304xf32>
    %60 = arith.mulf %57, %59 : vector<8x304xf32>
    %c0_6 = arith.constant 0 : index
    %c0_7 = arith.constant 0 : index
    %61 = vector.load %arg4[%c0_6, %c0_7] : memref<8x1xf32, #tpu.memory_space<vmem>>, vector<8x1xf32>
    %62 = vector.broadcast %61 : vector<8x1xf32> to vector<8x304xf32>
    %63 = arith.addf %60, %62 : vector<8x304xf32>
    %cst_8 = arith.constant 0.000000e+00 : f32
    %64 = vector.broadcast %cst_8 : f32 to vector<8x304xf32>
    %65 = arith.maximumf %63, %64 : vector<8x304xf32>
    %c0_9 = arith.constant 0 : index
    %c0_10 = arith.constant 0 : index
    %c0_11 = arith.constant 0 : index
    %66 = vector.load %arg5[%c0_9, %c0_10, %c0_11] : memref<1x8x304xf32, #tpu.memory_space<vmem>>, vector<1x8x304xf32>
    %67 = vector.shape_cast %66 : vector<1x8x304xf32> to vector<8x304xf32>
    %68 = vector.shape_cast %65 : vector<8x304xf32> to vector<1x8x304xf32>
    tpu.vector_store %arg5[%c0_9, %c0_10, %c0_11], %68 {strides = array<i32>} : memref<1x8x304xf32, #tpu.memory_space<vmem>>, vector<1x8x304xf32>,
    return
  }
  func.func @transform_0(%arg0: i32) -> (i32, i32, i32) {
    %c0_i32 = arith.constant 0 : i32
    %c0_i32_0 = arith.constant 0 : i32
    %c0_i32_1 = arith.constant 0 : i32
    return %arg0, %c0_i32, %c0_i32_0 : i32, i32, i32
  }
  func.func @transform_1(%arg0: i32) -> (i32, i32) {
    %c0_i32 = arith.constant 0 : i32
    %c0_i32_0 = arith.constant 0 : i32
    %c0_i32_1 = arith.constant 0 : i32
    return %c0_i32, %c0_i32_0 : i32, i32
  }
  func.func @transform_2(%arg0: i32) -> (i32, i32) {
    %c0_i32 = arith.constant 0 : i32
    %c0_i32_0 = arith.constant 0 : i32
    %c0_i32_1 = arith.constant 0 : i32
    return %c0_i32, %c0_i32_0 : i32, i32
  }
  func.func @transform_3(%arg0: i32) -> (i32, i32) {
    %c0_i32 = arith.constant 0 : i32
    %c0_i32_0 = arith.constant 0 : i32
    %c0_i32_1 = arith.constant 0 : i32
    return %c0_i32, %c0_i32_0 : i32, i32
  }
  func.func @transform_4(%arg0: i32) -> (i32, i32, i32) {
    %c0_i32 = arith.constant 0 : i32
    %c0_i32_0 = arith.constant 0 : i32
    %c0_i32_1 = arith.constant 0 : i32
    return %arg0, %c0_i32, %c0_i32_0 : i32, i32, i32
  }
}

module attributes {stable_mosaic.version = 11 : i64} {
  func.func @_maxpool_kernel(%arg0: i32, %arg1: memref<1x8x360xf32, #tpu.memory_space<vmem>>, %arg2: memref<1x8x72xf32, #tpu.memory_space<vmem>>) attributes {dimension_semantics = [#tpu.dimension_semantics<parallel>], iteration_bounds = array<i64: 2>, scalar_prefetch = 0 : i64, scratch_operands = 0 : i64, tpu.core_type = #tpu.core_type<tc>, window_params = [{transform_indices = @transform_0, window_bounds = array<i64: 1, 8, 360>}, {transform_indices = @transform_1, window_bounds = array<i64: 1, 8, 72>}]} {
    %c0 = arith.constant 0 : index
    %c0_0 = arith.constant 0 : index
    %c0_1 = arith.constant 0 : index
    %0 = vector.load %arg1[%c0, %c0_0, %c0_1] : memref<1x8x360xf32, #tpu.memory_space<vmem>>, vector<1x8x360xf32>
    %1 = vector.shape_cast %0 : vector<1x8x360xf32> to vector<8x360xf32>
    %2 = vector.extract_strided_slice %1 {offsets = [0, 0], sizes = [8, 72], strides = [1, 1]} : vector<8x360xf32> to vector<8x72xf32>
    %3 = vector.extract_strided_slice %1 {offsets = [0, 90], sizes = [8, 72], strides = [1, 1]} : vector<8x360xf32> to vector<8x72xf32>
    %4 = arith.maximumf %2, %3 : vector<8x72xf32>
    %5 = vector.extract_strided_slice %1 {offsets = [0, 1], sizes = [8, 72], strides = [1, 1]} : vector<8x360xf32> to vector<8x72xf32>
    %6 = arith.maximumf %4, %5 : vector<8x72xf32>
    %7 = vector.extract_strided_slice %1 {offsets = [0, 180], sizes = [8, 72], strides = [1, 1]} : vector<8x360xf32> to vector<8x72xf32>
    %8 = arith.maximumf %6, %7 : vector<8x72xf32>
    %9 = vector.extract_strided_slice %1 {offsets = [0, 270], sizes = [8, 72], strides = [1, 1]} : vector<8x360xf32> to vector<8x72xf32>
    %10 = arith.maximumf %8, %9 : vector<8x72xf32>
    %11 = vector.extract_strided_slice %1 {offsets = [0, 181], sizes = [8, 72], strides = [1, 1]} : vector<8x360xf32> to vector<8x72xf32>
    %12 = arith.maximumf %10, %11 : vector<8x72xf32>
    %13 = vector.extract_strided_slice %1 {offsets = [0, 9], sizes = [8, 72], strides = [1, 1]} : vector<8x360xf32> to vector<8x72xf32>
    %14 = arith.maximumf %12, %13 : vector<8x72xf32>
    %15 = vector.extract_strided_slice %1 {offsets = [0, 99], sizes = [8, 72], strides = [1, 1]} : vector<8x360xf32> to vector<8x72xf32>
    %16 = arith.maximumf %14, %15 : vector<8x72xf32>
    %17 = vector.extract_strided_slice %1 {offsets = [0, 10], sizes = [8, 72], strides = [1, 1]} : vector<8x360xf32> to vector<8x72xf32>
    %18 = arith.maximumf %16, %17 : vector<8x72xf32>
    %c0_2 = arith.constant 0 : index
    %c0_3 = arith.constant 0 : index
    %c0_4 = arith.constant 0 : index
    %19 = vector.load %arg2[%c0_2, %c0_3, %c0_4] : memref<1x8x72xf32, #tpu.memory_space<vmem>>, vector<1x8x72xf32>
    %20 = vector.shape_cast %19 : vector<1x8x72xf32> to vector<8x72xf32>
    %21 = vector.shape_cast %18 : vector<8x72xf32> to vector<1x8x72xf32>
    tpu.vector_store %arg2[%c0_2, %c0_3, %c0_4], %21 {strides = array<i32>} : memref<1x8x72xf32, #tpu.memory_space<vmem>>, vector<1x8x72xf32>,
    return
  }
  func.func @transform_0(%arg0: i32) -> (i32, i32, i32) {
    %c0_i32 = arith.constant 0 : i32
    %c0_i32_0 = arith.constant 0 : i32
    %c0_i32_1 = arith.constant 0 : i32
    return %arg0, %c0_i32, %c0_i32_0 : i32, i32, i32
  }
  func.func @transform_1(%arg0: i32) -> (i32, i32, i32) {
    %c0_i32 = arith.constant 0 : i32
    %c0_i32_0 = arith.constant 0 : i32
    %c0_i32_1 = arith.constant 0 : i32
    return %arg0, %c0_i32, %c0_i32_0 : i32, i32, i32
  }
}

module attributes {stable_mosaic.version = 11 : i64} {
  func.func @_dense_block_kernel(%arg0: i32, %arg1: memref<1x8x64xf32, #tpu.memory_space<vmem>>, %arg2: memref<8x1xf32, #tpu.memory_space<vmem>>, %arg3: memref<8x1xf32, #tpu.memory_space<vmem>>, %arg4: memref<8x8xbf16, #tpu.memory_space<vmem>>, %arg5: memref<8x1xf32, #tpu.memory_space<vmem>>, %arg6: memref<8x1xf32, #tpu.memory_space<vmem>>, %arg7: memref<4x72xbf16, #tpu.memory_space<vmem>>, %arg8: memref<12x1xf32, #tpu.memory_space<vmem>>, %arg9: memref<12x1xf32, #tpu.memory_space<vmem>>, %arg10: memref<8x12xbf16, #tpu.memory_space<vmem>>, %arg11: memref<8x1xf32, #tpu.memory_space<vmem>>, %arg12: memref<8x1xf32, #tpu.memory_space<vmem>>, %arg13: memref<4x72xbf16, #tpu.memory_space<vmem>>, %arg14: memref<16x1xf32, #tpu.memory_space<vmem>>, %arg15: memref<16x1xf32, #tpu.memory_space<vmem>>, %arg16: memref<8x16xbf16, #tpu.memory_space<vmem>>, %arg17: memref<64x16xbf16, #tpu.memory_space<vmem>>, %arg18: memref<1x8x16xf32, #tpu.memory_space<vmem>>) attributes {dimension_semantics = [#tpu.dimension_semantics<parallel>], iteration_bounds = array<i64: 2>, scalar_prefetch = 0 : i64, scratch_operands = 0 : i64, tpu.core_type = #tpu.core_type<tc>, window_params = [{transform_indices = @transform_0, window_bounds = array<i64: 1, 8, 64>}, {pipeline_mode = #tpu.pipeline_mode<synchronous>, transform_indices = @transform_1, window_bounds = array<i64: 8, 1>}, {pipeline_mode = #tpu.pipeline_mode<synchronous>, transform_indices = @transform_2, window_bounds = array<i64: 8, 1>}, {pipeline_mode = #tpu.pipeline_mode<synchronous>, transform_indices = @transform_3, window_bounds = array<i64: 8, 8>}, {pipeline_mode = #tpu.pipeline_mode<synchronous>, transform_indices = @transform_4, window_bounds = array<i64: 8, 1>}, {pipeline_mode = #tpu.pipeline_mode<synchronous>, transform_indices = @transform_5, window_bounds = array<i64: 8, 1>}, {pipeline_mode = #tpu.pipeline_mode<synchronous>, transform_indices = @transform_6, window_bounds = array<i64: 4, 72>}, {pipeline_mode = #tpu.pipeline_mode<synchronous>, transform_indices = @transform_7, window_bounds = array<i64: 12, 1>}, {pipeline_mode = #tpu.pipeline_mode<synchronous>, transform_indices = @transform_8, window_bounds = array<i64: 12, 1>}, {pipeline_mode = #tpu.pipeline_mode<synchronous>, transform_indices = @transform_9, window_bounds = array<i64: 8, 12>}, {pipeline_mode = #tpu.pipeline_mode<synchronous>, transform_indices = @transform_10, window_bounds = array<i64: 8, 1>}, {pipeline_mode = #tpu.pipeline_mode<synchronous>, transform_indices = @transform_11, window_bounds = array<i64: 8, 1>}, {pipeline_mode = #tpu.pipeline_mode<synchronous>, transform_indices = @transform_12, window_bounds = array<i64: 4, 72>}, {pipeline_mode = #tpu.pipeline_mode<synchronous>, transform_indices = @transform_13, window_bounds = array<i64: 16, 1>}, {pipeline_mode = #tpu.pipeline_mode<synchronous>, transform_indices = @transform_14, window_bounds = array<i64: 16, 1>}, {pipeline_mode = #tpu.pipeline_mode<synchronous>, transform_indices = @transform_15, window_bounds = array<i64: 8, 16>}, {pipeline_mode = #tpu.pipeline_mode<synchronous>, transform_indices = @transform_16, window_bounds = array<i64: 64, 16>}, {transform_indices = @transform_17, window_bounds = array<i64: 1, 8, 16>}]} {
    %c0 = arith.constant 0 : index
    %c0_0 = arith.constant 0 : index
    %c0_1 = arith.constant 0 : index
    %0 = vector.load %arg1[%c0, %c0_0, %c0_1] : memref<1x8x64xf32, #tpu.memory_space<vmem>>, vector<1x8x64xf32>
    %1 = vector.shape_cast %0 : vector<1x8x64xf32> to vector<8x64xf32>
    %c0_2 = arith.constant 0 : index
    %c0_3 = arith.constant 0 : index
    %2 = vector.load %arg2[%c0_2, %c0_3] : memref<8x1xf32, #tpu.memory_space<vmem>>, vector<8x1xf32>
    %3 = vector.broadcast %2 : vector<8x1xf32> to vector<8x64xf32>
    %4 = arith.mulf %1, %3 : vector<8x64xf32>
    %c0_4 = arith.constant 0 : index
    %c0_5 = arith.constant 0 : index
    %5 = vector.load %arg3[%c0_4, %c0_5] : memref<8x1xf32, #tpu.memory_space<vmem>>, vector<8x1xf32>
    %6 = vector.broadcast %5 : vector<8x1xf32> to vector<8x64xf32>
    %7 = arith.addf %4, %6 : vector<8x64xf32>
    %cst = arith.constant 0.000000e+00 : f32
    %8 = vector.broadcast %cst : f32 to vector<8x64xf32>
    %9 = arith.maximumf %7, %8 : vector<8x64xf32>
    %c0_6 = arith.constant 0 : index
    %c0_7 = arith.constant 0 : index
    %10 = vector.load %arg4[%c0_6, %c0_7] : memref<8x8xbf16, #tpu.memory_space<vmem>>, vector<8x8xbf16>
    %11 = arith.truncf %9 : vector<8x64xf32> to vector<8x64xbf16>
    %cst_8 = arith.constant dense<0.000000e+00> : vector<8x64xf32>
    %12 = tpu.matmul %10, %11, %cst_8 {dimension_numbers = #tpu.dot_dimension_numbers<[1], [0], [0], [1], [0, 0, 1, 1], [], []>} : vector<8x8xbf16>, vector<8x64xbf16>, vector<8x64xf32> -> vector<8x64xf32>
    %c0_9 = arith.constant 0 : index
    %c0_10 = arith.constant 0 : index
    %13 = vector.load %arg5[%c0_9, %c0_10] : memref<8x1xf32, #tpu.memory_space<vmem>>, vector<8x1xf32>
    %14 = vector.broadcast %13 : vector<8x1xf32> to vector<8x64xf32>
    %15 = arith.mulf %12, %14 : vector<8x64xf32>
    %c0_11 = arith.constant 0 : index
    %c0_12 = arith.constant 0 : index
    %16 = vector.load %arg6[%c0_11, %c0_12] : memref<8x1xf32, #tpu.memory_space<vmem>>, vector<8x1xf32>
    %17 = vector.broadcast %16 : vector<8x1xf32> to vector<8x64xf32>
    %18 = arith.addf %15, %17 : vector<8x64xf32>
    %cst_13 = arith.constant 0.000000e+00 : f32
    %19 = vector.broadcast %cst_13 : f32 to vector<8x64xf32>
    %20 = arith.maximumf %18, %19 : vector<8x64xf32>
    %21 = tpu.iota {dimensions = array<i32: 1>} : vector<1x64xi32>
    %c8_i32 = arith.constant 8 : i32
    %c0_i32 = arith.constant 0 : i32
    %22 = arith.cmpi eq, %c8_i32, %c0_i32 : i32
    %c1_i32 = arith.constant 1 : i32
    %23 = arith.select %22, %c1_i32, %c8_i32 : i32
    %24 = vector.broadcast %23 : i32 to vector<1x64xi32>
    %25 = arith.remsi %21, %24 : vector<1x64xi32>
    %c0_i32_14 = arith.constant 0 : i32
    %26 = vector.broadcast %c0_i32_14 : i32 to vector<1x64xi32>
    %27 = arith.cmpi ne, %25, %26 : vector<1x64xi32>
    %c0_i32_15 = arith.constant 0 : i32
    %28 = vector.broadcast %c0_i32_15 : i32 to vector<1x64xi32>
    %29 = arith.cmpi slt, %25, %28 : vector<1x64xi32>
    %c0_i32_16 = arith.constant 0 : i32
    %30 = arith.cmpi slt, %23, %c0_i32_16 : i32
    %31 = vector.broadcast %30 : i1 to vector<1x64xi1>
    %32 = vector.broadcast %31 : vector<1x64xi1> to vector<1x64xi1>
    %33 = arith.xori %29, %32 : vector<1x64xi1>
    %34 = arith.andi %33, %27 : vector<1x64xi1>
    %35 = vector.broadcast %23 : i32 to vector<1x64xi32>
    %36 = arith.addi %25, %35 : vector<1x64xi32>
    %37 = arith.select %34, %36, %25 : vector<1x64xi1>, vector<1x64xi32>
    %c1_i32_17 = arith.constant 1 : i32
    %38 = vector.broadcast %c1_i32_17 : i32 to vector<1x64xi32>
    %39 = arith.cmpi sge, %37, %38 : vector<1x64xi32>
    %c6_i32 = arith.constant 6 : i32
    %40 = vector.broadcast %c6_i32 : i32 to vector<1x64xi32>
    %41 = arith.cmpi sle, %37, %40 : vector<1x64xi32>
    %cst_18 = arith.constant 0.000000e+00 : f32
    %42 = vector.broadcast %cst_18 : f32 to vector<8x9xf32>
    %43 = tpu.concatenate %42, %20, %42 in 1 : vector<8x9xf32>, vector<8x64xf32>, vector<8x9xf32> -> vector<8x82xf32>
    %44 = vector.extract_strided_slice %43 {offsets = [0, 0], sizes = [8, 64], strides = [1, 1]} : vector<8x82xf32> to vector<8x64xf32>
    %cst_19 = arith.constant 0.000000e+00 : f32
    %45 = vector.shape_cast %39 : vector<1x64xi1> to vector<1x64xi1>
    %46 = vector.broadcast %45 : vector<1x64xi1> to vector<8x64xi1>
    %47 = vector.broadcast %cst_19 : f32 to vector<8x64xf32>
    %48 = arith.select %46, %44, %47 : vector<8x64xi1>, vector<8x64xf32>
    %49 = vector.extract_strided_slice %43 {offsets = [0, 1], sizes = [8, 64], strides = [1, 1]} : vector<8x82xf32> to vector<8x64xf32>
    %50 = vector.extract_strided_slice %43 {offsets = [0, 2], sizes = [8, 64], strides = [1, 1]} : vector<8x82xf32> to vector<8x64xf32>
    %cst_20 = arith.constant 0.000000e+00 : f32
    %51 = vector.shape_cast %41 : vector<1x64xi1> to vector<1x64xi1>
    %52 = vector.broadcast %51 : vector<1x64xi1> to vector<8x64xi1>
    %53 = vector.broadcast %cst_20 : f32 to vector<8x64xf32>
    %54 = arith.select %52, %50, %53 : vector<8x64xi1>, vector<8x64xf32>
    %55 = vector.extract_strided_slice %43 {offsets = [0, 8], sizes = [8, 64], strides = [1, 1]} : vector<8x82xf32> to vector<8x64xf32>
    %cst_21 = arith.constant 0.000000e+00 : f32
    %56 = vector.shape_cast %39 : vector<1x64xi1> to vector<1x64xi1>
    %57 = vector.broadcast %56 : vector<1x64xi1> to vector<8x64xi1>
    %58 = vector.broadcast %cst_21 : f32 to vector<8x64xf32>
    %59 = arith.select %57, %55, %58 : vector<8x64xi1>, vector<8x64xf32>
    %60 = vector.extract_strided_slice %43 {offsets = [0, 9], sizes = [8, 64], strides = [1, 1]} : vector<8x82xf32> to vector<8x64xf32>
    %61 = vector.extract_strided_slice %43 {offsets = [0, 10], sizes = [8, 64], strides = [1, 1]} : vector<8x82xf32> to vector<8x64xf32>
    %cst_22 = arith.constant 0.000000e+00 : f32
    %62 = vector.shape_cast %41 : vector<1x64xi1> to vector<1x64xi1>
    %63 = vector.broadcast %62 : vector<1x64xi1> to vector<8x64xi1>
    %64 = vector.broadcast %cst_22 : f32 to vector<8x64xf32>
    %65 = arith.select %63, %61, %64 : vector<8x64xi1>, vector<8x64xf32>
    %66 = vector.extract_strided_slice %43 {offsets = [0, 16], sizes = [8, 64], strides = [1, 1]} : vector<8x82xf32> to vector<8x64xf32>
    %cst_23 = arith.constant 0.000000e+00 : f32
    %67 = vector.shape_cast %39 : vector<1x64xi1> to vector<1x64xi1>
    %68 = vector.broadcast %67 : vector<1x64xi1> to vector<8x64xi1>
    %69 = vector.broadcast %cst_23 : f32 to vector<8x64xf32>
    %70 = arith.select %68, %66, %69 : vector<8x64xi1>, vector<8x64xf32>
    %71 = vector.extract_strided_slice %43 {offsets = [0, 17], sizes = [8, 64], strides = [1, 1]} : vector<8x82xf32> to vector<8x64xf32>
    %72 = vector.extract_strided_slice %43 {offsets = [0, 18], sizes = [8, 64], strides = [1, 1]} : vector<8x82xf32> to vector<8x64xf32>
    %cst_24 = arith.constant 0.000000e+00 : f32
    %73 = vector.shape_cast %41 : vector<1x64xi1> to vector<1x64xi1>
    %74 = vector.broadcast %73 : vector<1x64xi1> to vector<8x64xi1>
    %75 = vector.broadcast %cst_24 : f32 to vector<8x64xf32>
    %76 = arith.select %74, %72, %75 : vector<8x64xi1>, vector<8x64xf32>
    %77 = tpu.concatenate %48, %49, %54, %59, %60, %65, %70, %71, %76 in 0 : vector<8x64xf32>, vector<8x64xf32>, vector<8x64xf32>, vector<8x64xf32>, vector<8x64xf32>, vector<8x64xf32>, vector<8x64xf32>, vector<8x64xf32>, vector<8x64xf32> -> vector<72x64xf32>
    %78 = arith.truncf %77 : vector<72x64xf32> to vector<72x64xbf16>
    %c0_25 = arith.constant 0 : index
    %c0_26 = arith.constant 0 : index
    %79 = vector.load %arg7[%c0_25, %c0_26] : memref<4x72xbf16, #tpu.memory_space<vmem>>, vector<4x72xbf16>
    %cst_27 = arith.constant dense<0.000000e+00> : vector<4x64xf32>
    %80 = tpu.matmul %79, %78, %cst_27 {dimension_numbers = #tpu.dot_dimension_numbers<[1], [0], [0], [1], [0, 0, 1, 1], [], []>} : vector<4x72xbf16>, vector<72x64xbf16>, vector<4x64xf32> -> vector<4x64xf32>
    %81 = tpu.concatenate %1, %80 in 0 : vector<8x64xf32>, vector<4x64xf32> -> vector<12x64xf32>
    %c0_28 = arith.constant 0 : index
    %c0_29 = arith.constant 0 : index
    %82 = vector.load %arg8[%c0_28, %c0_29] : memref<12x1xf32, #tpu.memory_space<vmem>>, vector<12x1xf32>
    %83 = vector.broadcast %82 : vector<12x1xf32> to vector<12x64xf32>
    %84 = arith.mulf %81, %83 : vector<12x64xf32>
    %c0_30 = arith.constant 0 : index
    %c0_31 = arith.constant 0 : index
    %85 = vector.load %arg9[%c0_30, %c0_31] : memref<12x1xf32, #tpu.memory_space<vmem>>, vector<12x1xf32>
    %86 = vector.broadcast %85 : vector<12x1xf32> to vector<12x64xf32>
    %87 = arith.addf %84, %86 : vector<12x64xf32>
    %cst_32 = arith.constant 0.000000e+00 : f32
    %88 = vector.broadcast %cst_32 : f32 to vector<12x64xf32>
    %89 = arith.maximumf %87, %88 : vector<12x64xf32>
    %c0_33 = arith.constant 0 : index
    %c0_34 = arith.constant 0 : index
    %90 = vector.load %arg10[%c0_33, %c0_34] : memref<8x12xbf16, #tpu.memory_space<vmem>>, vector<8x12xbf16>
    %91 = arith.truncf %89 : vector<12x64xf32> to vector<12x64xbf16>
    %cst_35 = arith.constant dense<0.000000e+00> : vector<8x64xf32>
    %92 = tpu.matmul %90, %91, %cst_35 {dimension_numbers = #tpu.dot_dimension_numbers<[1], [0], [0], [1], [0, 0, 1, 1], [], []>} : vector<8x12xbf16>, vector<12x64xbf16>, vector<8x64xf32> -> vector<8x64xf32>
    %c0_36 = arith.constant 0 : index
    %c0_37 = arith.constant 0 : index
    %93 = vector.load %arg11[%c0_36, %c0_37] : memref<8x1xf32, #tpu.memory_space<vmem>>, vector<8x1xf32>
    %94 = vector.broadcast %93 : vector<8x1xf32> to vector<8x64xf32>
    %95 = arith.mulf %92, %94 : vector<8x64xf32>
    %c0_38 = arith.constant 0 : index
    %c0_39 = arith.constant 0 : index
    %96 = vector.load %arg12[%c0_38, %c0_39] : memref<8x1xf32, #tpu.memory_space<vmem>>, vector<8x1xf32>
    %97 = vector.broadcast %96 : vector<8x1xf32> to vector<8x64xf32>
    %98 = arith.addf %95, %97 : vector<8x64xf32>
    %cst_40 = arith.constant 0.000000e+00 : f32
    %99 = vector.broadcast %cst_40 : f32 to vector<8x64xf32>
    %100 = arith.maximumf %98, %99 : vector<8x64xf32>
    %101 = tpu.iota {dimensions = array<i32: 1>} : vector<1x64xi32>
    %c8_i32_41 = arith.constant 8 : i32
    %c0_i32_42 = arith.constant 0 : i32
    %102 = arith.cmpi eq, %c8_i32_41, %c0_i32_42 : i32
    %c1_i32_43 = arith.constant 1 : i32
    %103 = arith.select %102, %c1_i32_43, %c8_i32_41 : i32
    %104 = vector.broadcast %103 : i32 to vector<1x64xi32>
    %105 = arith.remsi %101, %104 : vector<1x64xi32>
    %c0_i32_44 = arith.constant 0 : i32
    %106 = vector.broadcast %c0_i32_44 : i32 to vector<1x64xi32>
    %107 = arith.cmpi ne, %105, %106 : vector<1x64xi32>
    %c0_i32_45 = arith.constant 0 : i32
    %108 = vector.broadcast %c0_i32_45 : i32 to vector<1x64xi32>
    %109 = arith.cmpi slt, %105, %108 : vector<1x64xi32>
    %c0_i32_46 = arith.constant 0 : i32
    %110 = arith.cmpi slt, %103, %c0_i32_46 : i32
    %111 = vector.broadcast %110 : i1 to vector<1x64xi1>
    %112 = vector.broadcast %111 : vector<1x64xi1> to vector<1x64xi1>
    %113 = arith.xori %109, %112 : vector<1x64xi1>
    %114 = arith.andi %113, %107 : vector<1x64xi1>
    %115 = vector.broadcast %103 : i32 to vector<1x64xi32>
    %116 = arith.addi %105, %115 : vector<1x64xi32>
    %117 = arith.select %114, %116, %105 : vector<1x64xi1>, vector<1x64xi32>
    %c1_i32_47 = arith.constant 1 : i32
    %118 = vector.broadcast %c1_i32_47 : i32 to vector<1x64xi32>
    %119 = arith.cmpi sge, %117, %118 : vector<1x64xi32>
    %c6_i32_48 = arith.constant 6 : i32
    %120 = vector.broadcast %c6_i32_48 : i32 to vector<1x64xi32>
    %121 = arith.cmpi sle, %117, %120 : vector<1x64xi32>
    %cst_49 = arith.constant 0.000000e+00 : f32
    %122 = vector.broadcast %cst_49 : f32 to vector<8x9xf32>
    %123 = tpu.concatenate %122, %100, %122 in 1 : vector<8x9xf32>, vector<8x64xf32>, vector<8x9xf32> -> vector<8x82xf32>
    %124 = vector.extract_strided_slice %123 {offsets = [0, 0], sizes = [8, 64], strides = [1, 1]} : vector<8x82xf32> to vector<8x64xf32>
    %cst_50 = arith.constant 0.000000e+00 : f32
    %125 = vector.shape_cast %119 : vector<1x64xi1> to vector<1x64xi1>
    %126 = vector.broadcast %125 : vector<1x64xi1> to vector<8x64xi1>
    %127 = vector.broadcast %cst_50 : f32 to vector<8x64xf32>
    %128 = arith.select %126, %124, %127 : vector<8x64xi1>, vector<8x64xf32>
    %129 = vector.extract_strided_slice %123 {offsets = [0, 1], sizes = [8, 64], strides = [1, 1]} : vector<8x82xf32> to vector<8x64xf32>
    %130 = vector.extract_strided_slice %123 {offsets = [0, 2], sizes = [8, 64], strides = [1, 1]} : vector<8x82xf32> to vector<8x64xf32>
    %cst_51 = arith.constant 0.000000e+00 : f32
    %131 = vector.shape_cast %121 : vector<1x64xi1> to vector<1x64xi1>
    %132 = vector.broadcast %131 : vector<1x64xi1> to vector<8x64xi1>
    %133 = vector.broadcast %cst_51 : f32 to vector<8x64xf32>
    %134 = arith.select %132, %130, %133 : vector<8x64xi1>, vector<8x64xf32>
    %135 = vector.extract_strided_slice %123 {offsets = [0, 8], sizes = [8, 64], strides = [1, 1]} : vector<8x82xf32> to vector<8x64xf32>
    %cst_52 = arith.constant 0.000000e+00 : f32
    %136 = vector.shape_cast %119 : vector<1x64xi1> to vector<1x64xi1>
    %137 = vector.broadcast %136 : vector<1x64xi1> to vector<8x64xi1>
    %138 = vector.broadcast %cst_52 : f32 to vector<8x64xf32>
    %139 = arith.select %137, %135, %138 : vector<8x64xi1>, vector<8x64xf32>
    %140 = vector.extract_strided_slice %123 {offsets = [0, 9], sizes = [8, 64], strides = [1, 1]} : vector<8x82xf32> to vector<8x64xf32>
    %141 = vector.extract_strided_slice %123 {offsets = [0, 10], sizes = [8, 64], strides = [1, 1]} : vector<8x82xf32> to vector<8x64xf32>
    %cst_53 = arith.constant 0.000000e+00 : f32
    %142 = vector.shape_cast %121 : vector<1x64xi1> to vector<1x64xi1>
    %143 = vector.broadcast %142 : vector<1x64xi1> to vector<8x64xi1>
    %144 = vector.broadcast %cst_53 : f32 to vector<8x64xf32>
    %145 = arith.select %143, %141, %144 : vector<8x64xi1>, vector<8x64xf32>
    %146 = vector.extract_strided_slice %123 {offsets = [0, 16], sizes = [8, 64], strides = [1, 1]} : vector<8x82xf32> to vector<8x64xf32>
    %cst_54 = arith.constant 0.000000e+00 : f32
    %147 = vector.shape_cast %119 : vector<1x64xi1> to vector<1x64xi1>
    %148 = vector.broadcast %147 : vector<1x64xi1> to vector<8x64xi1>
    %149 = vector.broadcast %cst_54 : f32 to vector<8x64xf32>
    %150 = arith.select %148, %146, %149 : vector<8x64xi1>, vector<8x64xf32>
    %151 = vector.extract_strided_slice %123 {offsets = [0, 17], sizes = [8, 64], strides = [1, 1]} : vector<8x82xf32> to vector<8x64xf32>
    %152 = vector.extract_strided_slice %123 {offsets = [0, 18], sizes = [8, 64], strides = [1, 1]} : vector<8x82xf32> to vector<8x64xf32>
    %cst_55 = arith.constant 0.000000e+00 : f32
    %153 = vector.shape_cast %121 : vector<1x64xi1> to vector<1x64xi1>
    %154 = vector.broadcast %153 : vector<1x64xi1> to vector<8x64xi1>
    %155 = vector.broadcast %cst_55 : f32 to vector<8x64xf32>
    %156 = arith.select %154, %152, %155 : vector<8x64xi1>, vector<8x64xf32>
    %157 = tpu.concatenate %128, %129, %134, %139, %140, %145, %150, %151, %156 in 0 : vector<8x64xf32>, vector<8x64xf32>, vector<8x64xf32>, vector<8x64xf32>, vector<8x64xf32>, vector<8x64xf32>, vector<8x64xf32>, vector<8x64xf32>, vector<8x64xf32> -> vector<72x64xf32>
    %158 = arith.truncf %157 : vector<72x64xf32> to vector<72x64xbf16>
    %c0_56 = arith.constant 0 : index
    %c0_57 = arith.constant 0 : index
    %159 = vector.load %arg13[%c0_56, %c0_57] : memref<4x72xbf16, #tpu.memory_space<vmem>>, vector<4x72xbf16>
    %cst_58 = arith.constant dense<0.000000e+00> : vector<4x64xf32>
    %160 = tpu.matmul %159, %158, %cst_58 {dimension_numbers = #tpu.dot_dimension_numbers<[1], [0], [0], [1], [0, 0, 1, 1], [], []>} : vector<4x72xbf16>, vector<72x64xbf16>, vector<4x64xf32> -> vector<4x64xf32>
    %161 = tpu.concatenate %1, %80, %160 in 0 : vector<8x64xf32>, vector<4x64xf32>, vector<4x64xf32> -> vector<16x64xf32>
    %c0_59 = arith.constant 0 : index
    %c0_60 = arith.constant 0 : index
    %162 = vector.load %arg14[%c0_59, %c0_60] : memref<16x1xf32, #tpu.memory_space<vmem>>, vector<16x1xf32>
    %163 = vector.broadcast %162 : vector<16x1xf32> to vector<16x64xf32>
    %164 = arith.mulf %161, %163 : vector<16x64xf32>
    %c0_61 = arith.constant 0 : index
    %c0_62 = arith.constant 0 : index
    %165 = vector.load %arg15[%c0_61, %c0_62] : memref<16x1xf32, #tpu.memory_space<vmem>>, vector<16x1xf32>
    %166 = vector.broadcast %165 : vector<16x1xf32> to vector<16x64xf32>
    %167 = arith.addf %164, %166 : vector<16x64xf32>
    %cst_63 = arith.constant 0.000000e+00 : f32
    %168 = vector.broadcast %cst_63 : f32 to vector<16x64xf32>
    %169 = arith.maximumf %167, %168 : vector<16x64xf32>
    %c0_64 = arith.constant 0 : index
    %c0_65 = arith.constant 0 : index
    %170 = vector.load %arg16[%c0_64, %c0_65] : memref<8x16xbf16, #tpu.memory_space<vmem>>, vector<8x16xbf16>
    %171 = arith.truncf %169 : vector<16x64xf32> to vector<16x64xbf16>
    %cst_66 = arith.constant dense<0.000000e+00> : vector<8x64xf32>
    %172 = tpu.matmul %170, %171, %cst_66 {dimension_numbers = #tpu.dot_dimension_numbers<[1], [0], [0], [1], [0, 0, 1, 1], [], []>} : vector<8x16xbf16>, vector<16x64xbf16>, vector<8x64xf32> -> vector<8x64xf32>
    %173 = arith.truncf %172 : vector<8x64xf32> to vector<8x64xbf16>
    %c0_67 = arith.constant 0 : index
    %c0_68 = arith.constant 0 : index
    %174 = vector.load %arg17[%c0_67, %c0_68] : memref<64x16xbf16, #tpu.memory_space<vmem>>, vector<64x16xbf16>
    %cst_69 = arith.constant dense<0.000000e+00> : vector<8x16xf32>
    %175 = tpu.matmul %173, %174, %cst_69 {dimension_numbers = #tpu.dot_dimension_numbers<[1], [0], [0], [1], [0, 0, 1, 1], [], []>} : vector<8x64xbf16>, vector<64x16xbf16>, vector<8x16xf32> -> vector<8x16xf32>
    %c0_70 = arith.constant 0 : index
    %c0_71 = arith.constant 0 : index
    %c0_72 = arith.constant 0 : index
    %176 = vector.load %arg18[%c0_70, %c0_71, %c0_72] : memref<1x8x16xf32, #tpu.memory_space<vmem>>, vector<1x8x16xf32>
    %177 = vector.shape_cast %176 : vector<1x8x16xf32> to vector<8x16xf32>
    %178 = vector.shape_cast %175 : vector<8x16xf32> to vector<1x8x16xf32>
    tpu.vector_store %arg18[%c0_70, %c0_71, %c0_72], %178 {strides = array<i32>} : memref<1x8x16xf32, #tpu.memory_space<vmem>>, vector<1x8x16xf32>,
    return
  }
  func.func @transform_0(%arg0: i32) -> (i32, i32, i32) {
    %c0_i32 = arith.constant 0 : i32
    %c0_i32_0 = arith.constant 0 : i32
    %c0_i32_1 = arith.constant 0 : i32
    return %arg0, %c0_i32, %c0_i32_0 : i32, i32, i32
  }
  func.func @transform_1(%arg0: i32) -> (i32, i32) {
    %c0_i32 = arith.constant 0 : i32
    %c0_i32_0 = arith.constant 0 : i32
    %c0_i32_1 = arith.constant 0 : i32
    return %c0_i32, %c0_i32_0 : i32, i32
  }
  func.func @transform_2(%arg0: i32) -> (i32, i32) {
    %c0_i32 = arith.constant 0 : i32
    %c0_i32_0 = arith.constant 0 : i32
    %c0_i32_1 = arith.constant 0 : i32
    return %c0_i32, %c0_i32_0 : i32, i32
  }
  func.func @transform_3(%arg0: i32) -> (i32, i32) {
    %c0_i32 = arith.constant 0 : i32
    %c0_i32_0 = arith.constant 0 : i32
    %c0_i32_1 = arith.constant 0 : i32
    return %c0_i32, %c0_i32_0 : i32, i32
  }
  func.func @transform_4(%arg0: i32) -> (i32, i32) {
    %c0_i32 = arith.constant 0 : i32
    %c0_i32_0 = arith.constant 0 : i32
    %c0_i32_1 = arith.constant 0 : i32
    return %c0_i32, %c0_i32_0 : i32, i32
  }
  func.func @transform_5(%arg0: i32) -> (i32, i32) {
    %c0_i32 = arith.constant 0 : i32
    %c0_i32_0 = arith.constant 0 : i32
    %c0_i32_1 = arith.constant 0 : i32
    return %c0_i32, %c0_i32_0 : i32, i32
  }
  func.func @transform_6(%arg0: i32) -> (i32, i32) {
    %c0_i32 = arith.constant 0 : i32
    %c0_i32_0 = arith.constant 0 : i32
    %c0_i32_1 = arith.constant 0 : i32
    return %c0_i32, %c0_i32_0 : i32, i32
  }
  func.func @transform_7(%arg0: i32) -> (i32, i32) {
    %c0_i32 = arith.constant 0 : i32
    %c0_i32_0 = arith.constant 0 : i32
    %c0_i32_1 = arith.constant 0 : i32
    return %c0_i32, %c0_i32_0 : i32, i32
  }
  func.func @transform_8(%arg0: i32) -> (i32, i32) {
    %c0_i32 = arith.constant 0 : i32
    %c0_i32_0 = arith.constant 0 : i32
    %c0_i32_1 = arith.constant 0 : i32
    return %c0_i32, %c0_i32_0 : i32, i32
  }
  func.func @transform_9(%arg0: i32) -> (i32, i32) {
    %c0_i32 = arith.constant 0 : i32
    %c0_i32_0 = arith.constant 0 : i32
    %c0_i32_1 = arith.constant 0 : i32
    return %c0_i32, %c0_i32_0 : i32, i32
  }
  func.func @transform_10(%arg0: i32) -> (i32, i32) {
    %c0_i32 = arith.constant 0 : i32
    %c0_i32_0 = arith.constant 0 : i32
    %c0_i32_1 = arith.constant 0 : i32
    return %c0_i32, %c0_i32_0 : i32, i32
  }
  func.func @transform_11(%arg0: i32) -> (i32, i32) {
    %c0_i32 = arith.constant 0 : i32
    %c0_i32_0 = arith.constant 0 : i32
    %c0_i32_1 = arith.constant 0 : i32
    return %c0_i32, %c0_i32_0 : i32, i32
  }
  func.func @transform_12(%arg0: i32) -> (i32, i32) {
    %c0_i32 = arith.constant 0 : i32
    %c0_i32_0 = arith.constant 0 : i32
    %c0_i32_1 = arith.constant 0 : i32
    return %c0_i32, %c0_i32_0 : i32, i32
  }
  func.func @transform_13(%arg0: i32) -> (i32, i32) {
    %c0_i32 = arith.constant 0 : i32
    %c0_i32_0 = arith.constant 0 : i32
    %c0_i32_1 = arith.constant 0 : i32
    return %c0_i32, %c0_i32_0 : i32, i32
  }
  func.func @transform_14(%arg0: i32) -> (i32, i32) {
    %c0_i32 = arith.constant 0 : i32
    %c0_i32_0 = arith.constant 0 : i32
    %c0_i32_1 = arith.constant 0 : i32
    return %c0_i32, %c0_i32_0 : i32, i32
  }
  func.func @transform_15(%arg0: i32) -> (i32, i32) {
    %c0_i32 = arith.constant 0 : i32
    %c0_i32_0 = arith.constant 0 : i32
    %c0_i32_1 = arith.constant 0 : i32
    return %c0_i32, %c0_i32_0 : i32, i32
  }
  func.func @transform_16(%arg0: i32) -> (i32, i32) {
    %c0_i32 = arith.constant 0 : i32
    %c0_i32_0 = arith.constant 0 : i32
    %c0_i32_1 = arith.constant 0 : i32
    return %c0_i32, %c0_i32_0 : i32, i32
  }
  func.func @transform_17(%arg0: i32) -> (i32, i32, i32) {
    %c0_i32 = arith.constant 0 : i32
    %c0_i32_0 = arith.constant 0 : i32
    %c0_i32_1 = arith.constant 0 : i32
    return %arg0, %c0_i32, %c0_i32_0 : i32, i32, i32
  }
}

module attributes {stable_mosaic.version = 11 : i64} {
  func.func @_dense_block_kernel(%arg0: i32, %arg1: memref<1x8x4xf32, #tpu.memory_space<vmem>>, %arg2: memref<8x1xf32, #tpu.memory_space<vmem>>, %arg3: memref<8x1xf32, #tpu.memory_space<vmem>>, %arg4: memref<8x8xbf16, #tpu.memory_space<vmem>>, %arg5: memref<8x1xf32, #tpu.memory_space<vmem>>, %arg6: memref<8x1xf32, #tpu.memory_space<vmem>>, %arg7: memref<4x72xbf16, #tpu.memory_space<vmem>>, %arg8: memref<12x1xf32, #tpu.memory_space<vmem>>, %arg9: memref<12x1xf32, #tpu.memory_space<vmem>>, %arg10: memref<8x12xbf16, #tpu.memory_space<vmem>>, %arg11: memref<8x1xf32, #tpu.memory_space<vmem>>, %arg12: memref<8x1xf32, #tpu.memory_space<vmem>>, %arg13: memref<4x72xbf16, #tpu.memory_space<vmem>>, %arg14: memref<16x1xf32, #tpu.memory_space<vmem>>, %arg15: memref<16x1xf32, #tpu.memory_space<vmem>>, %arg16: memref<1x16x4xf32, #tpu.memory_space<vmem>>) attributes {dimension_semantics = [#tpu.dimension_semantics<parallel>], iteration_bounds = array<i64: 2>, scalar_prefetch = 0 : i64, scratch_operands = 0 : i64, tpu.core_type = #tpu.core_type<tc>, window_params = [{transform_indices = @transform_0, window_bounds = array<i64: 1, 8, 4>}, {pipeline_mode = #tpu.pipeline_mode<synchronous>, transform_indices = @transform_1, window_bounds = array<i64: 8, 1>}, {pipeline_mode = #tpu.pipeline_mode<synchronous>, transform_indices = @transform_2, window_bounds = array<i64: 8, 1>}, {pipeline_mode = #tpu.pipeline_mode<synchronous>, transform_indices = @transform_3, window_bounds = array<i64: 8, 8>}, {pipeline_mode = #tpu.pipeline_mode<synchronous>, transform_indices = @transform_4, window_bounds = array<i64: 8, 1>}, {pipeline_mode = #tpu.pipeline_mode<synchronous>, transform_indices = @transform_5, window_bounds = array<i64: 8, 1>}, {pipeline_mode = #tpu.pipeline_mode<synchronous>, transform_indices = @transform_6, window_bounds = array<i64: 4, 72>}, {pipeline_mode = #tpu.pipeline_mode<synchronous>, transform_indices = @transform_7, window_bounds = array<i64: 12, 1>}, {pipeline_mode = #tpu.pipeline_mode<synchronous>, transform_indices = @transform_8, window_bounds = array<i64: 12, 1>}, {pipeline_mode = #tpu.pipeline_mode<synchronous>, transform_indices = @transform_9, window_bounds = array<i64: 8, 12>}, {pipeline_mode = #tpu.pipeline_mode<synchronous>, transform_indices = @transform_10, window_bounds = array<i64: 8, 1>}, {pipeline_mode = #tpu.pipeline_mode<synchronous>, transform_indices = @transform_11, window_bounds = array<i64: 8, 1>}, {pipeline_mode = #tpu.pipeline_mode<synchronous>, transform_indices = @transform_12, window_bounds = array<i64: 4, 72>}, {pipeline_mode = #tpu.pipeline_mode<synchronous>, transform_indices = @transform_13, window_bounds = array<i64: 16, 1>}, {pipeline_mode = #tpu.pipeline_mode<synchronous>, transform_indices = @transform_14, window_bounds = array<i64: 16, 1>}, {transform_indices = @transform_15, window_bounds = array<i64: 1, 16, 4>}]} {
    %c0 = arith.constant 0 : index
    %c0_0 = arith.constant 0 : index
    %c0_1 = arith.constant 0 : index
    %0 = vector.load %arg1[%c0, %c0_0, %c0_1] : memref<1x8x4xf32, #tpu.memory_space<vmem>>, vector<1x8x4xf32>
    %1 = vector.shape_cast %0 : vector<1x8x4xf32> to vector<8x4xf32>
    %c0_2 = arith.constant 0 : index
    %c0_3 = arith.constant 0 : index
    %2 = vector.load %arg2[%c0_2, %c0_3] : memref<8x1xf32, #tpu.memory_space<vmem>>, vector<8x1xf32>
    %3 = vector.broadcast %2 : vector<8x1xf32> to vector<8x4xf32>
    %4 = arith.mulf %1, %3 : vector<8x4xf32>
    %c0_4 = arith.constant 0 : index
    %c0_5 = arith.constant 0 : index
    %5 = vector.load %arg3[%c0_4, %c0_5] : memref<8x1xf32, #tpu.memory_space<vmem>>, vector<8x1xf32>
    %6 = vector.broadcast %5 : vector<8x1xf32> to vector<8x4xf32>
    %7 = arith.addf %4, %6 : vector<8x4xf32>
    %cst = arith.constant 0.000000e+00 : f32
    %8 = vector.broadcast %cst : f32 to vector<8x4xf32>
    %9 = arith.maximumf %7, %8 : vector<8x4xf32>
    %c0_6 = arith.constant 0 : index
    %c0_7 = arith.constant 0 : index
    %10 = vector.load %arg4[%c0_6, %c0_7] : memref<8x8xbf16, #tpu.memory_space<vmem>>, vector<8x8xbf16>
    %11 = arith.truncf %9 : vector<8x4xf32> to vector<8x4xbf16>
    %cst_8 = arith.constant dense<0.000000e+00> : vector<8x4xf32>
    %12 = tpu.matmul %10, %11, %cst_8 {dimension_numbers = #tpu.dot_dimension_numbers<[1], [0], [0], [1], [0, 0, 1, 1], [], []>} : vector<8x8xbf16>, vector<8x4xbf16>, vector<8x4xf32> -> vector<8x4xf32>
    %c0_9 = arith.constant 0 : index
    %c0_10 = arith.constant 0 : index
    %13 = vector.load %arg5[%c0_9, %c0_10] : memref<8x1xf32, #tpu.memory_space<vmem>>, vector<8x1xf32>
    %14 = vector.broadcast %13 : vector<8x1xf32> to vector<8x4xf32>
    %15 = arith.mulf %12, %14 : vector<8x4xf32>
    %c0_11 = arith.constant 0 : index
    %c0_12 = arith.constant 0 : index
    %16 = vector.load %arg6[%c0_11, %c0_12] : memref<8x1xf32, #tpu.memory_space<vmem>>, vector<8x1xf32>
    %17 = vector.broadcast %16 : vector<8x1xf32> to vector<8x4xf32>
    %18 = arith.addf %15, %17 : vector<8x4xf32>
    %cst_13 = arith.constant 0.000000e+00 : f32
    %19 = vector.broadcast %cst_13 : f32 to vector<8x4xf32>
    %20 = arith.maximumf %18, %19 : vector<8x4xf32>
    %21 = tpu.iota {dimensions = array<i32: 1>} : vector<1x4xi32>
    %c2_i32 = arith.constant 2 : i32
    %c0_i32 = arith.constant 0 : i32
    %22 = arith.cmpi eq, %c2_i32, %c0_i32 : i32
    %c1_i32 = arith.constant 1 : i32
    %23 = arith.select %22, %c1_i32, %c2_i32 : i32
    %24 = vector.broadcast %23 : i32 to vector<1x4xi32>
    %25 = arith.remsi %21, %24 : vector<1x4xi32>
    %c0_i32_14 = arith.constant 0 : i32
    %26 = vector.broadcast %c0_i32_14 : i32 to vector<1x4xi32>
    %27 = arith.cmpi ne, %25, %26 : vector<1x4xi32>
    %c0_i32_15 = arith.constant 0 : i32
    %28 = vector.broadcast %c0_i32_15 : i32 to vector<1x4xi32>
    %29 = arith.cmpi slt, %25, %28 : vector<1x4xi32>
    %c0_i32_16 = arith.constant 0 : i32
    %30 = arith.cmpi slt, %23, %c0_i32_16 : i32
    %31 = vector.broadcast %30 : i1 to vector<1x4xi1>
    %32 = vector.broadcast %31 : vector<1x4xi1> to vector<1x4xi1>
    %33 = arith.xori %29, %32 : vector<1x4xi1>
    %34 = arith.andi %33, %27 : vector<1x4xi1>
    %35 = vector.broadcast %23 : i32 to vector<1x4xi32>
    %36 = arith.addi %25, %35 : vector<1x4xi32>
    %37 = arith.select %34, %36, %25 : vector<1x4xi1>, vector<1x4xi32>
    %c1_i32_17 = arith.constant 1 : i32
    %38 = vector.broadcast %c1_i32_17 : i32 to vector<1x4xi32>
    %39 = arith.cmpi sge, %37, %38 : vector<1x4xi32>
    %c0_i32_18 = arith.constant 0 : i32
    %40 = vector.broadcast %c0_i32_18 : i32 to vector<1x4xi32>
    %41 = arith.cmpi sle, %37, %40 : vector<1x4xi32>
    %cst_19 = arith.constant 0.000000e+00 : f32
    %42 = vector.broadcast %cst_19 : f32 to vector<8x3xf32>
    %43 = tpu.concatenate %42, %20, %42 in 1 : vector<8x3xf32>, vector<8x4xf32>, vector<8x3xf32> -> vector<8x10xf32>
    %44 = vector.extract_strided_slice %43 {offsets = [0, 0], sizes = [8, 4], strides = [1, 1]} : vector<8x10xf32> to vector<8x4xf32>
    %cst_20 = arith.constant 0.000000e+00 : f32
    %45 = vector.shape_cast %39 : vector<1x4xi1> to vector<1x4xi1>
    %46 = vector.broadcast %45 : vector<1x4xi1> to vector<8x4xi1>
    %47 = vector.broadcast %cst_20 : f32 to vector<8x4xf32>
    %48 = arith.select %46, %44, %47 : vector<8x4xi1>, vector<8x4xf32>
    %49 = vector.extract_strided_slice %43 {offsets = [0, 1], sizes = [8, 4], strides = [1, 1]} : vector<8x10xf32> to vector<8x4xf32>
    %50 = vector.extract_strided_slice %43 {offsets = [0, 2], sizes = [8, 4], strides = [1, 1]} : vector<8x10xf32> to vector<8x4xf32>
    %cst_21 = arith.constant 0.000000e+00 : f32
    %51 = vector.shape_cast %41 : vector<1x4xi1> to vector<1x4xi1>
    %52 = vector.broadcast %51 : vector<1x4xi1> to vector<8x4xi1>
    %53 = vector.broadcast %cst_21 : f32 to vector<8x4xf32>
    %54 = arith.select %52, %50, %53 : vector<8x4xi1>, vector<8x4xf32>
    %55 = vector.extract_strided_slice %43 {offsets = [0, 2], sizes = [8, 4], strides = [1, 1]} : vector<8x10xf32> to vector<8x4xf32>
    %cst_22 = arith.constant 0.000000e+00 : f32
    %56 = vector.shape_cast %39 : vector<1x4xi1> to vector<1x4xi1>
    %57 = vector.broadcast %56 : vector<1x4xi1> to vector<8x4xi1>
    %58 = vector.broadcast %cst_22 : f32 to vector<8x4xf32>
    %59 = arith.select %57, %55, %58 : vector<8x4xi1>, vector<8x4xf32>
    %60 = vector.extract_strided_slice %43 {offsets = [0, 3], sizes = [8, 4], strides = [1, 1]} : vector<8x10xf32> to vector<8x4xf32>
    %61 = vector.extract_strided_slice %43 {offsets = [0, 4], sizes = [8, 4], strides = [1, 1]} : vector<8x10xf32> to vector<8x4xf32>
    %cst_23 = arith.constant 0.000000e+00 : f32
    %62 = vector.shape_cast %41 : vector<1x4xi1> to vector<1x4xi1>
    %63 = vector.broadcast %62 : vector<1x4xi1> to vector<8x4xi1>
    %64 = vector.broadcast %cst_23 : f32 to vector<8x4xf32>
    %65 = arith.select %63, %61, %64 : vector<8x4xi1>, vector<8x4xf32>
    %66 = vector.extract_strided_slice %43 {offsets = [0, 4], sizes = [8, 4], strides = [1, 1]} : vector<8x10xf32> to vector<8x4xf32>
    %cst_24 = arith.constant 0.000000e+00 : f32
    %67 = vector.shape_cast %39 : vector<1x4xi1> to vector<1x4xi1>
    %68 = vector.broadcast %67 : vector<1x4xi1> to vector<8x4xi1>
    %69 = vector.broadcast %cst_24 : f32 to vector<8x4xf32>
    %70 = arith.select %68, %66, %69 : vector<8x4xi1>, vector<8x4xf32>
    %71 = vector.extract_strided_slice %43 {offsets = [0, 5], sizes = [8, 4], strides = [1, 1]} : vector<8x10xf32> to vector<8x4xf32>
    %72 = vector.extract_strided_slice %43 {offsets = [0, 6], sizes = [8, 4], strides = [1, 1]} : vector<8x10xf32> to vector<8x4xf32>
    %cst_25 = arith.constant 0.000000e+00 : f32
    %73 = vector.shape_cast %41 : vector<1x4xi1> to vector<1x4xi1>
    %74 = vector.broadcast %73 : vector<1x4xi1> to vector<8x4xi1>
    %75 = vector.broadcast %cst_25 : f32 to vector<8x4xf32>
    %76 = arith.select %74, %72, %75 : vector<8x4xi1>, vector<8x4xf32>
    %77 = tpu.concatenate %48, %49, %54, %59, %60, %65, %70, %71, %76 in 0 : vector<8x4xf32>, vector<8x4xf32>, vector<8x4xf32>, vector<8x4xf32>, vector<8x4xf32>, vector<8x4xf32>, vector<8x4xf32>, vector<8x4xf32>, vector<8x4xf32> -> vector<72x4xf32>
    %78 = arith.truncf %77 : vector<72x4xf32> to vector<72x4xbf16>
    %c0_26 = arith.constant 0 : index
    %c0_27 = arith.constant 0 : index
    %79 = vector.load %arg7[%c0_26, %c0_27] : memref<4x72xbf16, #tpu.memory_space<vmem>>, vector<4x72xbf16>
    %cst_28 = arith.constant dense<0.000000e+00> : vector<4x4xf32>
    %80 = tpu.matmul %79, %78, %cst_28 {dimension_numbers = #tpu.dot_dimension_numbers<[1], [0], [0], [1], [0, 0, 1, 1], [], []>} : vector<4x72xbf16>, vector<72x4xbf16>, vector<4x4xf32> -> vector<4x4xf32>
    %81 = tpu.concatenate %1, %80 in 0 : vector<8x4xf32>, vector<4x4xf32> -> vector<12x4xf32>
    %c0_29 = arith.constant 0 : index
    %c0_30 = arith.constant 0 : index
    %82 = vector.load %arg8[%c0_29, %c0_30] : memref<12x1xf32, #tpu.memory_space<vmem>>, vector<12x1xf32>
    %83 = vector.broadcast %82 : vector<12x1xf32> to vector<12x4xf32>
    %84 = arith.mulf %81, %83 : vector<12x4xf32>
    %c0_31 = arith.constant 0 : index
    %c0_32 = arith.constant 0 : index
    %85 = vector.load %arg9[%c0_31, %c0_32] : memref<12x1xf32, #tpu.memory_space<vmem>>, vector<12x1xf32>
    %86 = vector.broadcast %85 : vector<12x1xf32> to vector<12x4xf32>
    %87 = arith.addf %84, %86 : vector<12x4xf32>
    %cst_33 = arith.constant 0.000000e+00 : f32
    %88 = vector.broadcast %cst_33 : f32 to vector<12x4xf32>
    %89 = arith.maximumf %87, %88 : vector<12x4xf32>
    %c0_34 = arith.constant 0 : index
    %c0_35 = arith.constant 0 : index
    %90 = vector.load %arg10[%c0_34, %c0_35] : memref<8x12xbf16, #tpu.memory_space<vmem>>, vector<8x12xbf16>
    %91 = arith.truncf %89 : vector<12x4xf32> to vector<12x4xbf16>
    %cst_36 = arith.constant dense<0.000000e+00> : vector<8x4xf32>
    %92 = tpu.matmul %90, %91, %cst_36 {dimension_numbers = #tpu.dot_dimension_numbers<[1], [0], [0], [1], [0, 0, 1, 1], [], []>} : vector<8x12xbf16>, vector<12x4xbf16>, vector<8x4xf32> -> vector<8x4xf32>
    %c0_37 = arith.constant 0 : index
    %c0_38 = arith.constant 0 : index
    %93 = vector.load %arg11[%c0_37, %c0_38] : memref<8x1xf32, #tpu.memory_space<vmem>>, vector<8x1xf32>
    %94 = vector.broadcast %93 : vector<8x1xf32> to vector<8x4xf32>
    %95 = arith.mulf %92, %94 : vector<8x4xf32>
    %c0_39 = arith.constant 0 : index
    %c0_40 = arith.constant 0 : index
    %96 = vector.load %arg12[%c0_39, %c0_40] : memref<8x1xf32, #tpu.memory_space<vmem>>, vector<8x1xf32>
    %97 = vector.broadcast %96 : vector<8x1xf32> to vector<8x4xf32>
    %98 = arith.addf %95, %97 : vector<8x4xf32>
    %cst_41 = arith.constant 0.000000e+00 : f32
    %99 = vector.broadcast %cst_41 : f32 to vector<8x4xf32>
    %100 = arith.maximumf %98, %99 : vector<8x4xf32>
    %101 = tpu.iota {dimensions = array<i32: 1>} : vector<1x4xi32>
    %c2_i32_42 = arith.constant 2 : i32
    %c0_i32_43 = arith.constant 0 : i32
    %102 = arith.cmpi eq, %c2_i32_42, %c0_i32_43 : i32
    %c1_i32_44 = arith.constant 1 : i32
    %103 = arith.select %102, %c1_i32_44, %c2_i32_42 : i32
    %104 = vector.broadcast %103 : i32 to vector<1x4xi32>
    %105 = arith.remsi %101, %104 : vector<1x4xi32>
    %c0_i32_45 = arith.constant 0 : i32
    %106 = vector.broadcast %c0_i32_45 : i32 to vector<1x4xi32>
    %107 = arith.cmpi ne, %105, %106 : vector<1x4xi32>
    %c0_i32_46 = arith.constant 0 : i32
    %108 = vector.broadcast %c0_i32_46 : i32 to vector<1x4xi32>
    %109 = arith.cmpi slt, %105, %108 : vector<1x4xi32>
    %c0_i32_47 = arith.constant 0 : i32
    %110 = arith.cmpi slt, %103, %c0_i32_47 : i32
    %111 = vector.broadcast %110 : i1 to vector<1x4xi1>
    %112 = vector.broadcast %111 : vector<1x4xi1> to vector<1x4xi1>
    %113 = arith.xori %109, %112 : vector<1x4xi1>
    %114 = arith.andi %113, %107 : vector<1x4xi1>
    %115 = vector.broadcast %103 : i32 to vector<1x4xi32>
    %116 = arith.addi %105, %115 : vector<1x4xi32>
    %117 = arith.select %114, %116, %105 : vector<1x4xi1>, vector<1x4xi32>
    %c1_i32_48 = arith.constant 1 : i32
    %118 = vector.broadcast %c1_i32_48 : i32 to vector<1x4xi32>
    %119 = arith.cmpi sge, %117, %118 : vector<1x4xi32>
    %c0_i32_49 = arith.constant 0 : i32
    %120 = vector.broadcast %c0_i32_49 : i32 to vector<1x4xi32>
    %121 = arith.cmpi sle, %117, %120 : vector<1x4xi32>
    %cst_50 = arith.constant 0.000000e+00 : f32
    %122 = vector.broadcast %cst_50 : f32 to vector<8x3xf32>
    %123 = tpu.concatenate %122, %100, %122 in 1 : vector<8x3xf32>, vector<8x4xf32>, vector<8x3xf32> -> vector<8x10xf32>
    %124 = vector.extract_strided_slice %123 {offsets = [0, 0], sizes = [8, 4], strides = [1, 1]} : vector<8x10xf32> to vector<8x4xf32>
    %cst_51 = arith.constant 0.000000e+00 : f32
    %125 = vector.shape_cast %119 : vector<1x4xi1> to vector<1x4xi1>
    %126 = vector.broadcast %125 : vector<1x4xi1> to vector<8x4xi1>
    %127 = vector.broadcast %cst_51 : f32 to vector<8x4xf32>
    %128 = arith.select %126, %124, %127 : vector<8x4xi1>, vector<8x4xf32>
    %129 = vector.extract_strided_slice %123 {offsets = [0, 1], sizes = [8, 4], strides = [1, 1]} : vector<8x10xf32> to vector<8x4xf32>
    %130 = vector.extract_strided_slice %123 {offsets = [0, 2], sizes = [8, 4], strides = [1, 1]} : vector<8x10xf32> to vector<8x4xf32>
    %cst_52 = arith.constant 0.000000e+00 : f32
    %131 = vector.shape_cast %121 : vector<1x4xi1> to vector<1x4xi1>
    %132 = vector.broadcast %131 : vector<1x4xi1> to vector<8x4xi1>
    %133 = vector.broadcast %cst_52 : f32 to vector<8x4xf32>
    %134 = arith.select %132, %130, %133 : vector<8x4xi1>, vector<8x4xf32>
    %135 = vector.extract_strided_slice %123 {offsets = [0, 2], sizes = [8, 4], strides = [1, 1]} : vector<8x10xf32> to vector<8x4xf32>
    %cst_53 = arith.constant 0.000000e+00 : f32
    %136 = vector.shape_cast %119 : vector<1x4xi1> to vector<1x4xi1>
    %137 = vector.broadcast %136 : vector<1x4xi1> to vector<8x4xi1>
    %138 = vector.broadcast %cst_53 : f32 to vector<8x4xf32>
    %139 = arith.select %137, %135, %138 : vector<8x4xi1>, vector<8x4xf32>
    %140 = vector.extract_strided_slice %123 {offsets = [0, 3], sizes = [8, 4], strides = [1, 1]} : vector<8x10xf32> to vector<8x4xf32>
    %141 = vector.extract_strided_slice %123 {offsets = [0, 4], sizes = [8, 4], strides = [1, 1]} : vector<8x10xf32> to vector<8x4xf32>
    %cst_54 = arith.constant 0.000000e+00 : f32
    %142 = vector.shape_cast %121 : vector<1x4xi1> to vector<1x4xi1>
    %143 = vector.broadcast %142 : vector<1x4xi1> to vector<8x4xi1>
    %144 = vector.broadcast %cst_54 : f32 to vector<8x4xf32>
    %145 = arith.select %143, %141, %144 : vector<8x4xi1>, vector<8x4xf32>
    %146 = vector.extract_strided_slice %123 {offsets = [0, 4], sizes = [8, 4], strides = [1, 1]} : vector<8x10xf32> to vector<8x4xf32>
    %cst_55 = arith.constant 0.000000e+00 : f32
    %147 = vector.shape_cast %119 : vector<1x4xi1> to vector<1x4xi1>
    %148 = vector.broadcast %147 : vector<1x4xi1> to vector<8x4xi1>
    %149 = vector.broadcast %cst_55 : f32 to vector<8x4xf32>
    %150 = arith.select %148, %146, %149 : vector<8x4xi1>, vector<8x4xf32>
    %151 = vector.extract_strided_slice %123 {offsets = [0, 5], sizes = [8, 4], strides = [1, 1]} : vector<8x10xf32> to vector<8x4xf32>
    %152 = vector.extract_strided_slice %123 {offsets = [0, 6], sizes = [8, 4], strides = [1, 1]} : vector<8x10xf32> to vector<8x4xf32>
    %cst_56 = arith.constant 0.000000e+00 : f32
    %153 = vector.shape_cast %121 : vector<1x4xi1> to vector<1x4xi1>
    %154 = vector.broadcast %153 : vector<1x4xi1> to vector<8x4xi1>
    %155 = vector.broadcast %cst_56 : f32 to vector<8x4xf32>
    %156 = arith.select %154, %152, %155 : vector<8x4xi1>, vector<8x4xf32>
    %157 = tpu.concatenate %128, %129, %134, %139, %140, %145, %150, %151, %156 in 0 : vector<8x4xf32>, vector<8x4xf32>, vector<8x4xf32>, vector<8x4xf32>, vector<8x4xf32>, vector<8x4xf32>, vector<8x4xf32>, vector<8x4xf32>, vector<8x4xf32> -> vector<72x4xf32>
    %158 = arith.truncf %157 : vector<72x4xf32> to vector<72x4xbf16>
    %c0_57 = arith.constant 0 : index
    %c0_58 = arith.constant 0 : index
    %159 = vector.load %arg13[%c0_57, %c0_58] : memref<4x72xbf16, #tpu.memory_space<vmem>>, vector<4x72xbf16>
    %cst_59 = arith.constant dense<0.000000e+00> : vector<4x4xf32>
    %160 = tpu.matmul %159, %158, %cst_59 {dimension_numbers = #tpu.dot_dimension_numbers<[1], [0], [0], [1], [0, 0, 1, 1], [], []>} : vector<4x72xbf16>, vector<72x4xbf16>, vector<4x4xf32> -> vector<4x4xf32>
    %161 = tpu.concatenate %1, %80, %160 in 0 : vector<8x4xf32>, vector<4x4xf32>, vector<4x4xf32> -> vector<16x4xf32>
    %c0_60 = arith.constant 0 : index
    %c0_61 = arith.constant 0 : index
    %162 = vector.load %arg14[%c0_60, %c0_61] : memref<16x1xf32, #tpu.memory_space<vmem>>, vector<16x1xf32>
    %163 = vector.broadcast %162 : vector<16x1xf32> to vector<16x4xf32>
    %164 = arith.mulf %161, %163 : vector<16x4xf32>
    %c0_62 = arith.constant 0 : index
    %c0_63 = arith.constant 0 : index
    %165 = vector.load %arg15[%c0_62, %c0_63] : memref<16x1xf32, #tpu.memory_space<vmem>>, vector<16x1xf32>
    %166 = vector.broadcast %165 : vector<16x1xf32> to vector<16x4xf32>
    %167 = arith.addf %164, %166 : vector<16x4xf32>
    %c0_64 = arith.constant 0 : index
    %c0_65 = arith.constant 0 : index
    %c0_66 = arith.constant 0 : index
    %168 = vector.load %arg16[%c0_64, %c0_65, %c0_66] : memref<1x16x4xf32, #tpu.memory_space<vmem>>, vector<1x16x4xf32>
    %169 = vector.shape_cast %168 : vector<1x16x4xf32> to vector<16x4xf32>
    %170 = vector.shape_cast %167 : vector<16x4xf32> to vector<1x16x4xf32>
    tpu.vector_store %arg16[%c0_64, %c0_65, %c0_66], %170 {strides = array<i32>} : memref<1x16x4xf32, #tpu.memory_space<vmem>>, vector<1x16x4xf32>,
    return
  }
  func.func @transform_0(%arg0: i32) -> (i32, i32, i32) {
    %c0_i32 = arith.constant 0 : i32
    %c0_i32_0 = arith.constant 0 : i32
    %c0_i32_1 = arith.constant 0 : i32
    return %arg0, %c0_i32, %c0_i32_0 : i32, i32, i32
  }
  func.func @transform_1(%arg0: i32) -> (i32, i32) {
    %c0_i32 = arith.constant 0 : i32
    %c0_i32_0 = arith.constant 0 : i32
    %c0_i32_1 = arith.constant 0 : i32
    return %c0_i32, %c0_i32_0 : i32, i32
  }
  func.func @transform_2(%arg0: i32) -> (i32, i32) {
    %c0_i32 = arith.constant 0 : i32
    %c0_i32_0 = arith.constant 0 : i32
    %c0_i32_1 = arith.constant 0 : i32
    return %c0_i32, %c0_i32_0 : i32, i32
  }
  func.func @transform_3(%arg0: i32) -> (i32, i32) {
    %c0_i32 = arith.constant 0 : i32
    %c0_i32_0 = arith.constant 0 : i32
    %c0_i32_1 = arith.constant 0 : i32
    return %c0_i32, %c0_i32_0 : i32, i32
  }
  func.func @transform_4(%arg0: i32) -> (i32, i32) {
    %c0_i32 = arith.constant 0 : i32
    %c0_i32_0 = arith.constant 0 : i32
    %c0_i32_1 = arith.constant 0 : i32
    return %c0_i32, %c0_i32_0 : i32, i32
  }
  func.func @transform_5(%arg0: i32) -> (i32, i32) {
    %c0_i32 = arith.constant 0 : i32
    %c0_i32_0 = arith.constant 0 : i32
    %c0_i32_1 = arith.constant 0 : i32
    return %c0_i32, %c0_i32_0 : i32, i32
  }
  func.func @transform_6(%arg0: i32) -> (i32, i32) {
    %c0_i32 = arith.constant 0 : i32
    %c0_i32_0 = arith.constant 0 : i32
    %c0_i32_1 = arith.constant 0 : i32
    return %c0_i32, %c0_i32_0 : i32, i32
  }
  func.func @transform_7(%arg0: i32) -> (i32, i32) {
    %c0_i32 = arith.constant 0 : i32
    %c0_i32_0 = arith.constant 0 : i32
    %c0_i32_1 = arith.constant 0 : i32
    return %c0_i32, %c0_i32_0 : i32, i32
  }
  func.func @transform_8(%arg0: i32) -> (i32, i32) {
    %c0_i32 = arith.constant 0 : i32
    %c0_i32_0 = arith.constant 0 : i32
    %c0_i32_1 = arith.constant 0 : i32
    return %c0_i32, %c0_i32_0 : i32, i32
  }
  func.func @transform_9(%arg0: i32) -> (i32, i32) {
    %c0_i32 = arith.constant 0 : i32
    %c0_i32_0 = arith.constant 0 : i32
    %c0_i32_1 = arith.constant 0 : i32
    return %c0_i32, %c0_i32_0 : i32, i32
  }
  func.func @transform_10(%arg0: i32) -> (i32, i32) {
    %c0_i32 = arith.constant 0 : i32
    %c0_i32_0 = arith.constant 0 : i32
    %c0_i32_1 = arith.constant 0 : i32
    return %c0_i32, %c0_i32_0 : i32, i32
  }
  func.func @transform_11(%arg0: i32) -> (i32, i32) {
    %c0_i32 = arith.constant 0 : i32
    %c0_i32_0 = arith.constant 0 : i32
    %c0_i32_1 = arith.constant 0 : i32
    return %c0_i32, %c0_i32_0 : i32, i32
  }
  func.func @transform_12(%arg0: i32) -> (i32, i32) {
    %c0_i32 = arith.constant 0 : i32
    %c0_i32_0 = arith.constant 0 : i32
    %c0_i32_1 = arith.constant 0 : i32
    return %c0_i32, %c0_i32_0 : i32, i32
  }
  func.func @transform_13(%arg0: i32) -> (i32, i32) {
    %c0_i32 = arith.constant 0 : i32
    %c0_i32_0 = arith.constant 0 : i32
    %c0_i32_1 = arith.constant 0 : i32
    return %c0_i32, %c0_i32_0 : i32, i32
  }
  func.func @transform_14(%arg0: i32) -> (i32, i32) {
    %c0_i32 = arith.constant 0 : i32
    %c0_i32_0 = arith.constant 0 : i32
    %c0_i32_1 = arith.constant 0 : i32
    return %c0_i32, %c0_i32_0 : i32, i32
  }
  func.func @transform_15(%arg0: i32) -> (i32, i32, i32) {
    %c0_i32 = arith.constant 0 : i32
    %c0_i32_0 = arith.constant 0 : i32
    %c0_i32_1 = arith.constant 0 : i32
    return %arg0, %c0_i32, %c0_i32_0 : i32, i32, i32
  }
}

module attributes {stable_mosaic.version = 11 : i64} {
  func.func @_dense_block_kernel(%arg0: i32, %arg1: memref<1x8x16xf32, #tpu.memory_space<vmem>>, %arg2: memref<8x1xf32, #tpu.memory_space<vmem>>, %arg3: memref<8x1xf32, #tpu.memory_space<vmem>>, %arg4: memref<8x8xbf16, #tpu.memory_space<vmem>>, %arg5: memref<8x1xf32, #tpu.memory_space<vmem>>, %arg6: memref<8x1xf32, #tpu.memory_space<vmem>>, %arg7: memref<4x72xbf16, #tpu.memory_space<vmem>>, %arg8: memref<12x1xf32, #tpu.memory_space<vmem>>, %arg9: memref<12x1xf32, #tpu.memory_space<vmem>>, %arg10: memref<8x12xbf16, #tpu.memory_space<vmem>>, %arg11: memref<8x1xf32, #tpu.memory_space<vmem>>, %arg12: memref<8x1xf32, #tpu.memory_space<vmem>>, %arg13: memref<4x72xbf16, #tpu.memory_space<vmem>>, %arg14: memref<16x1xf32, #tpu.memory_space<vmem>>, %arg15: memref<16x1xf32, #tpu.memory_space<vmem>>, %arg16: memref<8x16xbf16, #tpu.memory_space<vmem>>, %arg17: memref<16x4xbf16, #tpu.memory_space<vmem>>, %arg18: memref<1x8x4xf32, #tpu.memory_space<vmem>>) attributes {dimension_semantics = [#tpu.dimension_semantics<parallel>], iteration_bounds = array<i64: 2>, scalar_prefetch = 0 : i64, scratch_operands = 0 : i64, tpu.core_type = #tpu.core_type<tc>, window_params = [{transform_indices = @transform_0, window_bounds = array<i64: 1, 8, 16>}, {pipeline_mode = #tpu.pipeline_mode<synchronous>, transform_indices = @transform_1, window_bounds = array<i64: 8, 1>}, {pipeline_mode = #tpu.pipeline_mode<synchronous>, transform_indices = @transform_2, window_bounds = array<i64: 8, 1>}, {pipeline_mode = #tpu.pipeline_mode<synchronous>, transform_indices = @transform_3, window_bounds = array<i64: 8, 8>}, {pipeline_mode = #tpu.pipeline_mode<synchronous>, transform_indices = @transform_4, window_bounds = array<i64: 8, 1>}, {pipeline_mode = #tpu.pipeline_mode<synchronous>, transform_indices = @transform_5, window_bounds = array<i64: 8, 1>}, {pipeline_mode = #tpu.pipeline_mode<synchronous>, transform_indices = @transform_6, window_bounds = array<i64: 4, 72>}, {pipeline_mode = #tpu.pipeline_mode<synchronous>, transform_indices = @transform_7, window_bounds = array<i64: 12, 1>}, {pipeline_mode = #tpu.pipeline_mode<synchronous>, transform_indices = @transform_8, window_bounds = array<i64: 12, 1>}, {pipeline_mode = #tpu.pipeline_mode<synchronous>, transform_indices = @transform_9, window_bounds = array<i64: 8, 12>}, {pipeline_mode = #tpu.pipeline_mode<synchronous>, transform_indices = @transform_10, window_bounds = array<i64: 8, 1>}, {pipeline_mode = #tpu.pipeline_mode<synchronous>, transform_indices = @transform_11, window_bounds = array<i64: 8, 1>}, {pipeline_mode = #tpu.pipeline_mode<synchronous>, transform_indices = @transform_12, window_bounds = array<i64: 4, 72>}, {pipeline_mode = #tpu.pipeline_mode<synchronous>, transform_indices = @transform_13, window_bounds = array<i64: 16, 1>}, {pipeline_mode = #tpu.pipeline_mode<synchronous>, transform_indices = @transform_14, window_bounds = array<i64: 16, 1>}, {pipeline_mode = #tpu.pipeline_mode<synchronous>, transform_indices = @transform_15, window_bounds = array<i64: 8, 16>}, {pipeline_mode = #tpu.pipeline_mode<synchronous>, transform_indices = @transform_16, window_bounds = array<i64: 16, 4>}, {transform_indices = @transform_17, window_bounds = array<i64: 1, 8, 4>}]} {
    %c0 = arith.constant 0 : index
    %c0_0 = arith.constant 0 : index
    %c0_1 = arith.constant 0 : index
    %0 = vector.load %arg1[%c0, %c0_0, %c0_1] : memref<1x8x16xf32, #tpu.memory_space<vmem>>, vector<1x8x16xf32>
    %1 = vector.shape_cast %0 : vector<1x8x16xf32> to vector<8x16xf32>
    %c0_2 = arith.constant 0 : index
    %c0_3 = arith.constant 0 : index
    %2 = vector.load %arg2[%c0_2, %c0_3] : memref<8x1xf32, #tpu.memory_space<vmem>>, vector<8x1xf32>
    %3 = vector.broadcast %2 : vector<8x1xf32> to vector<8x16xf32>
    %4 = arith.mulf %1, %3 : vector<8x16xf32>
    %c0_4 = arith.constant 0 : index
    %c0_5 = arith.constant 0 : index
    %5 = vector.load %arg3[%c0_4, %c0_5] : memref<8x1xf32, #tpu.memory_space<vmem>>, vector<8x1xf32>
    %6 = vector.broadcast %5 : vector<8x1xf32> to vector<8x16xf32>
    %7 = arith.addf %4, %6 : vector<8x16xf32>
    %cst = arith.constant 0.000000e+00 : f32
    %8 = vector.broadcast %cst : f32 to vector<8x16xf32>
    %9 = arith.maximumf %7, %8 : vector<8x16xf32>
    %c0_6 = arith.constant 0 : index
    %c0_7 = arith.constant 0 : index
    %10 = vector.load %arg4[%c0_6, %c0_7] : memref<8x8xbf16, #tpu.memory_space<vmem>>, vector<8x8xbf16>
    %11 = arith.truncf %9 : vector<8x16xf32> to vector<8x16xbf16>
    %cst_8 = arith.constant dense<0.000000e+00> : vector<8x16xf32>
    %12 = tpu.matmul %10, %11, %cst_8 {dimension_numbers = #tpu.dot_dimension_numbers<[1], [0], [0], [1], [0, 0, 1, 1], [], []>} : vector<8x8xbf16>, vector<8x16xbf16>, vector<8x16xf32> -> vector<8x16xf32>
    %c0_9 = arith.constant 0 : index
    %c0_10 = arith.constant 0 : index
    %13 = vector.load %arg5[%c0_9, %c0_10] : memref<8x1xf32, #tpu.memory_space<vmem>>, vector<8x1xf32>
    %14 = vector.broadcast %13 : vector<8x1xf32> to vector<8x16xf32>
    %15 = arith.mulf %12, %14 : vector<8x16xf32>
    %c0_11 = arith.constant 0 : index
    %c0_12 = arith.constant 0 : index
    %16 = vector.load %arg6[%c0_11, %c0_12] : memref<8x1xf32, #tpu.memory_space<vmem>>, vector<8x1xf32>
    %17 = vector.broadcast %16 : vector<8x1xf32> to vector<8x16xf32>
    %18 = arith.addf %15, %17 : vector<8x16xf32>
    %cst_13 = arith.constant 0.000000e+00 : f32
    %19 = vector.broadcast %cst_13 : f32 to vector<8x16xf32>
    %20 = arith.maximumf %18, %19 : vector<8x16xf32>
    %21 = tpu.iota {dimensions = array<i32: 1>} : vector<1x16xi32>
    %c4_i32 = arith.constant 4 : i32
    %c0_i32 = arith.constant 0 : i32
    %22 = arith.cmpi eq, %c4_i32, %c0_i32 : i32
    %c1_i32 = arith.constant 1 : i32
    %23 = arith.select %22, %c1_i32, %c4_i32 : i32
    %24 = vector.broadcast %23 : i32 to vector<1x16xi32>
    %25 = arith.remsi %21, %24 : vector<1x16xi32>
    %c0_i32_14 = arith.constant 0 : i32
    %26 = vector.broadcast %c0_i32_14 : i32 to vector<1x16xi32>
    %27 = arith.cmpi ne, %25, %26 : vector<1x16xi32>
    %c0_i32_15 = arith.constant 0 : i32
    %28 = vector.broadcast %c0_i32_15 : i32 to vector<1x16xi32>
    %29 = arith.cmpi slt, %25, %28 : vector<1x16xi32>
    %c0_i32_16 = arith.constant 0 : i32
    %30 = arith.cmpi slt, %23, %c0_i32_16 : i32
    %31 = vector.broadcast %30 : i1 to vector<1x16xi1>
    %32 = vector.broadcast %31 : vector<1x16xi1> to vector<1x16xi1>
    %33 = arith.xori %29, %32 : vector<1x16xi1>
    %34 = arith.andi %33, %27 : vector<1x16xi1>
    %35 = vector.broadcast %23 : i32 to vector<1x16xi32>
    %36 = arith.addi %25, %35 : vector<1x16xi32>
    %37 = arith.select %34, %36, %25 : vector<1x16xi1>, vector<1x16xi32>
    %c1_i32_17 = arith.constant 1 : i32
    %38 = vector.broadcast %c1_i32_17 : i32 to vector<1x16xi32>
    %39 = arith.cmpi sge, %37, %38 : vector<1x16xi32>
    %c2_i32 = arith.constant 2 : i32
    %40 = vector.broadcast %c2_i32 : i32 to vector<1x16xi32>
    %41 = arith.cmpi sle, %37, %40 : vector<1x16xi32>
    %cst_18 = arith.constant 0.000000e+00 : f32
    %42 = vector.broadcast %cst_18 : f32 to vector<8x5xf32>
    %43 = tpu.concatenate %42, %20, %42 in 1 : vector<8x5xf32>, vector<8x16xf32>, vector<8x5xf32> -> vector<8x26xf32>
    %44 = vector.extract_strided_slice %43 {offsets = [0, 0], sizes = [8, 16], strides = [1, 1]} : vector<8x26xf32> to vector<8x16xf32>
    %cst_19 = arith.constant 0.000000e+00 : f32
    %45 = vector.shape_cast %39 : vector<1x16xi1> to vector<1x16xi1>
    %46 = vector.broadcast %45 : vector<1x16xi1> to vector<8x16xi1>
    %47 = vector.broadcast %cst_19 : f32 to vector<8x16xf32>
    %48 = arith.select %46, %44, %47 : vector<8x16xi1>, vector<8x16xf32>
    %49 = vector.extract_strided_slice %43 {offsets = [0, 1], sizes = [8, 16], strides = [1, 1]} : vector<8x26xf32> to vector<8x16xf32>
    %50 = vector.extract_strided_slice %43 {offsets = [0, 2], sizes = [8, 16], strides = [1, 1]} : vector<8x26xf32> to vector<8x16xf32>
    %cst_20 = arith.constant 0.000000e+00 : f32
    %51 = vector.shape_cast %41 : vector<1x16xi1> to vector<1x16xi1>
    %52 = vector.broadcast %51 : vector<1x16xi1> to vector<8x16xi1>
    %53 = vector.broadcast %cst_20 : f32 to vector<8x16xf32>
    %54 = arith.select %52, %50, %53 : vector<8x16xi1>, vector<8x16xf32>
    %55 = vector.extract_strided_slice %43 {offsets = [0, 4], sizes = [8, 16], strides = [1, 1]} : vector<8x26xf32> to vector<8x16xf32>
    %cst_21 = arith.constant 0.000000e+00 : f32
    %56 = vector.shape_cast %39 : vector<1x16xi1> to vector<1x16xi1>
    %57 = vector.broadcast %56 : vector<1x16xi1> to vector<8x16xi1>
    %58 = vector.broadcast %cst_21 : f32 to vector<8x16xf32>
    %59 = arith.select %57, %55, %58 : vector<8x16xi1>, vector<8x16xf32>
    %60 = vector.extract_strided_slice %43 {offsets = [0, 5], sizes = [8, 16], strides = [1, 1]} : vector<8x26xf32> to vector<8x16xf32>
    %61 = vector.extract_strided_slice %43 {offsets = [0, 6], sizes = [8, 16], strides = [1, 1]} : vector<8x26xf32> to vector<8x16xf32>
    %cst_22 = arith.constant 0.000000e+00 : f32
    %62 = vector.shape_cast %41 : vector<1x16xi1> to vector<1x16xi1>
    %63 = vector.broadcast %62 : vector<1x16xi1> to vector<8x16xi1>
    %64 = vector.broadcast %cst_22 : f32 to vector<8x16xf32>
    %65 = arith.select %63, %61, %64 : vector<8x16xi1>, vector<8x16xf32>
    %66 = vector.extract_strided_slice %43 {offsets = [0, 8], sizes = [8, 16], strides = [1, 1]} : vector<8x26xf32> to vector<8x16xf32>
    %cst_23 = arith.constant 0.000000e+00 : f32
    %67 = vector.shape_cast %39 : vector<1x16xi1> to vector<1x16xi1>
    %68 = vector.broadcast %67 : vector<1x16xi1> to vector<8x16xi1>
    %69 = vector.broadcast %cst_23 : f32 to vector<8x16xf32>
    %70 = arith.select %68, %66, %69 : vector<8x16xi1>, vector<8x16xf32>
    %71 = vector.extract_strided_slice %43 {offsets = [0, 9], sizes = [8, 16], strides = [1, 1]} : vector<8x26xf32> to vector<8x16xf32>
    %72 = vector.extract_strided_slice %43 {offsets = [0, 10], sizes = [8, 16], strides = [1, 1]} : vector<8x26xf32> to vector<8x16xf32>
    %cst_24 = arith.constant 0.000000e+00 : f32
    %73 = vector.shape_cast %41 : vector<1x16xi1> to vector<1x16xi1>
    %74 = vector.broadcast %73 : vector<1x16xi1> to vector<8x16xi1>
    %75 = vector.broadcast %cst_24 : f32 to vector<8x16xf32>
    %76 = arith.select %74, %72, %75 : vector<8x16xi1>, vector<8x16xf32>
    %77 = tpu.concatenate %48, %49, %54, %59, %60, %65, %70, %71, %76 in 0 : vector<8x16xf32>, vector<8x16xf32>, vector<8x16xf32>, vector<8x16xf32>, vector<8x16xf32>, vector<8x16xf32>, vector<8x16xf32>, vector<8x16xf32>, vector<8x16xf32> -> vector<72x16xf32>
    %78 = arith.truncf %77 : vector<72x16xf32> to vector<72x16xbf16>
    %c0_25 = arith.constant 0 : index
    %c0_26 = arith.constant 0 : index
    %79 = vector.load %arg7[%c0_25, %c0_26] : memref<4x72xbf16, #tpu.memory_space<vmem>>, vector<4x72xbf16>
    %cst_27 = arith.constant dense<0.000000e+00> : vector<4x16xf32>
    %80 = tpu.matmul %79, %78, %cst_27 {dimension_numbers = #tpu.dot_dimension_numbers<[1], [0], [0], [1], [0, 0, 1, 1], [], []>} : vector<4x72xbf16>, vector<72x16xbf16>, vector<4x16xf32> -> vector<4x16xf32>
    %81 = tpu.concatenate %1, %80 in 0 : vector<8x16xf32>, vector<4x16xf32> -> vector<12x16xf32>
    %c0_28 = arith.constant 0 : index
    %c0_29 = arith.constant 0 : index
    %82 = vector.load %arg8[%c0_28, %c0_29] : memref<12x1xf32, #tpu.memory_space<vmem>>, vector<12x1xf32>
    %83 = vector.broadcast %82 : vector<12x1xf32> to vector<12x16xf32>
    %84 = arith.mulf %81, %83 : vector<12x16xf32>
    %c0_30 = arith.constant 0 : index
    %c0_31 = arith.constant 0 : index
    %85 = vector.load %arg9[%c0_30, %c0_31] : memref<12x1xf32, #tpu.memory_space<vmem>>, vector<12x1xf32>
    %86 = vector.broadcast %85 : vector<12x1xf32> to vector<12x16xf32>
    %87 = arith.addf %84, %86 : vector<12x16xf32>
    %cst_32 = arith.constant 0.000000e+00 : f32
    %88 = vector.broadcast %cst_32 : f32 to vector<12x16xf32>
    %89 = arith.maximumf %87, %88 : vector<12x16xf32>
    %c0_33 = arith.constant 0 : index
    %c0_34 = arith.constant 0 : index
    %90 = vector.load %arg10[%c0_33, %c0_34] : memref<8x12xbf16, #tpu.memory_space<vmem>>, vector<8x12xbf16>
    %91 = arith.truncf %89 : vector<12x16xf32> to vector<12x16xbf16>
    %cst_35 = arith.constant dense<0.000000e+00> : vector<8x16xf32>
    %92 = tpu.matmul %90, %91, %cst_35 {dimension_numbers = #tpu.dot_dimension_numbers<[1], [0], [0], [1], [0, 0, 1, 1], [], []>} : vector<8x12xbf16>, vector<12x16xbf16>, vector<8x16xf32> -> vector<8x16xf32>
    %c0_36 = arith.constant 0 : index
    %c0_37 = arith.constant 0 : index
    %93 = vector.load %arg11[%c0_36, %c0_37] : memref<8x1xf32, #tpu.memory_space<vmem>>, vector<8x1xf32>
    %94 = vector.broadcast %93 : vector<8x1xf32> to vector<8x16xf32>
    %95 = arith.mulf %92, %94 : vector<8x16xf32>
    %c0_38 = arith.constant 0 : index
    %c0_39 = arith.constant 0 : index
    %96 = vector.load %arg12[%c0_38, %c0_39] : memref<8x1xf32, #tpu.memory_space<vmem>>, vector<8x1xf32>
    %97 = vector.broadcast %96 : vector<8x1xf32> to vector<8x16xf32>
    %98 = arith.addf %95, %97 : vector<8x16xf32>
    %cst_40 = arith.constant 0.000000e+00 : f32
    %99 = vector.broadcast %cst_40 : f32 to vector<8x16xf32>
    %100 = arith.maximumf %98, %99 : vector<8x16xf32>
    %101 = tpu.iota {dimensions = array<i32: 1>} : vector<1x16xi32>
    %c4_i32_41 = arith.constant 4 : i32
    %c0_i32_42 = arith.constant 0 : i32
    %102 = arith.cmpi eq, %c4_i32_41, %c0_i32_42 : i32
    %c1_i32_43 = arith.constant 1 : i32
    %103 = arith.select %102, %c1_i32_43, %c4_i32_41 : i32
    %104 = vector.broadcast %103 : i32 to vector<1x16xi32>
    %105 = arith.remsi %101, %104 : vector<1x16xi32>
    %c0_i32_44 = arith.constant 0 : i32
    %106 = vector.broadcast %c0_i32_44 : i32 to vector<1x16xi32>
    %107 = arith.cmpi ne, %105, %106 : vector<1x16xi32>
    %c0_i32_45 = arith.constant 0 : i32
    %108 = vector.broadcast %c0_i32_45 : i32 to vector<1x16xi32>
    %109 = arith.cmpi slt, %105, %108 : vector<1x16xi32>
    %c0_i32_46 = arith.constant 0 : i32
    %110 = arith.cmpi slt, %103, %c0_i32_46 : i32
    %111 = vector.broadcast %110 : i1 to vector<1x16xi1>
    %112 = vector.broadcast %111 : vector<1x16xi1> to vector<1x16xi1>
    %113 = arith.xori %109, %112 : vector<1x16xi1>
    %114 = arith.andi %113, %107 : vector<1x16xi1>
    %115 = vector.broadcast %103 : i32 to vector<1x16xi32>
    %116 = arith.addi %105, %115 : vector<1x16xi32>
    %117 = arith.select %114, %116, %105 : vector<1x16xi1>, vector<1x16xi32>
    %c1_i32_47 = arith.constant 1 : i32
    %118 = vector.broadcast %c1_i32_47 : i32 to vector<1x16xi32>
    %119 = arith.cmpi sge, %117, %118 : vector<1x16xi32>
    %c2_i32_48 = arith.constant 2 : i32
    %120 = vector.broadcast %c2_i32_48 : i32 to vector<1x16xi32>
    %121 = arith.cmpi sle, %117, %120 : vector<1x16xi32>
    %cst_49 = arith.constant 0.000000e+00 : f32
    %122 = vector.broadcast %cst_49 : f32 to vector<8x5xf32>
    %123 = tpu.concatenate %122, %100, %122 in 1 : vector<8x5xf32>, vector<8x16xf32>, vector<8x5xf32> -> vector<8x26xf32>
    %124 = vector.extract_strided_slice %123 {offsets = [0, 0], sizes = [8, 16], strides = [1, 1]} : vector<8x26xf32> to vector<8x16xf32>
    %cst_50 = arith.constant 0.000000e+00 : f32
    %125 = vector.shape_cast %119 : vector<1x16xi1> to vector<1x16xi1>
    %126 = vector.broadcast %125 : vector<1x16xi1> to vector<8x16xi1>
    %127 = vector.broadcast %cst_50 : f32 to vector<8x16xf32>
    %128 = arith.select %126, %124, %127 : vector<8x16xi1>, vector<8x16xf32>
    %129 = vector.extract_strided_slice %123 {offsets = [0, 1], sizes = [8, 16], strides = [1, 1]} : vector<8x26xf32> to vector<8x16xf32>
    %130 = vector.extract_strided_slice %123 {offsets = [0, 2], sizes = [8, 16], strides = [1, 1]} : vector<8x26xf32> to vector<8x16xf32>
    %cst_51 = arith.constant 0.000000e+00 : f32
    %131 = vector.shape_cast %121 : vector<1x16xi1> to vector<1x16xi1>
    %132 = vector.broadcast %131 : vector<1x16xi1> to vector<8x16xi1>
    %133 = vector.broadcast %cst_51 : f32 to vector<8x16xf32>
    %134 = arith.select %132, %130, %133 : vector<8x16xi1>, vector<8x16xf32>
    %135 = vector.extract_strided_slice %123 {offsets = [0, 4], sizes = [8, 16], strides = [1, 1]} : vector<8x26xf32> to vector<8x16xf32>
    %cst_52 = arith.constant 0.000000e+00 : f32
    %136 = vector.shape_cast %119 : vector<1x16xi1> to vector<1x16xi1>
    %137 = vector.broadcast %136 : vector<1x16xi1> to vector<8x16xi1>
    %138 = vector.broadcast %cst_52 : f32 to vector<8x16xf32>
    %139 = arith.select %137, %135, %138 : vector<8x16xi1>, vector<8x16xf32>
    %140 = vector.extract_strided_slice %123 {offsets = [0, 5], sizes = [8, 16], strides = [1, 1]} : vector<8x26xf32> to vector<8x16xf32>
    %141 = vector.extract_strided_slice %123 {offsets = [0, 6], sizes = [8, 16], strides = [1, 1]} : vector<8x26xf32> to vector<8x16xf32>
    %cst_53 = arith.constant 0.000000e+00 : f32
    %142 = vector.shape_cast %121 : vector<1x16xi1> to vector<1x16xi1>
    %143 = vector.broadcast %142 : vector<1x16xi1> to vector<8x16xi1>
    %144 = vector.broadcast %cst_53 : f32 to vector<8x16xf32>
    %145 = arith.select %143, %141, %144 : vector<8x16xi1>, vector<8x16xf32>
    %146 = vector.extract_strided_slice %123 {offsets = [0, 8], sizes = [8, 16], strides = [1, 1]} : vector<8x26xf32> to vector<8x16xf32>
    %cst_54 = arith.constant 0.000000e+00 : f32
    %147 = vector.shape_cast %119 : vector<1x16xi1> to vector<1x16xi1>
    %148 = vector.broadcast %147 : vector<1x16xi1> to vector<8x16xi1>
    %149 = vector.broadcast %cst_54 : f32 to vector<8x16xf32>
    %150 = arith.select %148, %146, %149 : vector<8x16xi1>, vector<8x16xf32>
    %151 = vector.extract_strided_slice %123 {offsets = [0, 9], sizes = [8, 16], strides = [1, 1]} : vector<8x26xf32> to vector<8x16xf32>
    %152 = vector.extract_strided_slice %123 {offsets = [0, 10], sizes = [8, 16], strides = [1, 1]} : vector<8x26xf32> to vector<8x16xf32>
    %cst_55 = arith.constant 0.000000e+00 : f32
    %153 = vector.shape_cast %121 : vector<1x16xi1> to vector<1x16xi1>
    %154 = vector.broadcast %153 : vector<1x16xi1> to vector<8x16xi1>
    %155 = vector.broadcast %cst_55 : f32 to vector<8x16xf32>
    %156 = arith.select %154, %152, %155 : vector<8x16xi1>, vector<8x16xf32>
    %157 = tpu.concatenate %128, %129, %134, %139, %140, %145, %150, %151, %156 in 0 : vector<8x16xf32>, vector<8x16xf32>, vector<8x16xf32>, vector<8x16xf32>, vector<8x16xf32>, vector<8x16xf32>, vector<8x16xf32>, vector<8x16xf32>, vector<8x16xf32> -> vector<72x16xf32>
    %158 = arith.truncf %157 : vector<72x16xf32> to vector<72x16xbf16>
    %c0_56 = arith.constant 0 : index
    %c0_57 = arith.constant 0 : index
    %159 = vector.load %arg13[%c0_56, %c0_57] : memref<4x72xbf16, #tpu.memory_space<vmem>>, vector<4x72xbf16>
    %cst_58 = arith.constant dense<0.000000e+00> : vector<4x16xf32>
    %160 = tpu.matmul %159, %158, %cst_58 {dimension_numbers = #tpu.dot_dimension_numbers<[1], [0], [0], [1], [0, 0, 1, 1], [], []>} : vector<4x72xbf16>, vector<72x16xbf16>, vector<4x16xf32> -> vector<4x16xf32>
    %161 = tpu.concatenate %1, %80, %160 in 0 : vector<8x16xf32>, vector<4x16xf32>, vector<4x16xf32> -> vector<16x16xf32>
    %c0_59 = arith.constant 0 : index
    %c0_60 = arith.constant 0 : index
    %162 = vector.load %arg14[%c0_59, %c0_60] : memref<16x1xf32, #tpu.memory_space<vmem>>, vector<16x1xf32>
    %163 = vector.broadcast %162 : vector<16x1xf32> to vector<16x16xf32>
    %164 = arith.mulf %161, %163 : vector<16x16xf32>
    %c0_61 = arith.constant 0 : index
    %c0_62 = arith.constant 0 : index
    %165 = vector.load %arg15[%c0_61, %c0_62] : memref<16x1xf32, #tpu.memory_space<vmem>>, vector<16x1xf32>
    %166 = vector.broadcast %165 : vector<16x1xf32> to vector<16x16xf32>
    %167 = arith.addf %164, %166 : vector<16x16xf32>
    %cst_63 = arith.constant 0.000000e+00 : f32
    %168 = vector.broadcast %cst_63 : f32 to vector<16x16xf32>
    %169 = arith.maximumf %167, %168 : vector<16x16xf32>
    %c0_64 = arith.constant 0 : index
    %c0_65 = arith.constant 0 : index
    %170 = vector.load %arg16[%c0_64, %c0_65] : memref<8x16xbf16, #tpu.memory_space<vmem>>, vector<8x16xbf16>
    %171 = arith.truncf %169 : vector<16x16xf32> to vector<16x16xbf16>
    %cst_66 = arith.constant dense<0.000000e+00> : vector<8x16xf32>
    %172 = tpu.matmul %170, %171, %cst_66 {dimension_numbers = #tpu.dot_dimension_numbers<[1], [0], [0], [1], [0, 0, 1, 1], [], []>} : vector<8x16xbf16>, vector<16x16xbf16>, vector<8x16xf32> -> vector<8x16xf32>
    %173 = arith.truncf %172 : vector<8x16xf32> to vector<8x16xbf16>
    %c0_67 = arith.constant 0 : index
    %c0_68 = arith.constant 0 : index
    %174 = vector.load %arg17[%c0_67, %c0_68] : memref<16x4xbf16, #tpu.memory_space<vmem>>, vector<16x4xbf16>
    %cst_69 = arith.constant dense<0.000000e+00> : vector<8x4xf32>
    %175 = tpu.matmul %173, %174, %cst_69 {dimension_numbers = #tpu.dot_dimension_numbers<[1], [0], [0], [1], [0, 0, 1, 1], [], []>} : vector<8x16xbf16>, vector<16x4xbf16>, vector<8x4xf32> -> vector<8x4xf32>
    %c0_70 = arith.constant 0 : index
    %c0_71 = arith.constant 0 : index
    %c0_72 = arith.constant 0 : index
    %176 = vector.load %arg18[%c0_70, %c0_71, %c0_72] : memref<1x8x4xf32, #tpu.memory_space<vmem>>, vector<1x8x4xf32>
    %177 = vector.shape_cast %176 : vector<1x8x4xf32> to vector<8x4xf32>
    %178 = vector.shape_cast %175 : vector<8x4xf32> to vector<1x8x4xf32>
    tpu.vector_store %arg18[%c0_70, %c0_71, %c0_72], %178 {strides = array<i32>} : memref<1x8x4xf32, #tpu.memory_space<vmem>>, vector<1x8x4xf32>,
    return
  }
  func.func @transform_0(%arg0: i32) -> (i32, i32, i32) {
    %c0_i32 = arith.constant 0 : i32
    %c0_i32_0 = arith.constant 0 : i32
    %c0_i32_1 = arith.constant 0 : i32
    return %arg0, %c0_i32, %c0_i32_0 : i32, i32, i32
  }
  func.func @transform_1(%arg0: i32) -> (i32, i32) {
    %c0_i32 = arith.constant 0 : i32
    %c0_i32_0 = arith.constant 0 : i32
    %c0_i32_1 = arith.constant 0 : i32
    return %c0_i32, %c0_i32_0 : i32, i32
  }
  func.func @transform_2(%arg0: i32) -> (i32, i32) {
    %c0_i32 = arith.constant 0 : i32
    %c0_i32_0 = arith.constant 0 : i32
    %c0_i32_1 = arith.constant 0 : i32
    return %c0_i32, %c0_i32_0 : i32, i32
  }
  func.func @transform_3(%arg0: i32) -> (i32, i32) {
    %c0_i32 = arith.constant 0 : i32
    %c0_i32_0 = arith.constant 0 : i32
    %c0_i32_1 = arith.constant 0 : i32
    return %c0_i32, %c0_i32_0 : i32, i32
  }
  func.func @transform_4(%arg0: i32) -> (i32, i32) {
    %c0_i32 = arith.constant 0 : i32
    %c0_i32_0 = arith.constant 0 : i32
    %c0_i32_1 = arith.constant 0 : i32
    return %c0_i32, %c0_i32_0 : i32, i32
  }
  func.func @transform_5(%arg0: i32) -> (i32, i32) {
    %c0_i32 = arith.constant 0 : i32
    %c0_i32_0 = arith.constant 0 : i32
    %c0_i32_1 = arith.constant 0 : i32
    return %c0_i32, %c0_i32_0 : i32, i32
  }
  func.func @transform_6(%arg0: i32) -> (i32, i32) {
    %c0_i32 = arith.constant 0 : i32
    %c0_i32_0 = arith.constant 0 : i32
    %c0_i32_1 = arith.constant 0 : i32
    return %c0_i32, %c0_i32_0 : i32, i32
  }
  func.func @transform_7(%arg0: i32) -> (i32, i32) {
    %c0_i32 = arith.constant 0 : i32
    %c0_i32_0 = arith.constant 0 : i32
    %c0_i32_1 = arith.constant 0 : i32
    return %c0_i32, %c0_i32_0 : i32, i32
  }
  func.func @transform_8(%arg0: i32) -> (i32, i32) {
    %c0_i32 = arith.constant 0 : i32
    %c0_i32_0 = arith.constant 0 : i32
    %c0_i32_1 = arith.constant 0 : i32
    return %c0_i32, %c0_i32_0 : i32, i32
  }
  func.func @transform_9(%arg0: i32) -> (i32, i32) {
    %c0_i32 = arith.constant 0 : i32
    %c0_i32_0 = arith.constant 0 : i32
    %c0_i32_1 = arith.constant 0 : i32
    return %c0_i32, %c0_i32_0 : i32, i32
  }
  func.func @transform_10(%arg0: i32) -> (i32, i32) {
    %c0_i32 = arith.constant 0 : i32
    %c0_i32_0 = arith.constant 0 : i32
    %c0_i32_1 = arith.constant 0 : i32
    return %c0_i32, %c0_i32_0 : i32, i32
  }
  func.func @transform_11(%arg0: i32) -> (i32, i32) {
    %c0_i32 = arith.constant 0 : i32
    %c0_i32_0 = arith.constant 0 : i32
    %c0_i32_1 = arith.constant 0 : i32
    return %c0_i32, %c0_i32_0 : i32, i32
  }
  func.func @transform_12(%arg0: i32) -> (i32, i32) {
    %c0_i32 = arith.constant 0 : i32
    %c0_i32_0 = arith.constant 0 : i32
    %c0_i32_1 = arith.constant 0 : i32
    return %c0_i32, %c0_i32_0 : i32, i32
  }
  func.func @transform_13(%arg0: i32) -> (i32, i32) {
    %c0_i32 = arith.constant 0 : i32
    %c0_i32_0 = arith.constant 0 : i32
    %c0_i32_1 = arith.constant 0 : i32
    return %c0_i32, %c0_i32_0 : i32, i32
  }
  func.func @transform_14(%arg0: i32) -> (i32, i32) {
    %c0_i32 = arith.constant 0 : i32
    %c0_i32_0 = arith.constant 0 : i32
    %c0_i32_1 = arith.constant 0 : i32
    return %c0_i32, %c0_i32_0 : i32, i32
  }
  func.func @transform_15(%arg0: i32) -> (i32, i32) {
    %c0_i32 = arith.constant 0 : i32
    %c0_i32_0 = arith.constant 0 : i32
    %c0_i32_1 = arith.constant 0 : i32
    return %c0_i32, %c0_i32_0 : i32, i32
  }
  func.func @transform_16(%arg0: i32) -> (i32, i32) {
    %c0_i32 = arith.constant 0 : i32
    %c0_i32_0 = arith.constant 0 : i32
    %c0_i32_1 = arith.constant 0 : i32
    return %c0_i32, %c0_i32_0 : i32, i32
  }
  func.func @transform_17(%arg0: i32) -> (i32, i32, i32) {
    %c0_i32 = arith.constant 0 : i32
    %c0_i32_0 = arith.constant 0 : i32
    %c0_i32_1 = arith.constant 0 : i32
    return %arg0, %c0_i32, %c0_i32_0 : i32, i32, i32
  }
}

</mosaic_0001>

<llo_original>
// kernel: encoder_forward.5
$region0: #{encoder_forward.5}
  #allocation0 [shape = 'u32[]', space=smem, size = 0x4, offset = 0x4, fixed_abs, tag = 'smem constant byte address 0x4 - core index']
  #allocation1 [shape = 'u32[72,128]{1,0:T(1,128)}', space=vmem, size = 0x9000, scoped, tag = 'internal scratch']
  %s0 = inlined_call_operand.vmem [shape: f32[2,3,1520], index: 0, kind: input, shape index: {}]
  %s1 = inlined_call_operand.vmem [shape: bf16[8,147], index: 1, kind: input, shape index: {}]
  %s2 = inlined_call_operand.vmem [shape: f32[8,1], index: 2, kind: input, shape index: {}]
  %s3 = inlined_call_operand.vmem [shape: f32[8,1], index: 3, kind: input, shape index: {}]
  %s4 = inlined_call_operand.vmem [shape: f32[2,8,304], index: 4, kind: output, shape index: {}]
  %s5 = sld [smem:[#allocation0]]
  $region49: #{encoder_forward.5} parent=0
    _
  %s7 = ssub.s32 1, %s5
  %s8 = scalar_select 0, %s7, %s5
  loop: start=0, step=1, limit=4
  $region2: #{encoder_forward.5} parent=0 // loop_pre_header
    _
  $region3: #{encoder_forward.5} parent=0 // loop_header
    %s10 = sphi 0, %s14
    %p11 = scmp.ge.s32.totalorder %s10, 4
    %s20 = sphi 0, %s22
    %s23 = sphi 0, %s20
    %s24 = sphi 0, %s23
    %s40 = sphi 0, %s24
    %s44 = sphi 0, %s44
    %s46 = sphi 0, %s44
    %s47 = sphi 0, %s46
    %s61 = sphi 0, %s47
    %s65 = sphi 0, %s65
    %s67 = sphi 0, %s65
    %s68 = sphi 0, %s67
    %s82 = sphi 0, %s68
    %s86 = sphi 0, %s86
    %s88 = sphi 0, %s86
    %s89 = sphi 0, %s88
    %s103 = sphi 0, %s89
    %s109 = sphi 0, %s111
    %s112 = sphi 0, %s109
    %s113 = sphi 0, %s112
    %s129 = sphi 0, %s113
  $region4: #{encoder_forward.5} parent=0 // loop_header_branch
    %13 = sbr.rel (%p11) target = $region8
  $region5: #{encoder_forward.5} parent=0 // loop_body
    %s15 = ssub.s32 %s10, 1
    %s16 = ssub.s32 %s10, 2
    %s17 = sadd.s32 %s10, 1
    %s18 = ssub.s32 %s10, %s17
    %p19 = scmp.eq.s32.totalorder %s18, 0
    %s21 = sadd.s32 %s20, 1
    %s22 = scalar_select %p19, %s20, %s21
    %p25 = pneg %p19
    %p26 = scmp.eq.s32.totalorder %s10, 1
    %p27 = por %p25, %p26
    %p28 = scmp.ne.s32.totalorder %s20, %s23
    %p29 = scmp.eq.s32.totalorder %s10, 0
    %p30 = por %p28, %p29
    %p31 = scmp.ne.s32.totalorder %s20, %s23
    %p32 = scmp.eq.s32.totalorder %s15, 1
    %p33 = por %p31, %p32
    %p34 = scmp.ne.s32.totalorder %s23, %s24
    %p35 = scmp.eq.s32.totalorder %s15, 0
    %p36 = por %p34, %p35
    %p37 = scmp.ne.s32.totalorder %s23, %s24
    %p38 = scmp.eq.s32.totalorder %s16, 1
    %p39 = por %p37, %p38
    %p41 = scmp.ne.s32.totalorder %s24, %s40
    %p42 = scmp.eq.s32.totalorder %s16, 0
    %p43 = por %p41, %p42
    %s45 = sadd.s32 %s44, 1
    %p48 = scmp.eq.s32.totalorder %s10, 1
    %p49 = scmp.ne.s32.totalorder %s44, %s46
    %p50 = scmp.eq.s32.totalorder %s10, 0
    %p51 = por %p49, %p50
    %p52 = scmp.ne.s32.totalorder %s44, %s46
    %p53 = scmp.eq.s32.totalorder %s15, 1
    %p54 = por %p52, %p53
    %p55 = scmp.ne.s32.totalorder %s46, %s47
    %p56 = scmp.eq.s32.totalorder %s15, 0
    %p57 = por %p55, %p56
    %p58 = scmp.ne.s32.totalorder %s46, %s47
    %p59 = scmp.eq.s32.totalorder %s16, 1
    %p60 = por %p58, %p59
    %p62 = scmp.ne.s32.totalorder %s47, %s61
    %p63 = scmp.eq.s32.totalorder %s16, 0
    %p64 = por %p62, %p63
    %s66 = sadd.s32 %s65, 1
    %p69 = scmp.eq.s32.totalorder %s10, 1
    %p70 = scmp.ne.s32.totalorder %s65, %s67
    %p71 = scmp.eq.s32.totalorder %s10, 0
    %p72 = por %p70, %p71
    %p73 = scmp.ne.s32.totalorder %s65, %s67
    %p74 = scmp.eq.s32.totalorder %s15, 1
    %p75 = por %p73, %p74
    %p76 = scmp.ne.s32.totalorder %s67, %s68
    %p77 = scmp.eq.s32.totalorder %s15, 0
    %p78 = por %p76, %p77
    %p79 = scmp.ne.s32.totalorder %s67, %s68
    %p80 = scmp.eq.s32.totalorder %s16, 1
    %p81 = por %p79, %p80
    %p83 = scmp.ne.s32.totalorder %s68, %s82
    %p84 = scmp.eq.s32.totalorder %s16, 0
    %p85 = por %p83, %p84
    %s87 = sadd.s32 %s86, 1
    %p90 = scmp.eq.s32.totalorder %s10, 1
    %p91 = scmp.ne.s32.totalorder %s86, %s88
    %p92 = scmp.eq.s32.totalorder %s10, 0
    %p93 = por %p91, %p92
    %p94 = scmp.ne.s32.totalorder %s86, %s88
    %p95 = scmp.eq.s32.totalorder %s15, 1
    %p96 = por %p94, %p95
    %p97 = scmp.ne.s32.totalorder %s88, %s89
    %p98 = scmp.eq.s32.totalorder %s15, 0
    %p99 = por %p97, %p98
    %p100 = scmp.ne.s32.totalorder %s88, %s89
    %p101 = scmp.eq.s32.totalorder %s16, 1
    %p102 = por %p100, %p101
    %p104 = scmp.ne.s32.totalorder %s89, %s103
    %p105 = scmp.eq.s32.totalorder %s16, 0
    %p106 = por %p104, %p105
    %s107 = ssub.s32 %s10, %s17
    %p108 = scmp.eq.s32.totalorder %s107, 0
    %s110 = sadd.s32 %s109, 1
    %s111 = scalar_select %p108, %s109, %s110
    %p114 = pneg %p108
    %p115 = scmp.eq.s32.totalorder %s10, 1
    %p116 = por %p114, %p115
    %p117 = scmp.ne.s32.totalorder %s109, %s112
    %p118 = scmp.eq.s32.totalorder %s10, 0
    %p119 = por %p117, %p118
    %p120 = scmp.ne.s32.totalorder %s109, %s112
    %p121 = scmp.eq.s32.totalorder %s15, 1
    %p122 = por %p120, %p121
    %p123 = scmp.ne.s32.totalorder %s112, %s113
    %p124 = scmp.eq.s32.totalorder %s15, 0
    %p125 = por %p123, %p124
    %p126 = scmp.ne.s32.totalorder %s112, %s113
    %p127 = scmp.eq.s32.totalorder %s16, 1
    %p128 = por %p126, %p127
    %p130 = scmp.ne.s32.totalorder %s113, %s129
    %p131 = scmp.eq.s32.totalorder %s16, 0
    %p132 = por %p130, %p131
    %p133 = scmp.le.s32.totalorder 1, %s10
    %p134 = scmp.lt.s32.totalorder %s10, 3
    %p135 = pnand %p133, %p134
    %p136 = pneg %p135
    // Predicated region
    $region9: #{encoder_forward.5} parent=5 // pred_check
      _
    $region10: #{encoder_forward.5} parent=5 // pred_check_branch
      %138 = sbr.rel (%p135) target = $region12
    $region11: #{encoder_forward.5} parent=5 // pred_region
      %s139 = ssub.s32 %s10, 1
      // Predicated region
      $region13: #{encoder_forward.5} parent=11 // pred_check
        %p140 = pneg %p57
      $region14: #{encoder_forward.5} parent=11 // pred_check_branch
        %142 = sbr.rel (%p140) target = $region16
      $region15: #{encoder_forward.5} parent=11 // pred_region
        _
      $region16: #{encoder_forward.5} parent=11 // pred_fallthru
        _
      // Predicated region
      $region17: #{encoder_forward.5} parent=11 // pred_check
        %p143 = pneg %p78
      $region18: #{encoder_forward.5} parent=11 // pred_check_branch
        %145 = sbr.rel (%p143) target = $region20
      $region19: #{encoder_forward.5} parent=11 // pred_region
        _
      $region20: #{encoder_forward.5} parent=11 // pred_fallthru
        _
      // Predicated region
      $region21: #{encoder_forward.5} parent=11 // pred_check
        %p146 = pneg %p99
      $region22: #{encoder_forward.5} parent=11 // pred_check_branch
        %148 = sbr.rel (%p146) target = $region24
      $region23: #{encoder_forward.5} parent=11 // pred_region
        _
      $region24: #{encoder_forward.5} parent=11 // pred_fallthru
        _
    $region12: #{encoder_forward.5} parent=5 // pred_fallthru
      _
    %p149 = scmp.lt.s32.totalorder %s10, 2
    // Predicated region
    $region25: #{encoder_forward.5} parent=5 // pred_check
      %p150 = pneg %p149
    $region26: #{encoder_forward.5} parent=5 // pred_check_branch
      %152 = sbr.rel (%p150) target = $region28
    $region27: #{encoder_forward.5} parent=5 // pred_region
      // Predicated region
      $region29: #{encoder_forward.5} parent=27 // pred_check
        %p153 = pneg %p30
      $region30: #{encoder_forward.5} parent=27 // pred_check_branch
        %155 = sbr.rel (%p153) target = $region32
      $region31: #{encoder_forward.5} parent=27 // pred_region
        %p156 = scmp.lt.s32.totalorder %s10, 1
        %s157 = scalar_select %p156, %s10, 1
        %s158 = smul.addr %s157, 12
        %s159 = smul.addr %s158, 4
        %s160 = scalar_lea.vmem %s0, %s159
      $region32: #{encoder_forward.5} parent=27 // pred_fallthru
        _
    $region28: #{encoder_forward.5} parent=5 // pred_fallthru
      _
    %p161 = scmp.le.s32.totalorder 1, %s10
    %p162 = scmp.lt.s32.totalorder %s10, 3
    %p163 = pnand %p161, %p162
    %p164 = pneg %p163
    // Predicated region
    $region33: #{encoder_forward.5} parent=5 // pred_check
      _
    $region34: #{encoder_forward.5} parent=5 // pred_check_branch
      %166 = sbr.rel (%p163) target = $region36
    $region35: #{encoder_forward.5} parent=5 // pred_region
      %s167 = ssub.s32 %s10, 1
      %p168 = scmp.lt.s32.totalorder %s15, 1
      %s169 = scalar_select %p168, %s15, 1
      %s170 = smul.addr %s169, 12
      %s171 = smul.addr %s170, 4
      %s172 = scalar_lea.vmem %s0, %s171
      %p173 = pneg %p36
      %p174 = pneg %p33
      %p175 = pneg %p57
      %p176 = pneg %p54
      %p177 = pneg %p78
      %p178 = pneg %p75
      %p179 = pneg %p99
      %p180 = pneg %p96
      %p181 = pneg %p125
      %p182 = pneg %p122
      %p183 = scmp.lt.s32.totalorder %s15, 1
      %s184 = scalar_select %p183, %s15, 1
      %s185 = smul.addr %s184, 3
      %s186 = smul.addr %s185, 8
      %s187 = scalar_lea.vmem %s4, %s186
      %p188 = scmp.lt.s32.totalorder %s15, 1
      %s189 = scalar_select %p188, %s15, 1
      %s190 = smul.addr %s189, 12
      %s191 = smul.addr %s190, 4
      %s192 = scalar_lea.vmem %s0, %s191
      %p193 = scmp.lt.s32.totalorder %s15, 1
      %s194 = scalar_select %p193, %s15, 1
      %s195 = smul.addr %s194, 3
      %s196 = smul.addr %s195, 8
      %s197 = scalar_lea.vmem %s4, %s196
      %v199 = vld [vmem:[%s192] sm:$0x77]
      %v200 = vld [vmem:[%s192 + $0x8] sm:$0x77]
      %v201 = vld [vmem:[%s192 + $0x10] sm:$0x77]
      %v202 = vld [vmem:[%s192 + $0x18] sm:$0x77]
      %v203 = vld [vmem:[%s192 + $0x20] sm:$0x77]
      %v204 = vld [vmem:[%s192 + $0x28] sm:$0x77]
      %207 = vst [vmem:[#allocation1] ss:$2 sm:$0xff] %v199
      %s208 = scalar_lea.vmem [#allocation1], 16
      %209 = vst [vmem:[%s208] ss:$2 sm:$0xff] %v200
      %v210 = vld.sshfl [vmem:[#allocation1] sm:$0xff pattern:$0x75316420]
      %v211 = vld.sshfl [vmem:[#allocation1 + $0x8] sm:$0xff pattern:$0x75316420]
      %v212 = vld.sshfl [vmem:[#allocation1 + $0x10] sm:$0xff pattern:$0x75316420]
      %217 = vst [vmem:[#allocation1] ss:$2 sm:$0xff] %v200
      %s218 = scalar_lea.vmem [#allocation1], 16
      %219 = vst [vmem:[%s218] ss:$2 sm:$0xff] %v201
      %v220 = vld.sshfl [vmem:[#allocation1] sm:$0xff pattern:$0x75316420]
      %v221 = vld.sshfl [vmem:[#allocation1 + $0x8] sm:$0xff pattern:$0x75316420]
      %v222 = vld.sshfl [vmem:[#allocation1 + $0x10] sm:$0xff pattern:$0x75316420]
      %v223 = vld.sshfl [vmem:[#allocation1 + $0x18] sm:$0xff pattern:$0x75316420]
      %v224 = vrot.slane %v220, 5
      %v225 = vrot.slane %v221, 5
      %v226 = vrot.slane %v222, 5
      %v227 = vrot.slane %v223, 5
      %228 = vrot.lane.b32.xlu0 %v224, 4
      %v229 = vpop.permute.xlu0 %228
      %230 = vrot.lane.b32.xlu0 %v225, 4
      %v231 = vpop.permute.xlu0 %230
      %232 = vrot.lane.b32.xlu0 %v226, 4
      %v233 = vpop.permute.xlu0 %232
      %234 = vrot.lane.b32.xlu0 %v227, 4
      %v235 = vpop.permute.xlu0 %234
      %vm236 = vcmask 31744
      %v237 = vsel %vm236, %v229, %v231
      %v238 = vsel %vm236, %v231, %v233
      %v239 = vsel %vm236, %v233, %v235
      %243 = vst [vmem:[#allocation1] ss:$2 sm:$0xff] %v199
      %s244 = scalar_lea.vmem [#allocation1], 16
      %245 = vst [vmem:[%s244] ss:$2 sm:$0xff] %v200
      %v246 = vld.sshfl [vmem:[#allocation1] sm:$0xff pattern:$0x75316420]
      %v247 = vld.sshfl [vmem:[#allocation1 + $0x8] sm:$0xff pattern:$0x75316420]
      %v248 = vld.sshfl [vmem:[#allocation1 + $0x10] sm:$0xff pattern:$0x75316420]
      %v249 = vrot.slane %v246, 2
      %v250 = vrot.slane %v247, 2
      %v251 = vrot.slane %v248, 2
      %252 = vrot.lane.b32.xlu0 %v249, 127
      %v253 = vpop.permute.xlu0 %252
      %254 = vrot.lane.b32.xlu0 %v250, 127
      %v255 = vpop.permute.xlu0 %254
      %256 = vrot.lane.b32.xlu0 %v251, 127
      %v257 = vpop.permute.xlu0 %256
      %vm258 = vcmask 1039360
      %v259 = vsel %vm258, %v253, %v255
      %v260 = vsel %vm258, %v255, %v257
      %264 = vst [vmem:[#allocation1] ss:$2 sm:$0xff] %v200
      %s265 = scalar_lea.vmem [#allocation1], 16
      %266 = vst [vmem:[%s265] ss:$2 sm:$0xff] %v201
      %v267 = vld.sshfl [vmem:[#allocation1] sm:$0xff pattern:$0x75316420]
      %v268 = vld.sshfl [vmem:[#allocation1 + $0x8] sm:$0xff pattern:$0x75316420]
      %v269 = vld.sshfl [vmem:[#allocation1 + $0x10] sm:$0xff pattern:$0x75316420]
      %v270 = vld.sshfl [vmem:[#allocation1 + $0x18] sm:$0xff pattern:$0x75316420]
      %v271 = vrot.slane %v267, 7
      %v272 = vrot.slane %v268, 7
      %v273 = vrot.slane %v269, 7
      %v274 = vrot.slane %v270, 7
      %275 = vrot.lane.b32.xlu0 %v271, 3
      %v276 = vpop.permute.xlu0 %275
      %277 = vrot.lane.b32.xlu0 %v272, 3
      %v278 = vpop.permute.xlu0 %277
      %279 = vrot.lane.b32.xlu0 %v273, 3
      %v280 = vpop.permute.xlu0 %279
      %281 = vrot.lane.b32.xlu0 %v274, 3
      %v282 = vpop.permute.xlu0 %281
      %vm283 = vcmask 23552
      %v284 = vsel %vm283, %v276, %v278
      %v285 = vsel %vm283, %v278, %v280
      %v286 = vsel %vm283, %v280, %v282
      %s290 = scalar_lea.vmem [#allocation1], 1
      %291 = vst [vmem:[%s290] ss:$2 sm:$0xff] %v199
      %s292 = scalar_lea.vmem [#allocation1], 17
      %293 = vst [vmem:[%s292] ss:$2 sm:$0xff] %v200
      %v294 = vld.sshfl [vmem:[#allocation1] sm:$0xff pattern:$0x75316420]
      %v295 = vld.sshfl [vmem:[#allocation1 + $0x8] sm:$0xff pattern:$0x75316420]
      %v296 = vld.sshfl [vmem:[#allocation1 + $0x10] sm:$0xff pattern:$0x75316420]
      %297 = vrot.lane.b32.xlu0 %v294, 126
      %v298 = vpop.permute.xlu0 %297
      %299 = vrot.lane.b32.xlu0 %v295, 126
      %v300 = vpop.permute.xlu0 %299
      %301 = vrot.lane.b32.xlu0 %v296, 126
      %v302 = vpop.permute.xlu0 %301
      %vm303 = vcmask 1031168
      %v304 = vsel %vm303, %v298, %v300
      %v305 = vsel %vm303, %v300, %v302
      %309 = vst [vmem:[#allocation1] ss:$2 sm:$0xff] %v200
      %s310 = scalar_lea.vmem [#allocation1], 16
      %311 = vst [vmem:[%s310] ss:$2 sm:$0xff] %v201
      %v312 = vld.sshfl [vmem:[#allocation1] sm:$0xff pattern:$0x75316420]
      %v313 = vld.sshfl [vmem:[#allocation1 + $0x8] sm:$0xff pattern:$0x75316420]
      %v314 = vld.sshfl [vmem:[#allocation1 + $0x10] sm:$0xff pattern:$0x75316420]
      %v315 = vld.sshfl [vmem:[#allocation1 + $0x18] sm:$0xff pattern:$0x75316420]
      %v316 = vrot.slane %v312, 1
      %v317 = vrot.slane %v313, 1
      %v318 = vrot.slane %v314, 1
      %v319 = vrot.slane %v315, 1
      %320 = vrot.lane.b32.xlu0 %v316, 2
      %v321 = vpop.permute.xlu0 %320
      %322 = vrot.lane.b32.xlu0 %v317, 2
      %v323 = vpop.permute.xlu0 %322
      %324 = vrot.lane.b32.xlu0 %v318, 2
      %v325 = vpop.permute.xlu0 %324
      %326 = vrot.lane.b32.xlu0 %v319, 2
      %v327 = vpop.permute.xlu0 %326
      %vm328 = vcmask 15360
      %v329 = vsel %vm328, %v321, %v323
      %v330 = vsel %vm328, %v323, %v325
      %v331 = vsel %vm328, %v325, %v327
      %335 = vst [vmem:[#allocation1] ss:$2 sm:$0xff] %v199
      %s336 = scalar_lea.vmem [#allocation1], 16
      %337 = vst [vmem:[%s336] ss:$2 sm:$0xff] %v200
      %v338 = vld.sshfl [vmem:[#allocation1] sm:$0xff pattern:$0x75316420]
      %v339 = vld.sshfl [vmem:[#allocation1 + $0x8] sm:$0xff pattern:$0x75316420]
      %v340 = vld.sshfl [vmem:[#allocation1 + $0x10] sm:$0xff pattern:$0x75316420]
      %v341 = vrot.slane %v338, 6
      %v342 = vrot.slane %v339, 6
      %v343 = vrot.slane %v340, 6
      %344 = vrot.lane.b32.xlu0 %v341, 125
      %v345 = vpop.permute.xlu0 %344
      %346 = vrot.lane.b32.xlu0 %v342, 125
      %v347 = vpop.permute.xlu0 %346
      %348 = vrot.lane.b32.xlu0 %v343, 125
      %v349 = vpop.permute.xlu0 %348
      %vm350 = vcmask 1022976
      %v351 = vsel %vm350, %v345, %v347
      %v352 = vsel %vm350, %v347, %v349
      %358 = vst [vmem:[#allocation1] ss:$2 sm:$0xff] %v201
      %s359 = scalar_lea.vmem [#allocation1], 16
      %360 = vst [vmem:[%s359] ss:$2 sm:$0xff] %v202
      %s361 = scalar_lea.vmem [#allocation1], 32
      %362 = vst [vmem:[%s361] ss:$2 sm:$0xff] %v203
      %v363 = vld.sshfl [vmem:[#allocation1 + $0x8] sm:$0xff pattern:$0x75316420]
      %v364 = vld.sshfl [vmem:[#allocation1 + $0x10] sm:$0xff pattern:$0x75316420]
      %v365 = vld.sshfl [vmem:[#allocation1 + $0x18] sm:$0xff pattern:$0x75316420]
      %v366 = vld.sshfl [vmem:[#allocation1 + $0x20] sm:$0xff pattern:$0x75316420]
      %v367 = vrot.slane %v363, 3
      %v368 = vrot.slane %v364, 3
      %v369 = vrot.slane %v365, 3
      %v370 = vrot.slane %v366, 3
      %371 = vrot.lane.b32.xlu0 %v367, 8
      %v372 = vpop.permute.xlu0 %371
      %373 = vrot.lane.b32.xlu0 %v368, 8
      %v374 = vpop.permute.xlu0 %373
      %375 = vrot.lane.b32.xlu0 %v369, 8
      %v376 = vpop.permute.xlu0 %375
      %377 = vrot.lane.b32.xlu0 %v370, 8
      %v378 = vpop.permute.xlu0 %377
      %vm379 = vcmask 64512
      %v380 = vsel %vm379, %v372, %v374
      %v381 = vsel %vm379, %v374, %v376
      %v382 = vsel %vm379, %v376, %v378
      %387 = vst [vmem:[#allocation1] ss:$2 sm:$0xff] %v203
      %s388 = scalar_lea.vmem [#allocation1], 16
      %389 = vst [vmem:[%s388] ss:$2 sm:$0xff] %v204
      %v390 = vld.sshfl [vmem:[#allocation1] sm:$0xff pattern:$0x75316420]
      %v391 = vld.sshfl [vmem:[#allocation1 + $0x8] sm:$0xff pattern:$0x75316420]
      %v392 = vld.sshfl [vmem:[#allocation1 + $0x10] sm:$0xff pattern:$0x75316420]
      %v393 = vld.sshfl [vmem:[#allocation1 + $0x18] sm:$0xff pattern:$0x75316420]
      %394 = vrot.lane.b32.xlu0 %v390, 12
      %v395 = vpop.permute.xlu0 %394
      %396 = vrot.lane.b32.xlu0 %v391, 12
      %v397 = vpop.permute.xlu0 %396
      %398 = vrot.lane.b32.xlu0 %v392, 12
      %v399 = vpop.permute.xlu0 %398
      %400 = vrot.lane.b32.xlu0 %v393, 12
      %v401 = vpop.permute.xlu0 %400
      %vm402 = vcmask 97280
      %v403 = vsel %vm402, %v395, %v397
      %v404 = vsel %vm402, %v397, %v399
      %v405 = vsel %vm402, %v399, %v401
      %409 = vst [vmem:[#allocation1] ss:$2 sm:$0xff] %v201
      %s410 = scalar_lea.vmem [#allocation1], 16
      %411 = vst [vmem:[%s410] ss:$2 sm:$0xff] %v202
      %s412 = scalar_lea.vmem [#allocation1], 32
      %413 = vst [vmem:[%s412] ss:$2 sm:$0xff] %v203
      %v414 = vld.sshfl [vmem:[#allocation1 + $0x8] sm:$0xff pattern:$0x75316420]
      %v415 = vld.sshfl [vmem:[#allocation1 + $0x10] sm:$0xff pattern:$0x75316420]
      %v416 = vld.sshfl [vmem:[#allocation1 + $0x18] sm:$0xff pattern:$0x75316420]
      %v417 = vld.sshfl [vmem:[#allocation1 + $0x20] sm:$0xff pattern:$0x75316420]
      %v418 = vrot.slane %v414, 5
      %v419 = vrot.slane %v415, 5
      %v420 = vrot.slane %v416, 5
      %v421 = vrot.slane %v417, 5
      %422 = vrot.lane.b32.xlu0 %v418, 7
      %v423 = vpop.permute.xlu0 %422
      %424 = vrot.lane.b32.xlu0 %v419, 7
      %v425 = vpop.permute.xlu0 %424
      %426 = vrot.lane.b32.xlu0 %v420, 7
      %v427 = vpop.permute.xlu0 %426
      %428 = vrot.lane.b32.xlu0 %v421, 7
      %v429 = vpop.permute.xlu0 %428
      %vm430 = vcmask 56320
      %v431 = vsel %vm430, %v423, %v425
      %v432 = vsel %vm430, %v425, %v427
      %v433 = vsel %vm430, %v427, %v429
      %437 = vst [vmem:[#allocation1] ss:$2 sm:$0xff] %v203
      %s438 = scalar_lea.vmem [#allocation1], 16
      %439 = vst [vmem:[%s438] ss:$2 sm:$0xff] %v204
      %v440 = vld.sshfl [vmem:[#allocation1] sm:$0xff pattern:$0x75316420]
      %v441 = vld.sshfl [vmem:[#allocation1 + $0x8] sm:$0xff pattern:$0x75316420]
      %v442 = vld.sshfl [vmem:[#allocation1 + $0x10] sm:$0xff pattern:$0x75316420]
      %v443 = vld.sshfl [vmem:[#allocation1 + $0x18] sm:$0xff pattern:$0x75316420]
      %v444 = vrot.slane %v440, 2
      %v445 = vrot.slane %v441, 2
      %v446 = vrot.slane %v442, 2
      %v447 = vrot.slane %v443, 2
      %448 = vrot.lane.b32.xlu0 %v444, 11
      %v449 = vpop.permute.xlu0 %448
      %450 = vrot.lane.b32.xlu0 %v445, 11
      %v451 = vpop.permute.xlu0 %450
      %452 = vrot.lane.b32.xlu0 %v446, 11
      %v453 = vpop.permute.xlu0 %452
      %454 = vrot.lane.b32.xlu0 %v447, 11
      %v455 = vpop.permute.xlu0 %454
      %vm456 = vcmask 89088
      %v457 = vsel %vm456, %v449, %v451
      %v458 = vsel %vm456, %v451, %v453
      %v459 = vsel %vm456, %v453, %v455
      %463 = vst [vmem:[#allocation1] ss:$2 sm:$0xff] %v201
      %s464 = scalar_lea.vmem [#allocation1], 16
      %465 = vst [vmem:[%s464] ss:$2 sm:$0xff] %v202
      %s466 = scalar_lea.vmem [#allocation1], 32
      %467 = vst [vmem:[%s466] ss:$2 sm:$0xff] %v203
      %v468 = vld.sshfl [vmem:[#allocation1 + $0x8] sm:$0xff pattern:$0x75316420]
      %v469 = vld.sshfl [vmem:[#allocation1 + $0x10] sm:$0xff pattern:$0x75316420]
      %v470 = vld.sshfl [vmem:[#allocation1 + $0x18] sm:$0xff pattern:$0x75316420]
      %v471 = vld.sshfl [vmem:[#allocation1 + $0x20] sm:$0xff pattern:$0x75316420]
      %v472 = vrot.slane %v468, 7
      %v473 = vrot.slane %v469, 7
      %v474 = vrot.slane %v470, 7
      %v475 = vrot.slane %v471, 7
      %476 = vrot.lane.b32.xlu0 %v472, 6
      %v477 = vpop.permute.xlu0 %476
      %478 = vrot.lane.b32.xlu0 %v473, 6
      %v479 = vpop.permute.xlu0 %478
      %480 = vrot.lane.b32.xlu0 %v474, 6
      %v481 = vpop.permute.xlu0 %480
      %482 = vrot.lane.b32.xlu0 %v475, 6
      %v483 = vpop.permute.xlu0 %482
      %vm484 = vcmask 48128
      %v485 = vsel %vm484, %v477, %v479
      %v486 = vsel %vm484, %v479, %v481
      %v487 = vsel %vm484, %v481, %v483
      %s491 = scalar_lea.vmem [#allocation1], 1
      %492 = vst [vmem:[%s491] ss:$2 sm:$0xff] %v203
      %s493 = scalar_lea.vmem [#allocation1], 17
      %494 = vst [vmem:[%s493] ss:$2 sm:$0xff] %v204
      %v495 = vld.sshfl [vmem:[#allocation1] sm:$0xff pattern:$0x75316420]
      %v496 = vld.sshfl [vmem:[#allocation1 + $0x8] sm:$0xff pattern:$0x75316420]
      %v497 = vld.sshfl [vmem:[#allocation1 + $0x10] sm:$0xff pattern:$0x75316420]
      %v498 = vld.sshfl [vmem:[#allocation1 + $0x18] sm:$0xff pattern:$0x75316420]
      %499 = vrot.lane.b32.xlu0 %v495, 10
      %v500 = vpop.permute.xlu0 %499
      %501 = vrot.lane.b32.xlu0 %v496, 10
      %v502 = vpop.permute.xlu0 %501
      %503 = vrot.lane.b32.xlu0 %v497, 10
      %v504 = vpop.permute.xlu0 %503
      %505 = vrot.lane.b32.xlu0 %v498, 10
      %v506 = vpop.permute.xlu0 %505
      %vm507 = vcmask 80896
      %v508 = vsel %vm507, %v500, %v502
      %v509 = vsel %vm507, %v502, %v504
      %v510 = vsel %vm507, %v504, %v506
      %514 = vst [vmem:[#allocation1] ss:$2 sm:$0xff] %v201
      %s515 = scalar_lea.vmem [#allocation1], 16
      %516 = vst [vmem:[%s515] ss:$2 sm:$0xff] %v202
      %s517 = scalar_lea.vmem [#allocation1], 32
      %518 = vst [vmem:[%s517] ss:$2 sm:$0xff] %v203
      %v519 = vld.sshfl [vmem:[#allocation1 + $0x8] sm:$0xff pattern:$0x75316420]
      %v520 = vld.sshfl [vmem:[#allocation1 + $0x10] sm:$0xff pattern:$0x75316420]
      %v521 = vld.sshfl [vmem:[#allocation1 + $0x18] sm:$0xff pattern:$0x75316420]
      %v522 = vld.sshfl [vmem:[#allocation1 + $0x20] sm:$0xff pattern:$0x75316420]
      %v523 = vrot.slane %v519, 1
      %v524 = vrot.slane %v520, 1
      %v525 = vrot.slane %v521, 1
      %v526 = vrot.slane %v522, 1
      %527 = vrot.lane.b32.xlu0 %v523, 5
      %v528 = vpop.permute.xlu0 %527
      %529 = vrot.lane.b32.xlu0 %v524, 5
      %v530 = vpop.permute.xlu0 %529
      %531 = vrot.lane.b32.xlu0 %v525, 5
      %v532 = vpop.permute.xlu0 %531
      %533 = vrot.lane.b32.xlu0 %v526, 5
      %v534 = vpop.permute.xlu0 %533
      %vm535 = vcmask 39936
      %v536 = vsel %vm535, %v528, %v530
      %v537 = vsel %vm535, %v530, %v532
      %v538 = vsel %vm535, %v532, %v534
      %542 = vst [vmem:[#allocation1] ss:$2 sm:$0xff] %v199
      %s543 = scalar_lea.vmem [#allocation1], 16
      %544 = vst [vmem:[%s543] ss:$2 sm:$0xff] %v200
      %v545 = vld.sshfl [vmem:[#allocation1] sm:$0xff pattern:$0x75316420]
      %v546 = vld.sshfl [vmem:[#allocation1 + $0x8] sm:$0xff pattern:$0x75316420]
      %v547 = vld.sshfl [vmem:[#allocation1 + $0x10] sm:$0xff pattern:$0x75316420]
      %v548 = vrot.slane %v545, 6
      %v549 = vrot.slane %v546, 6
      %v550 = vrot.slane %v547, 6
      %551 = vrot.lane.b32.xlu0 %v548, 109
      %v552 = vpop.permute.xlu0 %551
      %553 = vrot.lane.b32.xlu0 %v549, 109
      %v554 = vpop.permute.xlu0 %553
      %555 = vrot.lane.b32.xlu0 %v550, 109
      %v556 = vpop.permute.xlu0 %555
      %vm557 = vcmask 891904
      %v558 = vsel %vm557, %v552, %v554
      %v559 = vsel %vm557, %v554, %v556
      %563 = vst [vmem:[#allocation1] ss:$2 sm:$0xff] %v200
      %s564 = scalar_lea.vmem [#allocation1], 16
      %565 = vst [vmem:[%s564] ss:$2 sm:$0xff] %v201
      %v566 = vld.sshfl [vmem:[#allocation1 + $0x8] sm:$0xff pattern:$0x75316420]
      %v567 = vld.sshfl [vmem:[#allocation1 + $0x10] sm:$0xff pattern:$0x75316420]
      %v568 = vld.sshfl [vmem:[#allocation1 + $0x18] sm:$0xff pattern:$0x75316420]
      %v569 = vrot.slane %v566, 3
      %v570 = vrot.slane %v567, 3
      %v571 = vrot.slane %v568, 3
      %572 = vrot.lane.b32.xlu0 %v569, 113
      %v573 = vpop.permute.xlu0 %572
      %574 = vrot.lane.b32.xlu0 %v570, 113
      %v575 = vpop.permute.xlu0 %574
      %576 = vrot.lane.b32.xlu0 %v571, 113
      %v577 = vpop.permute.xlu0 %576
      %vm578 = vcmask 924672
      %v579 = vsel %vm578, %v573, %v575
      %v580 = vsel %vm578, %v575, %v577
      %vm584 = vcmask 1042432
      %v585 = vsel %vm584, %v210, %v237
      %v586 = vsel %vm584, %v211, %v238
      %v587 = vsel %vm584, %v212, %v239
      %vm588 = vcmask 1045504
      %v589 = vsel %vm588, %v585, %v259
      %v590 = vsel %vm588, %v586, %v260
      %v591 = vsel %vm588, %v587, %v257
      %vm592 = vcmask 1040384
      %v593 = vsel %vm592, %v259, %v284
      %v594 = vsel %vm592, %v260, %v285
      %v595 = vsel %vm592, %v257, %v286
      %vm596 = vcmask 1043456
      %v597 = vsel %vm596, %v593, %v304
      %v598 = vsel %vm596, %v594, %v305
      %v599 = vsel %vm596, %v595, %v302
      %vm600 = vcmask 1046528
      %v601 = vsel %vm600, %v597, %v329
      %v602 = vsel %vm600, %v598, %v330
      %v603 = vsel %vm600, %v599, %v331
      %vm604 = vcmask 1041408
      %v605 = vsel %vm604, %v329, %v351
      %v606 = vsel %vm604, %v330, %v352
      %v607 = vsel %vm604, %v331, %v349
      %vm608 = vcmask 1044480
      %v609 = vsel %vm608, %v605, %v380
      %v610 = vsel %vm608, %v606, %v381
      %v611 = vsel %vm608, %v607, %v382
      %v612 = vsel %vm584, %v403, %v431
      %v613 = vsel %vm584, %v404, %v432
      %v614 = vsel %vm584, %v405, %v433
      %v615 = vsel %vm588, %v612, %v457
      %v616 = vsel %vm588, %v613, %v458
      %v617 = vsel %vm588, %v614, %v459
      %v618 = vsel %vm592, %v457, %v485
      %v619 = vsel %vm592, %v458, %v486
      %v620 = vsel %vm592, %v459, %v487
      %v621 = vsel %vm596, %v618, %v508
      %v622 = vsel %vm596, %v619, %v509
      %v623 = vsel %vm596, %v620, %v510
      %v624 = vsel %vm600, %v621, %v536
      %v625 = vsel %vm600, %v622, %v537
      %v626 = vsel %vm600, %v623, %v538
      %v627 = vsel %vm604, %v536, %v558
      %v628 = vsel %vm604, %v537, %v559
      %v629 = vsel %vm604, %v538, %v556
      %v630 = vsel %vm608, %v627, %v579
      %v631 = vsel %vm608, %v628, %v580
      %v632 = vsel %vm608, %v629, %v577
      %633 = vst [vmem:[#allocation1] ss:$2 sm:$0xff] %v199
      %s634 = scalar_lea.vmem [#allocation1], 16
      %635 = vst [vmem:[%s634] ss:$2 sm:$0xff] %v200
      %v636 = vld.sshfl [vmem:[#allocation1] sm:$0xff pattern:$0x75316420]
      %v637 = vld.sshfl [vmem:[#allocation1 + $0x8] sm:$0xff pattern:$0x75316420]
      %v638 = vld.sshfl [vmem:[#allocation1 + $0x10] sm:$0xff pattern:$0x75316420]
      %642 = vst [vmem:[#allocation1] ss:$2 sm:$0xff] %v200
      %s643 = scalar_lea.vmem [#allocation1], 16
      %644 = vst [vmem:[%s643] ss:$2 sm:$0xff] %v201
      %v645 = vld.sshfl [vmem:[#allocation1 + $0x8] sm:$0xff pattern:$0x75316420]
      %v646 = vld.sshfl [vmem:[#allocation1 + $0x10] sm:$0xff pattern:$0x75316420]
      %v647 = vld.sshfl [vmem:[#allocation1 + $0x18] sm:$0xff pattern:$0x75316420]
      %v648 = vrot.slane %v645, 5
      %v649 = vrot.slane %v646, 5
      %v650 = vrot.slane %v647, 5
      %651 = vrot.lane.b32.xlu0 %v648, 4
      %v652 = vpop.permute.xlu0 %651
      %653 = vrot.lane.b32.xlu0 %v649, 4
      %v654 = vpop.permute.xlu0 %653
      %655 = vrot.lane.b32.xlu0 %v650, 4
      %v656 = vpop.permute.xlu0 %655
      %v657 = vsel %vm236, %v652, %v654
      %v658 = vsel %vm236, %v654, %v656
      %662 = vst [vmem:[#allocation1] ss:$2 sm:$0xff] %v199
      %s663 = scalar_lea.vmem [#allocation1], 16
      %664 = vst [vmem:[%s663] ss:$2 sm:$0xff] %v200
      %v665 = vld.sshfl [vmem:[#allocation1] sm:$0xff pattern:$0x75316420]
      %v666 = vld.sshfl [vmem:[#allocation1 + $0x8] sm:$0xff pattern:$0x75316420]
      %v667 = vld.sshfl [vmem:[#allocation1 + $0x10] sm:$0xff pattern:$0x75316420]
      %v668 = vrot.slane %v665, 2
      %v669 = vrot.slane %v666, 2
      %v670 = vrot.slane %v667, 2
      %671 = vrot.lane.b32.xlu0 %v668, 127
      %v672 = vpop.permute.xlu0 %671
      %673 = vrot.lane.b32.xlu0 %v669, 127
      %v674 = vpop.permute.xlu0 %673
      %675 = vrot.lane.b32.xlu0 %v670, 127
      %v676 = vpop.permute.xlu0 %675
      %v677 = vsel %vm258, %v672, %v674
      %v678 = vsel %vm258, %v674, %v676
      %682 = vst [vmem:[#allocation1] ss:$2 sm:$0xff] %v200
      %s683 = scalar_lea.vmem [#allocation1], 16
      %684 = vst [vmem:[%s683] ss:$2 sm:$0xff] %v201
      %v685 = vld.sshfl [vmem:[#allocation1 + $0x8] sm:$0xff pattern:$0x75316420]
      %v686 = vld.sshfl [vmem:[#allocation1 + $0x10] sm:$0xff pattern:$0x75316420]
      %v687 = vld.sshfl [vmem:[#allocation1 + $0x18] sm:$0xff pattern:$0x75316420]
      %v688 = vrot.slane %v685, 7
      %v689 = vrot.slane %v686, 7
      %v690 = vrot.slane %v687, 7
      %691 = vrot.lane.b32.xlu0 %v688, 3
      %v692 = vpop.permute.xlu0 %691
      %693 = vrot.lane.b32.xlu0 %v689, 3
      %v694 = vpop.permute.xlu0 %693
      %695 = vrot.lane.b32.xlu0 %v690, 3
      %v696 = vpop.permute.xlu0 %695
      %v697 = vsel %vm283, %v692, %v694
      %v698 = vsel %vm283, %v694, %v696
      %s702 = scalar_lea.vmem [#allocation1], 1
      %703 = vst [vmem:[%s702] ss:$2 sm:$0xff] %v199
      %s704 = scalar_lea.vmem [#allocation1], 17
      %705 = vst [vmem:[%s704] ss:$2 sm:$0xff] %v200
      %v706 = vld.sshfl [vmem:[#allocation1] sm:$0xff pattern:$0x75316420]
      %v707 = vld.sshfl [vmem:[#allocation1 + $0x8] sm:$0xff pattern:$0x75316420]
      %v708 = vld.sshfl [vmem:[#allocation1 + $0x10] sm:$0xff pattern:$0x75316420]
      %709 = vrot.lane.b32.xlu0 %v706, 126
      %v710 = vpop.permute.xlu0 %709
      %711 = vrot.lane.b32.xlu0 %v707, 126
      %v712 = vpop.permute.xlu0 %711
      %713 = vrot.lane.b32.xlu0 %v708, 126
      %v714 = vpop.permute.xlu0 %713
      %v715 = vsel %vm303, %v710, %v712
      %v716 = vsel %vm303, %v712, %v714
      %720 = vst [vmem:[#allocation1] ss:$2 sm:$0xff] %v202
      %s721 = scalar_lea.vmem [#allocation1], 16
      %722 = vst [vmem:[%s721] ss:$2 sm:$0xff] %v203
      %v723 = vld.sshfl [vmem:[#allocation1] sm:$0xff pattern:$0x75316420]
      %v724 = vld.sshfl [vmem:[#allocation1 + $0x8] sm:$0xff pattern:$0x75316420]
      %v725 = vld.sshfl [vmem:[#allocation1 + $0x10] sm:$0xff pattern:$0x75316420]
      %v726 = vrot.slane %v723, 1
      %v727 = vrot.slane %v724, 1
      %v728 = vrot.slane %v725, 1
      %729 = vrot.lane.b32.xlu0 %v726, 9
      %v730 = vpop.permute.xlu0 %729
      %731 = vrot.lane.b32.xlu0 %v727, 9
      %v732 = vpop.permute.xlu0 %731
      %733 = vrot.lane.b32.xlu0 %v728, 9
      %v734 = vpop.permute.xlu0 %733
      %vm735 = vcmask 72704
      %v736 = vsel %vm735, %v730, %v732
      %v737 = vsel %vm735, %v732, %v734
      %741 = vst [vmem:[#allocation1] ss:$2 sm:$0xff] %v203
      %s742 = scalar_lea.vmem [#allocation1], 16
      %743 = vst [vmem:[%s742] ss:$2 sm:$0xff] %v204
      %v744 = vld.sshfl [vmem:[#allocation1 + $0x8] sm:$0xff pattern:$0x75316420]
      %v745 = vld.sshfl [vmem:[#allocation1 + $0x10] sm:$0xff pattern:$0x75316420]
      %v746 = vld.sshfl [vmem:[#allocation1 + $0x18] sm:$0xff pattern:$0x75316420]
      %v747 = vrot.slane %v744, 6
      %v748 = vrot.slane %v745, 6
      %v749 = vrot.slane %v746, 6
      %750 = vrot.lane.b32.xlu0 %v747, 13
      %v751 = vpop.permute.xlu0 %750
      %752 = vrot.lane.b32.xlu0 %v748, 13
      %v753 = vpop.permute.xlu0 %752
      %754 = vrot.lane.b32.xlu0 %v749, 13
      %v755 = vpop.permute.xlu0 %754
      %vm756 = vcmask 105472
      %v757 = vsel %vm756, %v751, %v753
      %v758 = vsel %vm756, %v753, %v755
      %762 = vst [vmem:[#allocation1] ss:$2 sm:$0xff] %v202
      %s763 = scalar_lea.vmem [#allocation1], 16
      %764 = vst [vmem:[%s763] ss:$2 sm:$0xff] %v203
      %v765 = vld.sshfl [vmem:[#allocation1] sm:$0xff pattern:$0x75316420]
      %v766 = vld.sshfl [vmem:[#allocation1 + $0x8] sm:$0xff pattern:$0x75316420]
      %v767 = vld.sshfl [vmem:[#allocation1 + $0x10] sm:$0xff pattern:$0x75316420]
      %v768 = vrot.slane %v765, 3
      %v769 = vrot.slane %v766, 3
      %v770 = vrot.slane %v767, 3
      %771 = vrot.lane.b32.xlu0 %v768, 8
      %v772 = vpop.permute.xlu0 %771
      %773 = vrot.lane.b32.xlu0 %v769, 8
      %v774 = vpop.permute.xlu0 %773
      %775 = vrot.lane.b32.xlu0 %v770, 8
      %v776 = vpop.permute.xlu0 %775
      %v777 = vsel %vm379, %v772, %v774
      %v778 = vsel %vm379, %v774, %v776
      %782 = vst [vmem:[#allocation1] ss:$2 sm:$0xff] %v203
      %s783 = scalar_lea.vmem [#allocation1], 16
      %784 = vst [vmem:[%s783] ss:$2 sm:$0xff] %v204
      %v785 = vld.sshfl [vmem:[#allocation1 + $0x8] sm:$0xff pattern:$0x75316420]
      %v786 = vld.sshfl [vmem:[#allocation1 + $0x10] sm:$0xff pattern:$0x75316420]
      %v787 = vld.sshfl [vmem:[#allocation1 + $0x18] sm:$0xff pattern:$0x75316420]
      %788 = vrot.lane.b32.xlu0 %v785, 12
      %v789 = vpop.permute.xlu0 %788
      %790 = vrot.lane.b32.xlu0 %v786, 12
      %v791 = vpop.permute.xlu0 %790
      %792 = vrot.lane.b32.xlu0 %v787, 12
      %v793 = vpop.permute.xlu0 %792
      %v794 = vsel %vm402, %v789, %v791
      %v795 = vsel %vm402, %v791, %v793
      %799 = vst [vmem:[#allocation1] ss:$2 sm:$0xff] %v202
      %s800 = scalar_lea.vmem [#allocation1], 16
      %801 = vst [vmem:[%s800] ss:$2 sm:$0xff] %v203
      %v802 = vld.sshfl [vmem:[#allocation1] sm:$0xff pattern:$0x75316420]
      %v803 = vld.sshfl [vmem:[#allocation1 + $0x8] sm:$0xff pattern:$0x75316420]
      %v804 = vld.sshfl [vmem:[#allocation1 + $0x10] sm:$0xff pattern:$0x75316420]
      %v805 = vrot.slane %v802, 5
      %v806 = vrot.slane %v803, 5
      %v807 = vrot.slane %v804, 5
      %808 = vrot.lane.b32.xlu0 %v805, 7
      %v809 = vpop.permute.xlu0 %808
      %810 = vrot.lane.b32.xlu0 %v806, 7
      %v811 = vpop.permute.xlu0 %810
      %812 = vrot.lane.b32.xlu0 %v807, 7
      %v813 = vpop.permute.xlu0 %812
      %v814 = vsel %vm430, %v809, %v811
      %v815 = vsel %vm430, %v811, %v813
      %819 = vst [vmem:[#allocation1] ss:$2 sm:$0xff] %v203
      %s820 = scalar_lea.vmem [#allocation1], 16
      %821 = vst [vmem:[%s820] ss:$2 sm:$0xff] %v204
      %v822 = vld.sshfl [vmem:[#allocation1 + $0x8] sm:$0xff pattern:$0x75316420]
      %v823 = vld.sshfl [vmem:[#allocation1 + $0x10] sm:$0xff pattern:$0x75316420]
      %v824 = vld.sshfl [vmem:[#allocation1 + $0x18] sm:$0xff pattern:$0x75316420]
      %v825 = vrot.slane %v822, 2
      %v826 = vrot.slane %v823, 2
      %v827 = vrot.slane %v824, 2
      %828 = vrot.lane.b32.xlu0 %v825, 11
      %v829 = vpop.permute.xlu0 %828
      %830 = vrot.lane.b32.xlu0 %v826, 11
      %v831 = vpop.permute.xlu0 %830
      %832 = vrot.lane.b32.xlu0 %v827, 11
      %v833 = vpop.permute.xlu0 %832
      %v834 = vsel %vm456, %v829, %v831
      %v835 = vsel %vm456, %v831, %v833
      %839 = vst [vmem:[#allocation1] ss:$2 sm:$0xff] %v202
      %s840 = scalar_lea.vmem [#allocation1], 16
      %841 = vst [vmem:[%s840] ss:$2 sm:$0xff] %v203
      %v842 = vld.sshfl [vmem:[#allocation1] sm:$0xff pattern:$0x75316420]
      %v843 = vld.sshfl [vmem:[#allocation1 + $0x8] sm:$0xff pattern:$0x75316420]
      %v844 = vld.sshfl [vmem:[#allocation1 + $0x10] sm:$0xff pattern:$0x75316420]
      %v845 = vrot.slane %v842, 7
      %v846 = vrot.slane %v843, 7
      %v847 = vrot.slane %v844, 7
      %848 = vrot.lane.b32.xlu0 %v845, 6
      %v849 = vpop.permute.xlu0 %848
      %850 = vrot.lane.b32.xlu0 %v846, 6
      %v851 = vpop.permute.xlu0 %850
      %852 = vrot.lane.b32.xlu0 %v847, 6
      %v853 = vpop.permute.xlu0 %852
      %v854 = vsel %vm484, %v849, %v851
      %v855 = vsel %vm484, %v851, %v853
      %s859 = scalar_lea.vmem [#allocation1], 1
      %860 = vst [vmem:[%s859] ss:$2 sm:$0xff] %v199
      %s861 = scalar_lea.vmem [#allocation1], 17
      %862 = vst [vmem:[%s861] ss:$2 sm:$0xff] %v200
      %v863 = vld.sshfl [vmem:[#allocation1] sm:$0xff pattern:$0x75316420]
      %v864 = vld.sshfl [vmem:[#allocation1 + $0x8] sm:$0xff pattern:$0x75316420]
      %v865 = vld.sshfl [vmem:[#allocation1 + $0x10] sm:$0xff pattern:$0x75316420]
      %866 = vrot.lane.b32.xlu0 %v863, 110
      %v867 = vpop.permute.xlu0 %866
      %868 = vrot.lane.b32.xlu0 %v864, 110
      %v869 = vpop.permute.xlu0 %868
      %870 = vrot.lane.b32.xlu0 %v865, 110
      %v871 = vpop.permute.xlu0 %870
      %vm872 = vcmask 900096
      %v873 = vsel %vm872, %v867, %v869
      %v874 = vsel %vm872, %v869, %v871
      %878 = vst [vmem:[#allocation1] ss:$2 sm:$0xff] %v200
      %s879 = scalar_lea.vmem [#allocation1], 16
      %880 = vst [vmem:[%s879] ss:$2 sm:$0xff] %v201
      %v881 = vld.sshfl [vmem:[#allocation1 + $0x8] sm:$0xff pattern:$0x75316420]
      %v882 = vld.sshfl [vmem:[#allocation1 + $0x10] sm:$0xff pattern:$0x75316420]
      %v883 = vld.sshfl [vmem:[#allocation1 + $0x18] sm:$0xff pattern:$0x75316420]
      %v884 = vrot.slane %v881, 1
      %v885 = vrot.slane %v882, 1
      %v886 = vrot.slane %v883, 1
      %887 = vrot.lane.b32.xlu0 %v884, 114
      %v888 = vpop.permute.xlu0 %887
      %889 = vrot.lane.b32.xlu0 %v885, 114
      %v890 = vpop.permute.xlu0 %889
      %891 = vrot.lane.b32.xlu0 %v886, 114
      %v892 = vpop.permute.xlu0 %891
      %vm893 = vcmask 932864
      %v894 = vsel %vm893, %v888, %v890
      %v895 = vsel %vm893, %v890, %v892
      %899 = vst [vmem:[#allocation1] ss:$2 sm:$0xff] %v199
      %s900 = scalar_lea.vmem [#allocation1], 16
      %901 = vst [vmem:[%s900] ss:$2 sm:$0xff] %v200
      %v902 = vld.sshfl [vmem:[#allocation1] sm:$0xff pattern:$0x75316420]
      %v903 = vld.sshfl [vmem:[#allocation1 + $0x8] sm:$0xff pattern:$0x75316420]
      %v904 = vld.sshfl [vmem:[#allocation1 + $0x10] sm:$0xff pattern:$0x75316420]
      %v905 = vrot.slane %v902, 6
      %v906 = vrot.slane %v903, 6
      %v907 = vrot.slane %v904, 6
      %908 = vrot.lane.b32.xlu0 %v905, 109
      %v909 = vpop.permute.xlu0 %908
      %910 = vrot.lane.b32.xlu0 %v906, 109
      %v911 = vpop.permute.xlu0 %910
      %912 = vrot.lane.b32.xlu0 %v907, 109
      %v913 = vpop.permute.xlu0 %912
      %v914 = vsel %vm557, %v909, %v911
      %v915 = vsel %vm557, %v911, %v913
      %919 = vst [vmem:[#allocation1] ss:$2 sm:$0xff] %v200
      %s920 = scalar_lea.vmem [#allocation1], 16
      %921 = vst [vmem:[%s920] ss:$2 sm:$0xff] %v201
      %v922 = vld.sshfl [vmem:[#allocation1 + $0x8] sm:$0xff pattern:$0x75316420]
      %v923 = vld.sshfl [vmem:[#allocation1 + $0x10] sm:$0xff pattern:$0x75316420]
      %v924 = vld.sshfl [vmem:[#allocation1 + $0x18] sm:$0xff pattern:$0x75316420]
      %v925 = vrot.slane %v922, 3
      %v926 = vrot.slane %v923, 3
      %v927 = vrot.slane %v924, 3
      %928 = vrot.lane.b32.xlu0 %v925, 113
      %v929 = vpop.permute.xlu0 %928
      %930 = vrot.lane.b32.xlu0 %v926, 113
      %v931 = vpop.permute.xlu0 %930
      %932 = vrot.lane.b32.xlu0 %v927, 113
      %v933 = vpop.permute.xlu0 %932
      %v934 = vsel %vm578, %v929, %v931
      %v935 = vsel %vm578, %v931, %v933
      %v939 = vsel %vm584, %v636, %v652
      %v940 = vsel %vm584, %v637, %v657
      %v941 = vsel %vm584, %v638, %v658
      %v942 = vsel %vm588, %v939, %v677
      %v943 = vsel %vm588, %v940, %v678
      %v944 = vsel %vm588, %v941, %v676
      %v945 = vsel %vm592, %v677, %v692
      %v946 = vsel %vm592, %v678, %v697
      %v947 = vsel %vm592, %v676, %v698
      %v948 = vsel %vm596, %v945, %v715
      %v949 = vsel %vm596, %v946, %v716
      %v950 = vsel %vm596, %v947, %v714
      %v951 = vsel %vm600, %v948, %v730
      %v952 = vsel %vm600, %v949, %v736
      %v953 = vsel %vm600, %v950, %v737
      %v954 = vsel %vm604, %v730, %v751
      %v955 = vsel %vm604, %v736, %v757
      %v956 = vsel %vm604, %v737, %v758
      %v957 = vsel %vm608, %v954, %v772
      %v958 = vsel %vm608, %v955, %v777
      %v959 = vsel %vm608, %v956, %v778
      %v960 = vsel %vm584, %v789, %v809
      %v961 = vsel %vm584, %v794, %v814
      %v962 = vsel %vm584, %v795, %v815
      %v963 = vsel %vm588, %v960, %v829
      %v964 = vsel %vm588, %v961, %v834
      %v965 = vsel %vm588, %v962, %v835
      %v966 = vsel %vm592, %v829, %v849
      %v967 = vsel %vm592, %v834, %v854
      %v968 = vsel %vm592, %v835, %v855
      %v969 = vsel %vm596, %v966, %v873
      %v970 = vsel %vm596, %v967, %v874
      %v971 = vsel %vm596, %v968, %v871
      %v972 = vsel %vm600, %v969, %v894
      %v973 = vsel %vm600, %v970, %v895
      %v974 = vsel %vm600, %v971, %v892
      %v975 = vsel %vm604, %v894, %v914
      %v976 = vsel %vm604, %v895, %v915
      %v977 = vsel %vm604, %v892, %v913
      %v978 = vsel %vm608, %v975, %v934
      %v979 = vsel %vm608, %v976, %v935
      %v980 = vsel %vm608, %v977, %v933
      %981 = vst [vmem:[#allocation1] ss:$2 sm:$0xff] %v199
      %s982 = scalar_lea.vmem [#allocation1], 16
      %983 = vst [vmem:[%s982] ss:$2 sm:$0xff] %v200
      %v984 = vld.sshfl [vmem:[#allocation1] sm:$0xff pattern:$0x75316420]
      %v985 = vld.sshfl [vmem:[#allocation1 + $0x8] sm:$0xff pattern:$0x75316420]
      %v986 = vld.sshfl [vmem:[#allocation1 + $0x10] sm:$0xff pattern:$0x75316420]
      %990 = vst [vmem:[#allocation1] ss:$2 sm:$0xff] %v200
      %s991 = scalar_lea.vmem [#allocation1], 16
      %992 = vst [vmem:[%s991] ss:$2 sm:$0xff] %v201
      %v993 = vld.sshfl [vmem:[#allocation1 + $0x8] sm:$0xff pattern:$0x75316420]
      %v994 = vld.sshfl [vmem:[#allocation1 + $0x10] sm:$0xff pattern:$0x75316420]
      %v995 = vld.sshfl [vmem:[#allocation1 + $0x18] sm:$0xff pattern:$0x75316420]
      %v996 = vrot.slane %v993, 5
      %v997 = vrot.slane %v994, 5
      %v998 = vrot.slane %v995, 5
      %999 = vrot.lane.b32.xlu0 %v996, 4
      %v1000 = vpop.permute.xlu0 %999
      %1001 = vrot.lane.b32.xlu0 %v997, 4
      %v1002 = vpop.permute.xlu0 %1001
      %1003 = vrot.lane.b32.xlu0 %v998, 4
      %v1004 = vpop.permute.xlu0 %1003
      %v1005 = vsel %vm236, %v1000, %v1002
      %v1006 = vsel %vm236, %v1002, %v1004
      %1010 = vst [vmem:[#allocation1] ss:$2 sm:$0xff] %v199
      %s1011 = scalar_lea.vmem [#allocation1], 16
      %1012 = vst [vmem:[%s1011] ss:$2 sm:$0xff] %v200
      %v1013 = vld.sshfl [vmem:[#allocation1] sm:$0xff pattern:$0x75316420]
      %v1014 = vld.sshfl [vmem:[#allocation1 + $0x8] sm:$0xff pattern:$0x75316420]
      %v1015 = vld.sshfl [vmem:[#allocation1 + $0x10] sm:$0xff pattern:$0x75316420]
      %v1016 = vrot.slane %v1013, 2
      %v1017 = vrot.slane %v1014, 2
      %v1018 = vrot.slane %v1015, 2
      %1019 = vrot.lane.b32.xlu0 %v1016, 127
      %v1020 = vpop.permute.xlu0 %1019
      %1021 = vrot.lane.b32.xlu0 %v1017, 127
      %v1022 = vpop.permute.xlu0 %1021
      %1023 = vrot.lane.b32.xlu0 %v1018, 127
      %v1024 = vpop.permute.xlu0 %1023
      %v1025 = vsel %vm258, %v1020, %v1022
      %v1026 = vsel %vm258, %v1022, %v1024
      %1030 = vst [vmem:[#allocation1] ss:$2 sm:$0xff] %v202
      %s1031 = scalar_lea.vmem [#allocation1], 16
      %1032 = vst [vmem:[%s1031] ss:$2 sm:$0xff] %v203
      %v1033 = vld.sshfl [vmem:[#allocation1] sm:$0xff pattern:$0x75316420]
      %v1034 = vld.sshfl [vmem:[#allocation1 + $0x8] sm:$0xff pattern:$0x75316420]
      %v1035 = vld.sshfl [vmem:[#allocation1 + $0x10] sm:$0xff pattern:$0x75316420]
      %v1036 = vrot.slane %v1033, 7
      %v1037 = vrot.slane %v1034, 7
      %v1038 = vrot.slane %v1035, 7
      %1039 = vrot.lane.b32.xlu0 %v1036, 10
      %v1040 = vpop.permute.xlu0 %1039
      %1041 = vrot.lane.b32.xlu0 %v1037, 10
      %v1042 = vpop.permute.xlu0 %1041
      %1043 = vrot.lane.b32.xlu0 %v1038, 10
      %v1044 = vpop.permute.xlu0 %1043
      %v1045 = vsel %vm507, %v1040, %v1042
      %v1046 = vsel %vm507, %v1042, %v1044
      %s1050 = scalar_lea.vmem [#allocation1], 1
      %1051 = vst [vmem:[%s1050] ss:$2 sm:$0xff] %v203
      %s1052 = scalar_lea.vmem [#allocation1], 17
      %1053 = vst [vmem:[%s1052] ss:$2 sm:$0xff] %v204
      %v1054 = vld.sshfl [vmem:[#allocation1 + $0x8] sm:$0xff pattern:$0x75316420]
      %v1055 = vld.sshfl [vmem:[#allocation1 + $0x10] sm:$0xff pattern:$0x75316420]
      %v1056 = vld.sshfl [vmem:[#allocation1 + $0x18] sm:$0xff pattern:$0x75316420]
      %1057 = vrot.lane.b32.xlu0 %v1054, 14
      %v1058 = vpop.permute.xlu0 %1057
      %1059 = vrot.lane.b32.xlu0 %v1055, 14
      %v1060 = vpop.permute.xlu0 %1059
      %1061 = vrot.lane.b32.xlu0 %v1056, 14
      %v1062 = vpop.permute.xlu0 %1061
      %vm1063 = vcmask 113664
      %v1064 = vsel %vm1063, %v1058, %v1060
      %v1065 = vsel %vm1063, %v1060, %v1062
      %1069 = vst [vmem:[#allocation1] ss:$2 sm:$0xff] %v202
      %s1070 = scalar_lea.vmem [#allocation1], 16
      %1071 = vst [vmem:[%s1070] ss:$2 sm:$0xff] %v203
      %v1072 = vld.sshfl [vmem:[#allocation1] sm:$0xff pattern:$0x75316420]
      %v1073 = vld.sshfl [vmem:[#allocation1 + $0x8] sm:$0xff pattern:$0x75316420]
      %v1074 = vld.sshfl [vmem:[#allocation1 + $0x10] sm:$0xff pattern:$0x75316420]
      %v1075 = vrot.slane %v1072, 1
      %v1076 = vrot.slane %v1073, 1
      %v1077 = vrot.slane %v1074, 1
      %1078 = vrot.lane.b32.xlu0 %v1075, 9
      %v1079 = vpop.permute.xlu0 %1078
      %1080 = vrot.lane.b32.xlu0 %v1076, 9
      %v1081 = vpop.permute.xlu0 %1080
      %1082 = vrot.lane.b32.xlu0 %v1077, 9
      %v1083 = vpop.permute.xlu0 %1082
      %v1084 = vsel %vm735, %v1079, %v1081
      %v1085 = vsel %vm735, %v1081, %v1083
      %1089 = vst [vmem:[#allocation1] ss:$2 sm:$0xff] %v203
      %s1090 = scalar_lea.vmem [#allocation1], 16
      %1091 = vst [vmem:[%s1090] ss:$2 sm:$0xff] %v204
      %v1092 = vld.sshfl [vmem:[#allocation1 + $0x8] sm:$0xff pattern:$0x75316420]
      %v1093 = vld.sshfl [vmem:[#allocation1 + $0x10] sm:$0xff pattern:$0x75316420]
      %v1094 = vld.sshfl [vmem:[#allocation1 + $0x18] sm:$0xff pattern:$0x75316420]
      %v1095 = vrot.slane %v1092, 6
      %v1096 = vrot.slane %v1093, 6
      %v1097 = vrot.slane %v1094, 6
      %1098 = vrot.lane.b32.xlu0 %v1095, 13
      %v1099 = vpop.permute.xlu0 %1098
      %1100 = vrot.lane.b32.xlu0 %v1096, 13
      %v1101 = vpop.permute.xlu0 %1100
      %1102 = vrot.lane.b32.xlu0 %v1097, 13
      %v1103 = vpop.permute.xlu0 %1102
      %v1104 = vsel %vm756, %v1099, %v1101
      %v1105 = vsel %vm756, %v1101, %v1103
      %1109 = vst [vmem:[#allocation1] ss:$2 sm:$0xff] %v202
      %s1110 = scalar_lea.vmem [#allocation1], 16
      %1111 = vst [vmem:[%s1110] ss:$2 sm:$0xff] %v203
      %v1112 = vld.sshfl [vmem:[#allocation1] sm:$0xff pattern:$0x75316420]
      %v1113 = vld.sshfl [vmem:[#allocation1 + $0x8] sm:$0xff pattern:$0x75316420]
      %v1114 = vld.sshfl [vmem:[#allocation1 + $0x10] sm:$0xff pattern:$0x75316420]
      %v1115 = vrot.slane %v1112, 3
      %v1116 = vrot.slane %v1113, 3
      %v1117 = vrot.slane %v1114, 3
      %1118 = vrot.lane.b32.xlu0 %v1115, 8
      %v1119 = vpop.permute.xlu0 %1118
      %1120 = vrot.lane.b32.xlu0 %v1116, 8
      %v1121 = vpop.permute.xlu0 %1120
      %1122 = vrot.lane.b32.xlu0 %v1117, 8
      %v1123 = vpop.permute.xlu0 %1122
      %v1124 = vsel %vm379, %v1119, %v1121
      %v1125 = vsel %vm379, %v1121, %v1123
      %1129 = vst [vmem:[#allocation1] ss:$2 sm:$0xff] %v203
      %s1130 = scalar_lea.vmem [#allocation1], 16
      %1131 = vst [vmem:[%s1130] ss:$2 sm:$0xff] %v204
      %v1132 = vld.sshfl [vmem:[#allocation1 + $0x8] sm:$0xff pattern:$0x75316420]
      %v1133 = vld.sshfl [vmem:[#allocation1 + $0x10] sm:$0xff pattern:$0x75316420]
      %v1134 = vld.sshfl [vmem:[#allocation1 + $0x18] sm:$0xff pattern:$0x75316420]
      %1135 = vrot.lane.b32.xlu0 %v1132, 12
      %v1136 = vpop.permute.xlu0 %1135
      %1137 = vrot.lane.b32.xlu0 %v1133, 12
      %v1138 = vpop.permute.xlu0 %1137
      %1139 = vrot.lane.b32.xlu0 %v1134, 12
      %v1140 = vpop.permute.xlu0 %1139
      %v1141 = vsel %vm402, %v1136, %v1138
      %v1142 = vsel %vm402, %v1138, %v1140
      %1146 = vst [vmem:[#allocation1] ss:$2 sm:$0xff] %v202
      %s1147 = scalar_lea.vmem [#allocation1], 16
      %1148 = vst [vmem:[%s1147] ss:$2 sm:$0xff] %v203
      %v1149 = vld.sshfl [vmem:[#allocation1] sm:$0xff pattern:$0x75316420]
      %v1150 = vld.sshfl [vmem:[#allocation1 + $0x8] sm:$0xff pattern:$0x75316420]
      %v1151 = vld.sshfl [vmem:[#allocation1 + $0x10] sm:$0xff pattern:$0x75316420]
      %v1152 = vrot.slane %v1149, 5
      %v1153 = vrot.slane %v1150, 5
      %v1154 = vrot.slane %v1151, 5
      %1155 = vrot.lane.b32.xlu0 %v1152, 7
      %v1156 = vpop.permute.xlu0 %1155
      %1157 = vrot.lane.b32.xlu0 %v1153, 7
      %v1158 = vpop.permute.xlu0 %1157
      %1159 = vrot.lane.b32.xlu0 %v1154, 7
      %v1160 = vpop.permute.xlu0 %1159
      %v1161 = vsel %vm430, %v1156, %v1158
      %v1162 = vsel %vm430, %v1158, %v1160
      %1166 = vst [vmem:[#allocation1] ss:$2 sm:$0xff] %v199
      %s1167 = scalar_lea.vmem [#allocation1], 16
      %1168 = vst [vmem:[%s1167] ss:$2 sm:$0xff] %v200
      %v1169 = vld.sshfl [vmem:[#allocation1] sm:$0xff pattern:$0x75316420]
      %v1170 = vld.sshfl [vmem:[#allocation1 + $0x8] sm:$0xff pattern:$0x75316420]
      %v1171 = vld.sshfl [vmem:[#allocation1 + $0x10] sm:$0xff pattern:$0x75316420]
      %v1172 = vrot.slane %v1169, 2
      %v1173 = vrot.slane %v1170, 2
      %v1174 = vrot.slane %v1171, 2
      %1175 = vrot.lane.b32.xlu0 %v1172, 111
      %v1176 = vpop.permute.xlu0 %1175
      %1177 = vrot.lane.b32.xlu0 %v1173, 111
      %v1178 = vpop.permute.xlu0 %1177
      %1179 = vrot.lane.b32.xlu0 %v1174, 111
      %v1180 = vpop.permute.xlu0 %1179
      %vm1181 = vcmask 908288
      %v1182 = vsel %vm1181, %v1176, %v1178
      %v1183 = vsel %vm1181, %v1178, %v1180
      %1187 = vst [vmem:[#allocation1] ss:$2 sm:$0xff] %v200
      %s1188 = scalar_lea.vmem [#allocation1], 16
      %1189 = vst [vmem:[%s1188] ss:$2 sm:$0xff] %v201
      %v1190 = vld.sshfl [vmem:[#allocation1 + $0x8] sm:$0xff pattern:$0x75316420]
      %v1191 = vld.sshfl [vmem:[#allocation1 + $0x10] sm:$0xff pattern:$0x75316420]
      %v1192 = vld.sshfl [vmem:[#allocation1 + $0x18] sm:$0xff pattern:$0x75316420]
      %v1193 = vrot.slane %v1190, 7
      %v1194 = vrot.slane %v1191, 7
      %v1195 = vrot.slane %v1192, 7
      %1196 = vrot.lane.b32.xlu0 %v1193, 115
      %v1197 = vpop.permute.xlu0 %1196
      %1198 = vrot.lane.b32.xlu0 %v1194, 115
      %v1199 = vpop.permute.xlu0 %1198
      %1200 = vrot.lane.b32.xlu0 %v1195, 115
      %v1201 = vpop.permute.xlu0 %1200
      %vm1202 = vcmask 941056
      %v1203 = vsel %vm1202, %v1197, %v1199
      %v1204 = vsel %vm1202, %v1199, %v1201
      %s1208 = scalar_lea.vmem [#allocation1], 1
      %1209 = vst [vmem:[%s1208] ss:$2 sm:$0xff] %v199
      %s1210 = scalar_lea.vmem [#allocation1], 17
      %1211 = vst [vmem:[%s1210] ss:$2 sm:$0xff] %v200
      %v1212 = vld.sshfl [vmem:[#allocation1] sm:$0xff pattern:$0x75316420]
      %v1213 = vld.sshfl [vmem:[#allocation1 + $0x8] sm:$0xff pattern:$0x75316420]
      %v1214 = vld.sshfl [vmem:[#allocation1 + $0x10] sm:$0xff pattern:$0x75316420]
      %1215 = vrot.lane.b32.xlu0 %v1212, 110
      %v1216 = vpop.permute.xlu0 %1215
      %1217 = vrot.lane.b32.xlu0 %v1213, 110
      %v1218 = vpop.permute.xlu0 %1217
      %1219 = vrot.lane.b32.xlu0 %v1214, 110
      %v1220 = vpop.permute.xlu0 %1219
      %v1221 = vsel %vm872, %v1216, %v1218
      %v1222 = vsel %vm872, %v1218, %v1220
      %1226 = vst [vmem:[#allocation1] ss:$2 sm:$0xff] %v200
      %s1227 = scalar_lea.vmem [#allocation1], 16
      %1228 = vst [vmem:[%s1227] ss:$2 sm:$0xff] %v201
      %v1229 = vld.sshfl [vmem:[#allocation1 + $0x8] sm:$0xff pattern:$0x75316420]
      %v1230 = vld.sshfl [vmem:[#allocation1 + $0x10] sm:$0xff pattern:$0x75316420]
      %v1231 = vld.sshfl [vmem:[#allocation1 + $0x18] sm:$0xff pattern:$0x75316420]
      %v1232 = vrot.slane %v1229, 1
      %v1233 = vrot.slane %v1230, 1
      %v1234 = vrot.slane %v1231, 1
      %1235 = vrot.lane.b32.xlu0 %v1232, 114
      %v1236 = vpop.permute.xlu0 %1235
      %1237 = vrot.lane.b32.xlu0 %v1233, 114
      %v1238 = vpop.permute.xlu0 %1237
      %1239 = vrot.lane.b32.xlu0 %v1234, 114
      %v1240 = vpop.permute.xlu0 %1239
      %v1241 = vsel %vm893, %v1236, %v1238
      %v1242 = vsel %vm893, %v1238, %v1240
      %1246 = vst [vmem:[#allocation1] ss:$2 sm:$0xff] %v199
      %s1247 = scalar_lea.vmem [#allocation1], 16
      %1248 = vst [vmem:[%s1247] ss:$2 sm:$0xff] %v200
      %v1249 = vld.sshfl [vmem:[#allocation1] sm:$0xff pattern:$0x75316420]
      %v1250 = vld.sshfl [vmem:[#allocation1 + $0x8] sm:$0xff pattern:$0x75316420]
      %v1251 = vld.sshfl [vmem:[#allocation1 + $0x10] sm:$0xff pattern:$0x75316420]
      %v1252 = vrot.slane %v1249, 6
      %v1253 = vrot.slane %v1250, 6
      %v1254 = vrot.slane %v1251, 6
      %1255 = vrot.lane.b32.xlu0 %v1252, 109
      %v1256 = vpop.permute.xlu0 %1255
      %1257 = vrot.lane.b32.xlu0 %v1253, 109
      %v1258 = vpop.permute.xlu0 %1257
      %1259 = vrot.lane.b32.xlu0 %v1254, 109
      %v1260 = vpop.permute.xlu0 %1259
      %v1261 = vsel %vm557, %v1256, %v1258
      %v1262 = vsel %vm557, %v1258, %v1260
      %1266 = vst [vmem:[#allocation1] ss:$2 sm:$0xff] %v200
      %s1267 = scalar_lea.vmem [#allocation1], 16
      %1268 = vst [vmem:[%s1267] ss:$2 sm:$0xff] %v201
      %v1269 = vld.sshfl [vmem:[#allocation1 + $0x8] sm:$0xff pattern:$0x75316420]
      %v1270 = vld.sshfl [vmem:[#allocation1 + $0x10] sm:$0xff pattern:$0x75316420]
      %v1271 = vld.sshfl [vmem:[#allocation1 + $0x18] sm:$0xff pattern:$0x75316420]
      %v1272 = vrot.slane %v1269, 3
      %v1273 = vrot.slane %v1270, 3
      %v1274 = vrot.slane %v1271, 3
      %1275 = vrot.lane.b32.xlu0 %v1272, 113
      %v1276 = vpop.permute.xlu0 %1275
      %1277 = vrot.lane.b32.xlu0 %v1273, 113
      %v1278 = vpop.permute.xlu0 %1277
      %1279 = vrot.lane.b32.xlu0 %v1274, 113
      %v1280 = vpop.permute.xlu0 %1279
      %v1281 = vsel %vm578, %v1276, %v1278
      %v1282 = vsel %vm578, %v1278, %v1280
      %v1286 = vsel %vm584, %v984, %v1000
      %v1287 = vsel %vm584, %v985, %v1005
      %v1288 = vsel %vm584, %v986, %v1006
      %v1289 = vsel %vm588, %v1286, %v1025
      %v1290 = vsel %vm588, %v1287, %v1026
      %v1291 = vsel %vm588, %v1288, %v1024
      %v1292 = vsel %vm592, %v1025, %v1040
      %v1293 = vsel %vm592, %v1026, %v1045
      %v1294 = vsel %vm592, %v1024, %v1046
      %v1295 = vsel %vm596, %v1292, %v1058
      %v1296 = vsel %vm596, %v1293, %v1064
      %v1297 = vsel %vm596, %v1294, %v1065
      %v1298 = vsel %vm600, %v1295, %v1079
      %v1299 = vsel %vm600, %v1296, %v1084
      %v1300 = vsel %vm600, %v1297, %v1085
      %v1301 = vsel %vm604, %v1079, %v1099
      %v1302 = vsel %vm604, %v1084, %v1104
      %v1303 = vsel %vm604, %v1085, %v1105
      %v1304 = vsel %vm608, %v1301, %v1119
      %v1305 = vsel %vm608, %v1302, %v1124
      %v1306 = vsel %vm608, %v1303, %v1125
      %v1307 = vsel %vm584, %v1136, %v1156
      %v1308 = vsel %vm584, %v1141, %v1161
      %v1309 = vsel %vm584, %v1142, %v1162
      %v1310 = vsel %vm588, %v1307, %v1182
      %v1311 = vsel %vm588, %v1308, %v1183
      %v1312 = vsel %vm588, %v1309, %v1180
      %v1313 = vsel %vm592, %v1182, %v1203
      %v1314 = vsel %vm592, %v1183, %v1204
      %v1315 = vsel %vm592, %v1180, %v1201
      %v1316 = vsel %vm596, %v1313, %v1221
      %v1317 = vsel %vm596, %v1314, %v1222
      %v1318 = vsel %vm596, %v1315, %v1220
      %v1319 = vsel %vm600, %v1316, %v1241
      %v1320 = vsel %vm600, %v1317, %v1242
      %v1321 = vsel %vm600, %v1318, %v1240
      %v1322 = vsel %vm604, %v1241, %v1261
      %v1323 = vsel %vm604, %v1242, %v1262
      %v1324 = vsel %vm604, %v1240, %v1260
      %v1325 = vsel %vm608, %v1322, %v1281
      %v1326 = vsel %vm608, %v1323, %v1282
      %v1327 = vsel %vm608, %v1324, %v1280
      %1346 = vrot.lane.b32.xlu0 %v942, 108
      %v1347 = vpop.permute.xlu0 %1346
      %1348 = vrot.lane.b32.xlu0 %v943, 108
      %v1349 = vpop.permute.xlu0 %1348
      %1350 = vrot.lane.b32.xlu0 %v944, 108
      %v1351 = vpop.permute.xlu0 %1350
      %1352 = vrot.lane.b32.xlu0 %v951, 108
      %v1353 = vpop.permute.xlu0 %1352
      %1354 = vrot.lane.b32.xlu0 %v952, 108
      %v1355 = vpop.permute.xlu0 %1354
      %1356 = vrot.lane.b32.xlu0 %v953, 108
      %v1357 = vpop.permute.xlu0 %1356
      %1358 = vrot.lane.b32.xlu0 %v957, 108
      %v1359 = vpop.permute.xlu0 %1358
      %1360 = vrot.lane.b32.xlu0 %v958, 108
      %v1361 = vpop.permute.xlu0 %1360
      %1362 = vrot.lane.b32.xlu0 %v959, 108
      %v1363 = vpop.permute.xlu0 %1362
      %1364 = vrot.lane.b32.xlu0 %v963, 108
      %v1365 = vpop.permute.xlu0 %1364
      %1366 = vrot.lane.b32.xlu0 %v964, 108
      %v1367 = vpop.permute.xlu0 %1366
      %1368 = vrot.lane.b32.xlu0 %v965, 108
      %v1369 = vpop.permute.xlu0 %1368
      %1370 = vrot.lane.b32.xlu0 %v972, 108
      %v1371 = vpop.permute.xlu0 %1370
      %1372 = vrot.lane.b32.xlu0 %v973, 108
      %v1373 = vpop.permute.xlu0 %1372
      %1374 = vrot.lane.b32.xlu0 %v974, 108
      %v1375 = vpop.permute.xlu0 %1374
      %1376 = vrot.lane.b32.xlu0 %v978, 108
      %v1377 = vpop.permute.xlu0 %1376
      %1378 = vrot.lane.b32.xlu0 %v979, 108
      %v1379 = vpop.permute.xlu0 %1378
      %1380 = vrot.lane.b32.xlu0 %v980, 108
      %v1381 = vpop.permute.xlu0 %1380
      %vm1382 = vcmask 883712
      %v1383 = vsel %vm1382, %v1347, %v1349
      %v1384 = vsel %vm1382, %v1349, %v1351
      %v1385 = vsel %vm1382, %v1353, %v1355
      %v1386 = vsel %vm1382, %v1355, %v1357
      %v1387 = vsel %vm1382, %v1359, %v1361
      %v1388 = vsel %vm1382, %v1361, %v1363
      %v1389 = vsel %vm1382, %v1365, %v1367
      %v1390 = vsel %vm1382, %v1367, %v1369
      %v1391 = vsel %vm1382, %v1371, %v1373
      %v1392 = vsel %vm1382, %v1373, %v1375
      %v1393 = vsel %vm1382, %v1377, %v1379
      %v1394 = vsel %vm1382, %v1379, %v1381
      %1431 = vrot.lane.b32.xlu0 %v1289, 88
      %v1432 = vpop.permute.xlu0 %1431
      %1433 = vrot.lane.b32.xlu0 %v1290, 88
      %v1434 = vpop.permute.xlu0 %1433
      %1435 = vrot.lane.b32.xlu0 %v1291, 88
      %v1436 = vpop.permute.xlu0 %1435
      %1437 = vrot.lane.b32.xlu0 %v1298, 88
      %v1438 = vpop.permute.xlu0 %1437
      %1439 = vrot.lane.b32.xlu0 %v1299, 88
      %v1440 = vpop.permute.xlu0 %1439
      %1441 = vrot.lane.b32.xlu0 %v1300, 88
      %v1442 = vpop.permute.xlu0 %1441
      %1443 = vrot.lane.b32.xlu0 %v1304, 88
      %v1444 = vpop.permute.xlu0 %1443
      %1445 = vrot.lane.b32.xlu0 %v1305, 88
      %v1446 = vpop.permute.xlu0 %1445
      %1447 = vrot.lane.b32.xlu0 %v1306, 88
      %v1448 = vpop.permute.xlu0 %1447
      %1449 = vrot.lane.b32.xlu0 %v1310, 88
      %v1450 = vpop.permute.xlu0 %1449
      %1451 = vrot.lane.b32.xlu0 %v1311, 88
      %v1452 = vpop.permute.xlu0 %1451
      %1453 = vrot.lane.b32.xlu0 %v1312, 88
      %v1454 = vpop.permute.xlu0 %1453
      %1455 = vrot.lane.b32.xlu0 %v1319, 88
      %v1456 = vpop.permute.xlu0 %1455
      %1457 = vrot.lane.b32.xlu0 %v1320, 88
      %v1458 = vpop.permute.xlu0 %1457
      %1459 = vrot.lane.b32.xlu0 %v1321, 88
      %v1460 = vpop.permute.xlu0 %1459
      %1461 = vrot.lane.b32.xlu0 %v1325, 88
      %v1462 = vpop.permute.xlu0 %1461
      %1463 = vrot.lane.b32.xlu0 %v1326, 88
      %v1464 = vpop.permute.xlu0 %1463
      %1465 = vrot.lane.b32.xlu0 %v1327, 88
      %v1466 = vpop.permute.xlu0 %1465
      %vm1467 = vcmask 719872
      %v1468 = vsel %vm1467, %v1432, %v1434
      %v1469 = vsel %vm1467, %v1434, %v1436
      %v1470 = vsel %vm1467, %v1438, %v1440
      %v1471 = vsel %vm1467, %v1440, %v1442
      %v1472 = vsel %vm1467, %v1444, %v1446
      %v1473 = vsel %vm1467, %v1446, %v1448
      %v1474 = vsel %vm1467, %v1450, %v1452
      %v1475 = vsel %vm1467, %v1452, %v1454
      %v1476 = vsel %vm1467, %v1456, %v1458
      %v1477 = vsel %vm1467, %v1458, %v1460
      %v1478 = vsel %vm1467, %v1462, %v1464
      %v1479 = vsel %vm1467, %v1464, %v1466
      %1498 = vst [vmem:[#allocation1] ss:$2 sm:$0xff] %v199
      %s1499 = scalar_lea.vmem [#allocation1], 16
      %1500 = vst [vmem:[%s1499] ss:$2 sm:$0xff] %v200
      %v1501 = vld.sshfl [vmem:[#allocation1] sm:$0xff pattern:$0x75316420]
      %v1502 = vld.sshfl [vmem:[#allocation1 + $0x8] sm:$0xff pattern:$0x75316420]
      %v1503 = vld.sshfl [vmem:[#allocation1 + $0x10] sm:$0xff pattern:$0x75316420]
      %1504 = vrot.lane.b32.xlu0 %v1501, 68
      %v1505 = vpop.permute.xlu0 %1504
      %1506 = vrot.lane.b32.xlu0 %v1502, 68
      %v1507 = vpop.permute.xlu0 %1506
      %1508 = vrot.lane.b32.xlu0 %v1503, 68
      %v1509 = vpop.permute.xlu0 %1508
      %vm1510 = vcmask 556032
      %v1511 = vsel %vm1510, %v1505, %v1507
      %v1512 = vsel %vm1510, %v1507, %v1509
      %v1516 = vld [vmem:[%s1] sm:$0xff]
      %v1517 = vpack.c.bf16 %v601, %v589
      %v1518 = vpack.c.bf16 %v602, %v590
      %v1519 = vpack.c.bf16 %v603, %v591
      %v1520 = vpack.c.bf16 %v615, %v609
      %v1521 = vpack.c.bf16 %v616, %v610
      %v1522 = vpack.c.bf16 %v617, %v611
      %v1523 = vpack.c.bf16 %v630, %v624
      %v1524 = vpack.c.bf16 %v631, %v625
      %v1525 = vpack.c.bf16 %v632, %v626
      %v1526 = vpack.c.bf16 %v1385, %v1383
      %v1527 = vpack.c.bf16 %v1386, %v1384
      %v1528 = vpack.c.bf16 %v1357, %v1351
      %v1529 = vpack.c.bf16 %v1389, %v1387
      %v1530 = vpack.c.bf16 %v1390, %v1388
      %v1531 = vpack.c.bf16 %v1369, %v1363
      %v1532 = vpack.c.bf16 %v1393, %v1391
      %v1533 = vpack.c.bf16 %v1394, %v1392
      %v1534 = vpack.c.bf16 %v1381, %v1375
      %v1535 = vpack.c.bf16 %v1470, %v1468
      %v1536 = vpack.c.bf16 %v1471, %v1469
      %v1537 = vpack.c.bf16 %v1442, %v1436
      %v1538 = vpack.c.bf16 %v1474, %v1472
      %v1539 = vpack.c.bf16 %v1475, %v1473
      %v1540 = vpack.c.bf16 %v1454, %v1448
      %v1541 = vpack.c.bf16 %v1478, %v1476
      %v1542 = vpack.c.bf16 %v1479, %v1477
      %v1543 = vpack.c.bf16 %v1466, %v1460
      %v1544 = vpack.c.bf16 %v1511, %v1511
      %v1545 = vpack.c.bf16 %v1512, %v1512
      %v1546 = vpack.c.bf16 %v1509, %v1509
      %v1548 = vunpack.c.l.b16 %v1516
      %v1549 = vunpack.c.h.b16 %v1516
      %v1550 = vpack.c.b16 %v1548, %v1548
      %v1551 = vpack.c.b16 %v1549, %v1549
      %vm1553 = vcmask 154624
      %v1555 = vsel %vm1553, %v1551, 0
      %v1557 = vsel %vm592, 4294967295, 65535
      %v1558 = vsel %vm604, %v1557, 0
      %v1560 = vand.u32 %v1544, %v1558
      %v1563 = vand.u32 %v1545, %v1558
      %v1566 = vand.u32 %v1546, %v1558
      %1568 = vmatpush.bf16.msra.mxu0 %v1538
      %1569 = vmatpush.bf16.msra.mxu0 %v1535
      %1570 = vmatpush.bf16.msra.mxu0 %v1532
      %1571 = vmatpush.bf16.msra.mxu0 %v1529
      %1572 = vmatpush.bf16.msra.mxu0 %v1526
      %1573 = vmatpush.bf16.msra.mxu0 %v1523
      %1574 = vmatpush.bf16.msra.mxu0 %v1520
      %1575 = vmatpush.bf16.msra.mxu0 %v1517
      %1576 = vmatmul.bf16.gmra.mxu0 %v1550
      %v1577 = vpop.f32.mrf.mxu0
      %v1578 = vadd.f32 0.0, %v1577
      %v1579 = vpop.f32.mrf.mxu0
      %1580 = vdwg.mxu0
      %1581 = vmatpush.bf16.msra.mxu0 0
      %1582 = vmatpush.bf16.msra.mxu0 0
      %1583 = vmatpush.bf16.msra.mxu0 0
      %1584 = vmatpush.bf16.msra.mxu0 0
      %1585 = vmatpush.bf16.msra.mxu0 0
      %1586 = vmatpush.bf16.msra.mxu0 0
      %1587 = vmatpush.bf16.msra.mxu0 %v1560
      %1588 = vmatpush.bf16.msra.mxu0 %v1541
      %1589 = vmatmul.bf16.gmra.mxu0 %v1555
      %v1590 = vpop.f32.mrf.mxu0
      %v1591 = vadd.f32 %v1578, %v1590
      %v1592 = vpop.f32.mrf.mxu0
      %1593 = vdwg.mxu0
      %1594 = vmatpush.bf16.msra.mxu0 %v1539
      %1595 = vmatpush.bf16.msra.mxu0 %v1536
      %1596 = vmatpush.bf16.msra.mxu0 %v1533
      %1597 = vmatpush.bf16.msra.mxu0 %v1530
      %1598 = vmatpush.bf16.msra.mxu0 %v1527
      %1599 = vmatpush.bf16.msra.mxu0 %v1524
      %1600 = vmatpush.bf16.msra.mxu0 %v1521
      %1601 = vmatpush.bf16.msra.mxu0 %v1518
      %1602 = vmatmul.bf16.gmra.mxu0 %v1550
      %v1603 = vpop.f32.mrf.mxu0
      %v1604 = vadd.f32 0.0, %v1603
      %v1605 = vpop.f32.mrf.mxu0
      %1606 = vdwg.mxu0
      %1607 = vmatpush.bf16.msra.mxu0 0
      %1608 = vmatpush.bf16.msra.mxu0 0
      %1609 = vmatpush.bf16.msra.mxu0 0
      %1610 = vmatpush.bf16.msra.mxu0 0
      %1611 = vmatpush.bf16.msra.mxu0 0
      %1612 = vmatpush.bf16.msra.mxu0 0
      %1613 = vmatpush.bf16.msra.mxu0 %v1563
      %1614 = vmatpush.bf16.msra.mxu0 %v1542
      %1615 = vmatmul.bf16.gmra.mxu0 %v1555
      %v1616 = vpop.f32.mrf.mxu0
      %v1617 = vadd.f32 %v1604, %v1616
      %v1618 = vpop.f32.mrf.mxu0
      %1619 = vdwg.mxu0
      %1620 = vmatpush.bf16.msra.mxu0 %v1540
      %1621 = vmatpush.bf16.msra.mxu0 %v1537
      %1622 = vmatpush.bf16.msra.mxu0 %v1534
      %1623 = vmatpush.bf16.msra.mxu0 %v1531
      %1624 = vmatpush.bf16.msra.mxu0 %v1528
      %1625 = vmatpush.bf16.msra.mxu0 %v1525
      %1626 = vmatpush.bf16.msra.mxu0 %v1522
      %1627 = vmatpush.bf16.msra.mxu0 %v1519
      %1628 = vmatmul.bf16.gmra.mxu0 %v1550
      %v1629 = vpop.f32.mrf.mxu0
      %v1630 = vadd.f32 0.0, %v1629
      %v1631 = vpop.f32.mrf.mxu0
      %1632 = vdwg.mxu0
      %1633 = vmatpush.bf16.msra.mxu0 0
      %1634 = vmatpush.bf16.msra.mxu0 0
      %1635 = vmatpush.bf16.msra.mxu0 0
      %1636 = vmatpush.bf16.msra.mxu0 0
      %1637 = vmatpush.bf16.msra.mxu0 0
      %1638 = vmatpush.bf16.msra.mxu0 0
      %1639 = vmatpush.bf16.msra.mxu0 %v1566
      %1640 = vmatpush.bf16.msra.mxu0 %v1543
      %1641 = vmatmul.bf16.gmra.mxu0 %v1555
      %v1642 = vpop.f32.mrf.mxu0
      %v1643 = vadd.f32 %v1630, %v1642
      %v1644 = vpop.f32.mrf.mxu0
      %1645 = vdwg.mxu0
      %v1646 = vld [vmem:[%s2] sm:$0xff]
      %1648 = vset.pattern.permute.xlu0 0
      %1649 = vperm.xlu0 %1648, %v1646
      %v1650 = vpop.permute.xlu0 %1649
      %v1652 = vmul.f32 %v1591, %v1650
      %v1653 = vmul.f32 %v1617, %v1650
      %v1654 = vmul.f32 %v1643, %v1650
      %v1655 = vld [vmem:[%s3] sm:$0xff]
      %1657 = vset.pattern.permute.xlu0 0
      %1658 = vperm.xlu0 %1657, %v1655
      %v1659 = vpop.permute.xlu0 %1658
      %v1661 = vadd.f32 %v1652, %v1659
      %v1662 = vadd.f32 %v1653, %v1659
      %v1663 = vadd.f32 %v1654, %v1659
      %v1664 = vmax.f32 %v1661, 0.0
      %v1665 = vmax.f32 %v1662, 0.0
      %v1666 = vmax.f32 %v1663, 0.0
      %1667 = vst [vmem:[%s197] sm:$0xff] %v1664
      %1668 = vst [vmem:[%s197 + $0x8] sm:$0xff] %v1665
      %vm1669 = vcmask 392192
      %1670 = vst.msk [vmem:[%s197 + $0x10] sm:$0xff] %vm1669, %v1666
      %p1671 = scmp.lt.s32.totalorder %s15, 1
      %s1672 = scalar_select %p1671, %s15, 1
      %s1673 = smul.addr %s1672, 3
      %s1674 = smul.addr %s1673, 8
      %s1675 = scalar_lea.vmem %s4, %s1674
      // Predicated region
      $region37: #{encoder_forward.5} parent=35 // pred_check
        %p1676 = pneg %p122
      $region38: #{encoder_forward.5} parent=35 // pred_check_branch
        %1678 = sbr.rel (%p1676) target = $region40
      $region39: #{encoder_forward.5} parent=35 // pred_region
        _
      $region40: #{encoder_forward.5} parent=35 // pred_fallthru
        _
    $region36: #{encoder_forward.5} parent=5 // pred_fallthru
      _
    %p1679 = scmp.le.s32.totalorder 2, %s10
    // Predicated region
    $region41: #{encoder_forward.5} parent=5 // pred_check
      %p1680 = pneg %p1679
    $region42: #{encoder_forward.5} parent=5 // pred_check_branch
      %1682 = sbr.rel (%p1680) target = $region44
    $region43: #{encoder_forward.5} parent=5 // pred_region
      %s1683 = ssub.s32 %s10, 2
      // Predicated region
      $region45: #{encoder_forward.5} parent=43 // pred_check
        %p1684 = pneg %p128
      $region46: #{encoder_forward.5} parent=43 // pred_check_branch
        %1686 = sbr.rel (%p1684) target = $region48
      $region47: #{encoder_forward.5} parent=43 // pred_region
        %p1687 = scmp.lt.s32.totalorder %s16, 1
        %s1688 = scalar_select %p1687, %s16, 1
        %s1689 = smul.addr %s1688, 3
        %s1690 = smul.addr %s1689, 8
        %s1691 = scalar_lea.vmem %s4, %s1690
      $region48: #{encoder_forward.5} parent=43 // pred_fallthru
        _
    $region44: #{encoder_forward.5} parent=5 // pred_fallthru
      _
  $region6: #{encoder_forward.5} parent=0 // loop_footer
    %s14 = sadd.s32 1, %s10
  $region7: #{encoder_forward.5} parent=0 // loop_footer_branch
    %9 = sbr.rel target = $region3
  $region8: #{encoder_forward.5} parent=0 // loop_exit
    _

// kernel: encoder_forward.6
$region0: #{encoder_forward.6}
  #allocation0 [shape = 'u32[]', space=smem, size = 0x4, offset = 0x4, fixed_abs, tag = 'smem constant byte address 0x4 - core index']
  #allocation1 [shape = 'u32[72,128]{1,0:T(1,128)}', space=vmem, size = 0x9000, scoped, tag = 'internal scratch']
  %s0 = inlined_call_operand.vmem [shape: f32[2,8,360], index: 0, kind: input, shape index: {}]
  %s1 = inlined_call_operand.vmem [shape: f32[2,8,72], index: 1, kind: output, shape index: {}]
  %s2 = sld [smem:[#allocation0]]
  $region37: #{encoder_forward.6} parent=0
    _
  %s4 = ssub.s32 1, %s2
  %s5 = scalar_select 0, %s4, %s2
  loop: start=0, step=1, limit=4
  $region2: #{encoder_forward.6} parent=0 // loop_pre_header
    _
  $region3: #{encoder_forward.6} parent=0 // loop_header
    %s7 = sphi 0, %s11
    %p8 = scmp.ge.s32.totalorder %s7, 4
    %s17 = sphi 0, %s19
    %s20 = sphi 0, %s17
    %s21 = sphi 0, %s20
    %s37 = sphi 0, %s21
    %s43 = sphi 0, %s45
    %s46 = sphi 0, %s43
    %s47 = sphi 0, %s46
    %s63 = sphi 0, %s47
  $region4: #{encoder_forward.6} parent=0 // loop_header_branch
    %10 = sbr.rel (%p8) target = $region8
  $region5: #{encoder_forward.6} parent=0 // loop_body
    %s12 = ssub.s32 %s7, 1
    %s13 = ssub.s32 %s7, 2
    %s14 = sadd.s32 %s7, 1
    %s15 = ssub.s32 %s7, %s14
    %p16 = scmp.eq.s32.totalorder %s15, 0
    %s18 = sadd.s32 %s17, 1
    %s19 = scalar_select %p16, %s17, %s18
    %p22 = pneg %p16
    %p23 = scmp.eq.s32.totalorder %s7, 1
    %p24 = por %p22, %p23
    %p25 = scmp.ne.s32.totalorder %s17, %s20
    %p26 = scmp.eq.s32.totalorder %s7, 0
    %p27 = por %p25, %p26
    %p28 = scmp.ne.s32.totalorder %s17, %s20
    %p29 = scmp.eq.s32.totalorder %s12, 1
    %p30 = por %p28, %p29
    %p31 = scmp.ne.s32.totalorder %s20, %s21
    %p32 = scmp.eq.s32.totalorder %s12, 0
    %p33 = por %p31, %p32
    %p34 = scmp.ne.s32.totalorder %s20, %s21
    %p35 = scmp.eq.s32.totalorder %s13, 1
    %p36 = por %p34, %p35
    %p38 = scmp.ne.s32.totalorder %s21, %s37
    %p39 = scmp.eq.s32.totalorder %s13, 0
    %p40 = por %p38, %p39
    %s41 = ssub.s32 %s7, %s14
    %p42 = scmp.eq.s32.totalorder %s41, 0
    %s44 = sadd.s32 %s43, 1
    %s45 = scalar_select %p42, %s43, %s44
    %p48 = pneg %p42
    %p49 = scmp.eq.s32.totalorder %s7, 1
    %p50 = por %p48, %p49
    %p51 = scmp.ne.s32.totalorder %s43, %s46
    %p52 = scmp.eq.s32.totalorder %s7, 0
    %p53 = por %p51, %p52
    %p54 = scmp.ne.s32.totalorder %s43, %s46
    %p55 = scmp.eq.s32.totalorder %s12, 1
    %p56 = por %p54, %p55
    %p57 = scmp.ne.s32.totalorder %s46, %s47
    %p58 = scmp.eq.s32.totalorder %s12, 0
    %p59 = por %p57, %p58
    %p60 = scmp.ne.s32.totalorder %s46, %s47
    %p61 = scmp.eq.s32.totalorder %s13, 1
    %p62 = por %p60, %p61
    %p64 = scmp.ne.s32.totalorder %s47, %s63
    %p65 = scmp.eq.s32.totalorder %s13, 0
    %p66 = por %p64, %p65
    %p67 = scmp.le.s32.totalorder 1, %s7
    %p68 = scmp.lt.s32.totalorder %s7, 3
    %p69 = pnand %p67, %p68
    %p70 = pneg %p69
    // Predicated region
    $region9: #{encoder_forward.6} parent=5 // pred_check
      _
    $region10: #{encoder_forward.6} parent=5 // pred_check_branch
      %72 = sbr.rel (%p69) target = $region12
    $region11: #{encoder_forward.6} parent=5 // pred_region
      %s73 = ssub.s32 %s7, 1
    $region12: #{encoder_forward.6} parent=5 // pred_fallthru
      _
    %p74 = scmp.lt.s32.totalorder %s7, 2
    // Predicated region
    $region13: #{encoder_forward.6} parent=5 // pred_check
      %p75 = pneg %p74
    $region14: #{encoder_forward.6} parent=5 // pred_check_branch
      %77 = sbr.rel (%p75) target = $region16
    $region15: #{encoder_forward.6} parent=5 // pred_region
      // Predicated region
      $region17: #{encoder_forward.6} parent=15 // pred_check
        %p78 = pneg %p27
      $region18: #{encoder_forward.6} parent=15 // pred_check_branch
        %80 = sbr.rel (%p78) target = $region20
      $region19: #{encoder_forward.6} parent=15 // pred_region
        %p81 = scmp.lt.s32.totalorder %s7, 1
        %s82 = scalar_select %p81, %s7, 1
        %s83 = smul.addr %s82, 3
        %s84 = smul.addr %s83, 8
        %s85 = scalar_lea.vmem %s0, %s84
      $region20: #{encoder_forward.6} parent=15 // pred_fallthru
        _
    $region16: #{encoder_forward.6} parent=5 // pred_fallthru
      _
    %p86 = scmp.le.s32.totalorder 1, %s7
    %p87 = scmp.lt.s32.totalorder %s7, 3
    %p88 = pnand %p86, %p87
    %p89 = pneg %p88
    // Predicated region
    $region21: #{encoder_forward.6} parent=5 // pred_check
      _
    $region22: #{encoder_forward.6} parent=5 // pred_check_branch
      %91 = sbr.rel (%p88) target = $region24
    $region23: #{encoder_forward.6} parent=5 // pred_region
      %s92 = ssub.s32 %s7, 1
      %p93 = scmp.lt.s32.totalorder %s12, 1
      %s94 = scalar_select %p93, %s12, 1
      %s95 = smul.addr %s94, 3
      %s96 = smul.addr %s95, 8
      %s97 = scalar_lea.vmem %s0, %s96
      %p98 = pneg %p33
      %p99 = pneg %p30
      %p100 = pneg %p59
      %p101 = pneg %p56
      %p102 = scmp.lt.s32.totalorder %s12, 1
      %s103 = scalar_select %p102, %s12, 1
      %s104 = smul.addr %s103, 8
      %s105 = scalar_lea.vmem %s1, %s104
      %p106 = scmp.lt.s32.totalorder %s12, 1
      %s107 = scalar_select %p106, %s12, 1
      %s108 = smul.addr %s107, 3
      %s109 = smul.addr %s108, 8
      %s110 = scalar_lea.vmem %s0, %s109
      %p111 = scmp.lt.s32.totalorder %s12, 1
      %s112 = scalar_select %p111, %s12, 1
      %s113 = smul.addr %s112, 8
      %s114 = scalar_lea.vmem %s1, %s113
      %v115 = vld [vmem:[%s110] sm:$0xff]
      %v116 = vld [vmem:[%s110 + $0x8] sm:$0xff]
      %v117 = vld [vmem:[%s110 + $0x10] sm:$0xff]
      %120 = vrot.lane.b32.xlu0 %v115, 38
      %v121 = vpop.permute.xlu0 %120
      %122 = vrot.lane.b32.xlu0 %v116, 38
      %v123 = vpop.permute.xlu0 %122
      %vm124 = vcmask 310272
      %v125 = vsel %vm124, %v121, %v123
      %v127 = vmax.f32 %v115, %v125
      %128 = vrot.lane.b32.xlu0 %v115, 127
      %v129 = vpop.permute.xlu0 %128
      %v131 = vmax.f32 %v127, %v129
      %132 = vrot.lane.b32.xlu0 %v116, 76
      %v133 = vpop.permute.xlu0 %132
      %v135 = vmax.f32 %v131, %v133
      %137 = vrot.lane.b32.xlu0 %v117, 114
      %v138 = vpop.permute.xlu0 %137
      %v140 = vmax.f32 %v135, %v138
      %141 = vrot.lane.b32.xlu0 %v116, 75
      %v142 = vpop.permute.xlu0 %141
      %v144 = vmax.f32 %v140, %v142
      %145 = vrot.lane.b32.xlu0 %v115, 119
      %v146 = vpop.permute.xlu0 %145
      %v148 = vmax.f32 %v144, %v146
      %149 = vrot.lane.b32.xlu0 %v115, 29
      %v150 = vpop.permute.xlu0 %149
      %151 = vrot.lane.b32.xlu0 %v116, 29
      %v152 = vpop.permute.xlu0 %151
      %vm153 = vcmask 236544
      %v154 = vsel %vm153, %v150, %v152
      %v156 = vmax.f32 %v148, %v154
      %157 = vrot.lane.b32.xlu0 %v115, 118
      %v158 = vpop.permute.xlu0 %157
      %v160 = vmax.f32 %v156, %v158
      %vm161 = vcmask 588800
      %162 = vst.msk [vmem:[%s114] sm:$0xff] %vm161, %v160
      %p163 = scmp.lt.s32.totalorder %s12, 1
      %s164 = scalar_select %p163, %s12, 1
      %s165 = smul.addr %s164, 8
      %s166 = scalar_lea.vmem %s1, %s165
      // Predicated region
      $region25: #{encoder_forward.6} parent=23 // pred_check
        %p167 = pneg %p56
      $region26: #{encoder_forward.6} parent=23 // pred_check_branch
        %169 = sbr.rel (%p167) target = $region28
      $region27: #{encoder_forward.6} parent=23 // pred_region
        _
      $region28: #{encoder_forward.6} parent=23 // pred_fallthru
        _
    $region24: #{encoder_forward.6} parent=5 // pred_fallthru
      _
    %p170 = scmp.le.s32.totalorder 2, %s7
    // Predicated region
    $region29: #{encoder_forward.6} parent=5 // pred_check
      %p171 = pneg %p170
    $region30: #{encoder_forward.6} parent=5 // pred_check_branch
      %173 = sbr.rel (%p171) target = $region32
    $region31: #{encoder_forward.6} parent=5 // pred_region
      %s174 = ssub.s32 %s7, 2
      // Predicated region
      $region33: #{encoder_forward.6} parent=31 // pred_check
        %p175 = pneg %p62
      $region34: #{encoder_forward.6} parent=31 // pred_check_branch
        %177 = sbr.rel (%p175) target = $region36
      $region35: #{encoder_forward.6} parent=31 // pred_region
        %p178 = scmp.lt.s32.totalorder %s13, 1
        %s179 = scalar_select %p178, %s13, 1
        %s180 = smul.addr %s179, 8
        %s181 = scalar_lea.vmem %s1, %s180
      $region36: #{encoder_forward.6} parent=31 // pred_fallthru
        _
    $region32: #{encoder_forward.6} parent=5 // pred_fallthru
      _
  $region6: #{encoder_forward.6} parent=0 // loop_footer
    %s11 = sadd.s32 1, %s7
  $region7: #{encoder_forward.6} parent=0 // loop_footer_branch
    %6 = sbr.rel target = $region3
  $region8: #{encoder_forward.6} parent=0 // loop_exit
    _

// kernel: encoder_forward.9
$region0: #{encoder_forward.9}
  #allocation0 [shape = 'u32[]', space=smem, size = 0x4, offset = 0x4, fixed_abs, tag = 'smem constant byte address 0x4 - core index']
  #allocation1 [shape = 'u32[72,128]{1,0:T(1,128)}', space=vmem, size = 0x9000, scoped, tag = 'internal scratch']
  %s0 = inlined_call_operand.vmem [shape: f32[2,8,4], index: 0, kind: input, shape index: {}]
  %s1 = inlined_call_operand.vmem [shape: f32[8,1], index: 1, kind: input, shape index: {}]
  %s2 = inlined_call_operand.vmem [shape: f32[8,1], index: 2, kind: input, shape index: {}]
  %s3 = inlined_call_operand.vmem [shape: bf16[8,8], index: 3, kind: input, shape index: {}]
  %s4 = inlined_call_operand.vmem [shape: f32[8,1], index: 4, kind: input, shape index: {}]
  %s5 = inlined_call_operand.vmem [shape: f32[8,1], index: 5, kind: input, shape index: {}]
  %s6 = inlined_call_operand.vmem [shape: bf16[4,72], index: 6, kind: input, shape index: {}]
  %s7 = inlined_call_operand.vmem [shape: f32[12,1], index: 7, kind: input, shape index: {}]
  %s8 = inlined_call_operand.vmem [shape: f32[12,1], index: 8, kind: input, shape index: {}]
  %s9 = inlined_call_operand.vmem [shape: bf16[8,12], index: 9, kind: input, shape index: {}]
  %s10 = inlined_call_operand.vmem [shape: f32[8,1], index: 10, kind: input, shape index: {}]
  %s11 = inlined_call_operand.vmem [shape: f32[8,1], index: 11, kind: input, shape index: {}]
  %s12 = inlined_call_operand.vmem [shape: bf16[4,72], index: 12, kind: input, shape index: {}]
  %s13 = inlined_call_operand.vmem [shape: f32[16,1], index: 13, kind: input, shape index: {}]
  %s14 = inlined_call_operand.vmem [shape: f32[16,1], index: 14, kind: input, shape index: {}]
  %s15 = inlined_call_operand.vmem [shape: f32[2,16,4], index: 15, kind: output, shape index: {}]
  %s16 = sld [smem:[#allocation0]]
  $region93: #{encoder_forward.9} parent=0
    _
  %s18 = ssub.s32 1, %s16
  %s19 = scalar_select 0, %s18, %s16
  loop: start=0, step=1, limit=4
  $region2: #{encoder_forward.9} parent=0 // loop_pre_header
    _
  $region3: #{encoder_forward.9} parent=0 // loop_header
    %s21 = sphi 0, %s25
    %p22 = scmp.ge.s32.totalorder %s21, 4
    %s31 = sphi 0, %s33
    %s34 = sphi 0, %s31
    %s35 = sphi 0, %s34
    %s51 = sphi 0, %s35
    %s55 = sphi 0, %s55
    %s57 = sphi 0, %s55
    %s58 = sphi 0, %s57
    %s72 = sphi 0, %s58
    %s76 = sphi 0, %s76
    %s78 = sphi 0, %s76
    %s79 = sphi 0, %s78
    %s93 = sphi 0, %s79
    %s97 = sphi 0, %s97
    %s99 = sphi 0, %s97
    %s100 = sphi 0, %s99
    %s114 = sphi 0, %s100
    %s118 = sphi 0, %s118
    %s120 = sphi 0, %s118
    %s121 = sphi 0, %s120
    %s135 = sphi 0, %s121
    %s139 = sphi 0, %s139
    %s141 = sphi 0, %s139
    %s142 = sphi 0, %s141
    %s156 = sphi 0, %s142
    %s160 = sphi 0, %s160
    %s162 = sphi 0, %s160
    %s163 = sphi 0, %s162
    %s177 = sphi 0, %s163
    %s181 = sphi 0, %s181
    %s183 = sphi 0, %s181
    %s184 = sphi 0, %s183
    %s198 = sphi 0, %s184
    %s202 = sphi 0, %s202
    %s204 = sphi 0, %s202
    %s205 = sphi 0, %s204
    %s219 = sphi 0, %s205
    %s223 = sphi 0, %s223
    %s225 = sphi 0, %s223
    %s226 = sphi 0, %s225
    %s240 = sphi 0, %s226
    %s244 = sphi 0, %s244
    %s246 = sphi 0, %s244
    %s247 = sphi 0, %s246
    %s261 = sphi 0, %s247
    %s265 = sphi 0, %s265
    %s267 = sphi 0, %s265
    %s268 = sphi 0, %s267
    %s282 = sphi 0, %s268
    %s286 = sphi 0, %s286
    %s288 = sphi 0, %s286
    %s289 = sphi 0, %s288
    %s303 = sphi 0, %s289
    %s307 = sphi 0, %s307
    %s309 = sphi 0, %s307
    %s310 = sphi 0, %s309
    %s324 = sphi 0, %s310
    %s328 = sphi 0, %s328
    %s330 = sphi 0, %s328
    %s331 = sphi 0, %s330
    %s345 = sphi 0, %s331
    %s351 = sphi 0, %s353
    %s354 = sphi 0, %s351
    %s355 = sphi 0, %s354
    %s371 = sphi 0, %s355
  $region4: #{encoder_forward.9} parent=0 // loop_header_branch
    %24 = sbr.rel (%p22) target = $region8
  $region5: #{encoder_forward.9} parent=0 // loop_body
    %s26 = ssub.s32 %s21, 1
    %s27 = ssub.s32 %s21, 2
    %s28 = sadd.s32 %s21, 1
    %s29 = ssub.s32 %s21, %s28
    %p30 = scmp.eq.s32.totalorder %s29, 0
    %s32 = sadd.s32 %s31, 1
    %s33 = scalar_select %p30, %s31, %s32
    %p36 = pneg %p30
    %p37 = scmp.eq.s32.totalorder %s21, 1
    %p38 = por %p36, %p37
    %p39 = scmp.ne.s32.totalorder %s31, %s34
    %p40 = scmp.eq.s32.totalorder %s21, 0
    %p41 = por %p39, %p40
    %p42 = scmp.ne.s32.totalorder %s31, %s34
    %p43 = scmp.eq.s32.totalorder %s26, 1
    %p44 = por %p42, %p43
    %p45 = scmp.ne.s32.totalorder %s34, %s35
    %p46 = scmp.eq.s32.totalorder %s26, 0
    %p47 = por %p45, %p46
    %p48 = scmp.ne.s32.totalorder %s34, %s35
    %p49 = scmp.eq.s32.totalorder %s27, 1
    %p50 = por %p48, %p49
    %p52 = scmp.ne.s32.totalorder %s35, %s51
    %p53 = scmp.eq.s32.totalorder %s27, 0
    %p54 = por %p52, %p53
    %s56 = sadd.s32 %s55, 1
    %p59 = scmp.eq.s32.totalorder %s21, 1
    %p60 = scmp.ne.s32.totalorder %s55, %s57
    %p61 = scmp.eq.s32.totalorder %s21, 0
    %p62 = por %p60, %p61
    %p63 = scmp.ne.s32.totalorder %s55, %s57
    %p64 = scmp.eq.s32.totalorder %s26, 1
    %p65 = por %p63, %p64
    %p66 = scmp.ne.s32.totalorder %s57, %s58
    %p67 = scmp.eq.s32.totalorder %s26, 0
    %p68 = por %p66, %p67
    %p69 = scmp.ne.s32.totalorder %s57, %s58
    %p70 = scmp.eq.s32.totalorder %s27, 1
    %p71 = por %p69, %p70
    %p73 = scmp.ne.s32.totalorder %s58, %s72
    %p74 = scmp.eq.s32.totalorder %s27, 0
    %p75 = por %p73, %p74
    %s77 = sadd.s32 %s76, 1
    %p80 = scmp.eq.s32.totalorder %s21, 1
    %p81 = scmp.ne.s32.totalorder %s76, %s78
    %p82 = scmp.eq.s32.totalorder %s21, 0
    %p83 = por %p81, %p82
    %p84 = scmp.ne.s32.totalorder %s76, %s78
    %p85 = scmp.eq.s32.totalorder %s26, 1
    %p86 = por %p84, %p85
    %p87 = scmp.ne.s32.totalorder %s78, %s79
    %p88 = scmp.eq.s32.totalorder %s26, 0
    %p89 = por %p87, %p88
    %p90 = scmp.ne.s32.totalorder %s78, %s79
    %p91 = scmp.eq.s32.totalorder %s27, 1
    %p92 = por %p90, %p91
    %p94 = scmp.ne.s32.totalorder %s79, %s93
    %p95 = scmp.eq.s32.totalorder %s27, 0
    %p96 = por %p94, %p95
    %s98 = sadd.s32 %s97, 1
    %p101 = scmp.eq.s32.totalorder %s21, 1
    %p102 = scmp.ne.s32.totalorder %s97, %s99
    %p103 = scmp.eq.s32.totalorder %s21, 0
    %p104 = por %p102, %p103
    %p105 = scmp.ne.s32.totalorder %s97, %s99
    %p106 = scmp.eq.s32.totalorder %s26, 1
    %p107 = por %p105, %p106
    %p108 = scmp.ne.s32.totalorder %s99, %s100
    %p109 = scmp.eq.s32.totalorder %s26, 0
    %p110 = por %p108, %p109
    %p111 = scmp.ne.s32.totalorder %s99, %s100
    %p112 = scmp.eq.s32.totalorder %s27, 1
    %p113 = por %p111, %p112
    %p115 = scmp.ne.s32.totalorder %s100, %s114
    %p116 = scmp.eq.s32.totalorder %s27, 0
    %p117 = por %p115, %p116
    %s119 = sadd.s32 %s118, 1
    %p122 = scmp.eq.s32.totalorder %s21, 1
    %p123 = scmp.ne.s32.totalorder %s118, %s120
    %p124 = scmp.eq.s32.totalorder %s21, 0
    %p125 = por %p123, %p124
    %p126 = scmp.ne.s32.totalorder %s118, %s120
    %p127 = scmp.eq.s32.totalorder %s26, 1
    %p128 = por %p126, %p127
    %p129 = scmp.ne.s32.totalorder %s120, %s121
    %p130 = scmp.eq.s32.totalorder %s26, 0
    %p131 = por %p129, %p130
    %p132 = scmp.ne.s32.totalorder %s120, %s121
    %p133 = scmp.eq.s32.totalorder %s27, 1
    %p134 = por %p132, %p133
    %p136 = scmp.ne.s32.totalorder %s121, %s135
    %p137 = scmp.eq.s32.totalorder %s27, 0
    %p138 = por %p136, %p137
    %s140 = sadd.s32 %s139, 1
    %p143 = scmp.eq.s32.totalorder %s21, 1
    %p144 = scmp.ne.s32.totalorder %s139, %s141
    %p145 = scmp.eq.s32.totalorder %s21, 0
    %p146 = por %p144, %p145
    %p147 = scmp.ne.s32.totalorder %s139, %s141
    %p148 = scmp.eq.s32.totalorder %s26, 1
    %p149 = por %p147, %p148
    %p150 = scmp.ne.s32.totalorder %s141, %s142
    %p151 = scmp.eq.s32.totalorder %s26, 0
    %p152 = por %p150, %p151
    %p153 = scmp.ne.s32.totalorder %s141, %s142
    %p154 = scmp.eq.s32.totalorder %s27, 1
    %p155 = por %p153, %p154
    %p157 = scmp.ne.s32.totalorder %s142, %s156
    %p158 = scmp.eq.s32.totalorder %s27, 0
    %p159 = por %p157, %p158
    %s161 = sadd.s32 %s160, 1
    %p164 = scmp.eq.s32.totalorder %s21, 1
    %p165 = scmp.ne.s32.totalorder %s160, %s162
    %p166 = scmp.eq.s32.totalorder %s21, 0
    %p167 = por %p165, %p166
    %p168 = scmp.ne.s32.totalorder %s160, %s162
    %p169 = scmp.eq.s32.totalorder %s26, 1
    %p170 = por %p168, %p169
    %p171 = scmp.ne.s32.totalorder %s162, %s163
    %p172 = scmp.eq.s32.totalorder %s26, 0
    %p173 = por %p171, %p172
    %p174 = scmp.ne.s32.totalorder %s162, %s163
    %p175 = scmp.eq.s32.totalorder %s27, 1
    %p176 = por %p174, %p175
    %p178 = scmp.ne.s32.totalorder %s163, %s177
    %p179 = scmp.eq.s32.totalorder %s27, 0
    %p180 = por %p178, %p179
    %s182 = sadd.s32 %s181, 1
    %p185 = scmp.eq.s32.totalorder %s21, 1
    %p186 = scmp.ne.s32.totalorder %s181, %s183
    %p187 = scmp.eq.s32.totalorder %s21, 0
    %p188 = por %p186, %p187
    %p189 = scmp.ne.s32.totalorder %s181, %s183
    %p190 = scmp.eq.s32.totalorder %s26, 1
    %p191 = por %p189, %p190
    %p192 = scmp.ne.s32.totalorder %s183, %s184
    %p193 = scmp.eq.s32.totalorder %s26, 0
    %p194 = por %p192, %p193
    %p195 = scmp.ne.s32.totalorder %s183, %s184
    %p196 = scmp.eq.s32.totalorder %s27, 1
    %p197 = por %p195, %p196
    %p199 = scmp.ne.s32.totalorder %s184, %s198
    %p200 = scmp.eq.s32.totalorder %s27, 0
    %p201 = por %p199, %p200
    %s203 = sadd.s32 %s202, 1
    %p206 = scmp.eq.s32.totalorder %s21, 1
    %p207 = scmp.ne.s32.totalorder %s202, %s204
    %p208 = scmp.eq.s32.totalorder %s21, 0
    %p209 = por %p207, %p208
    %p210 = scmp.ne.s32.totalorder %s202, %s204
    %p211 = scmp.eq.s32.totalorder %s26, 1
    %p212 = por %p210, %p211
    %p213 = scmp.ne.s32.totalorder %s204, %s205
    %p214 = scmp.eq.s32.totalorder %s26, 0
    %p215 = por %p213, %p214
    %p216 = scmp.ne.s32.totalorder %s204, %s205
    %p217 = scmp.eq.s32.totalorder %s27, 1
    %p218 = por %p216, %p217
    %p220 = scmp.ne.s32.totalorder %s205, %s219
    %p221 = scmp.eq.s32.totalorder %s27, 0
    %p222 = por %p220, %p221
    %s224 = sadd.s32 %s223, 1
    %p227 = scmp.eq.s32.totalorder %s21, 1
    %p228 = scmp.ne.s32.totalorder %s223, %s225
    %p229 = scmp.eq.s32.totalorder %s21, 0
    %p230 = por %p228, %p229
    %p231 = scmp.ne.s32.totalorder %s223, %s225
    %p232 = scmp.eq.s32.totalorder %s26, 1
    %p233 = por %p231, %p232
    %p234 = scmp.ne.s32.totalorder %s225, %s226
    %p235 = scmp.eq.s32.totalorder %s26, 0
    %p236 = por %p234, %p235
    %p237 = scmp.ne.s32.totalorder %s225, %s226
    %p238 = scmp.eq.s32.totalorder %s27, 1
    %p239 = por %p237, %p238
    %p241 = scmp.ne.s32.totalorder %s226, %s240
    %p242 = scmp.eq.s32.totalorder %s27, 0
    %p243 = por %p241, %p242
    %s245 = sadd.s32 %s244, 1
    %p248 = scmp.eq.s32.totalorder %s21, 1
    %p249 = scmp.ne.s32.totalorder %s244, %s246
    %p250 = scmp.eq.s32.totalorder %s21, 0
    %p251 = por %p249, %p250
    %p252 = scmp.ne.s32.totalorder %s244, %s246
    %p253 = scmp.eq.s32.totalorder %s26, 1
    %p254 = por %p252, %p253
    %p255 = scmp.ne.s32.totalorder %s246, %s247
    %p256 = scmp.eq.s32.totalorder %s26, 0
    %p257 = por %p255, %p256
    %p258 = scmp.ne.s32.totalorder %s246, %s247
    %p259 = scmp.eq.s32.totalorder %s27, 1
    %p260 = por %p258, %p259
    %p262 = scmp.ne.s32.totalorder %s247, %s261
    %p263 = scmp.eq.s32.totalorder %s27, 0
    %p264 = por %p262, %p263
    %s266 = sadd.s32 %s265, 1
    %p269 = scmp.eq.s32.totalorder %s21, 1
    %p270 = scmp.ne.s32.totalorder %s265, %s267
    %p271 = scmp.eq.s32.totalorder %s21, 0
    %p272 = por %p270, %p271
    %p273 = scmp.ne.s32.totalorder %s265, %s267
    %p274 = scmp.eq.s32.totalorder %s26, 1
    %p275 = por %p273, %p274
    %p276 = scmp.ne.s32.totalorder %s267, %s268
    %p277 = scmp.eq.s32.totalorder %s26, 0
    %p278 = por %p276, %p277
    %p279 = scmp.ne.s32.totalorder %s267, %s268
    %p280 = scmp.eq.s32.totalorder %s27, 1
    %p281 = por %p279, %p280
    %p283 = scmp.ne.s32.totalorder %s268, %s282
    %p284 = scmp.eq.s32.totalorder %s27, 0
    %p285 = por %p283, %p284
    %s287 = sadd.s32 %s286, 1
    %p290 = scmp.eq.s32.totalorder %s21, 1
    %p291 = scmp.ne.s32.totalorder %s286, %s288
    %p292 = scmp.eq.s32.totalorder %s21, 0
    %p293 = por %p291, %p292
    %p294 = scmp.ne.s32.totalorder %s286, %s288
    %p295 = scmp.eq.s32.totalorder %s26, 1
    %p296 = por %p294, %p295
    %p297 = scmp.ne.s32.totalorder %s288, %s289
    %p298 = scmp.eq.s32.totalorder %s26, 0
    %p299 = por %p297, %p298
    %p300 = scmp.ne.s32.totalorder %s288, %s289
    %p301 = scmp.eq.s32.totalorder %s27, 1
    %p302 = por %p300, %p301
    %p304 = scmp.ne.s32.totalorder %s289, %s303
    %p305 = scmp.eq.s32.totalorder %s27, 0
    %p306 = por %p304, %p305
    %s308 = sadd.s32 %s307, 1
    %p311 = scmp.eq.s32.totalorder %s21, 1
    %p312 = scmp.ne.s32.totalorder %s307, %s309
    %p313 = scmp.eq.s32.totalorder %s21, 0
    %p314 = por %p312, %p313
    %p315 = scmp.ne.s32.totalorder %s307, %s309
    %p316 = scmp.eq.s32.totalorder %s26, 1
    %p317 = por %p315, %p316
    %p318 = scmp.ne.s32.totalorder %s309, %s310
    %p319 = scmp.eq.s32.totalorder %s26, 0
    %p320 = por %p318, %p319
    %p321 = scmp.ne.s32.totalorder %s309, %s310
    %p322 = scmp.eq.s32.totalorder %s27, 1
    %p323 = por %p321, %p322
    %p325 = scmp.ne.s32.totalorder %s310, %s324
    %p326 = scmp.eq.s32.totalorder %s27, 0
    %p327 = por %p325, %p326
    %s329 = sadd.s32 %s328, 1
    %p332 = scmp.eq.s32.totalorder %s21, 1
    %p333 = scmp.ne.s32.totalorder %s328, %s330
    %p334 = scmp.eq.s32.totalorder %s21, 0
    %p335 = por %p333, %p334
    %p336 = scmp.ne.s32.totalorder %s328, %s330
    %p337 = scmp.eq.s32.totalorder %s26, 1
    %p338 = por %p336, %p337
    %p339 = scmp.ne.s32.totalorder %s330, %s331
    %p340 = scmp.eq.s32.totalorder %s26, 0
    %p341 = por %p339, %p340
    %p342 = scmp.ne.s32.totalorder %s330, %s331
    %p343 = scmp.eq.s32.totalorder %s27, 1
    %p344 = por %p342, %p343
    %p346 = scmp.ne.s32.totalorder %s331, %s345
    %p347 = scmp.eq.s32.totalorder %s27, 0
    %p348 = por %p346, %p347
    %s349 = ssub.s32 %s21, %s28
    %p350 = scmp.eq.s32.totalorder %s349, 0
    %s352 = sadd.s32 %s351, 1
    %s353 = scalar_select %p350, %s351, %s352
    %p356 = pneg %p350
    %p357 = scmp.eq.s32.totalorder %s21, 1
    %p358 = por %p356, %p357
    %p359 = scmp.ne.s32.totalorder %s351, %s354
    %p360 = scmp.eq.s32.totalorder %s21, 0
    %p361 = por %p359, %p360
    %p362 = scmp.ne.s32.totalorder %s351, %s354
    %p363 = scmp.eq.s32.totalorder %s26, 1
    %p364 = por %p362, %p363
    %p365 = scmp.ne.s32.totalorder %s354, %s355
    %p366 = scmp.eq.s32.totalorder %s26, 0
    %p367 = por %p365, %p366
    %p368 = scmp.ne.s32.totalorder %s354, %s355
    %p369 = scmp.eq.s32.totalorder %s27, 1
    %p370 = por %p368, %p369
    %p372 = scmp.ne.s32.totalorder %s355, %s371
    %p373 = scmp.eq.s32.totalorder %s27, 0
    %p374 = por %p372, %p373
    %p375 = scmp.le.s32.totalorder 1, %s21
    %p376 = scmp.lt.s32.totalorder %s21, 3
    %p377 = pnand %p375, %p376
    %p378 = pneg %p377
    // Predicated region
    $region9: #{encoder_forward.9} parent=5 // pred_check
      _
    $region10: #{encoder_forward.9} parent=5 // pred_check_branch
      %380 = sbr.rel (%p377) target = $region12
    $region11: #{encoder_forward.9} parent=5 // pred_region
      %s381 = ssub.s32 %s21, 1
      // Predicated region
      $region13: #{encoder_forward.9} parent=11 // pred_check
        %p382 = pneg %p68
      $region14: #{encoder_forward.9} parent=11 // pred_check_branch
        %384 = sbr.rel (%p382) target = $region16
      $region15: #{encoder_forward.9} parent=11 // pred_region
        _
      $region16: #{encoder_forward.9} parent=11 // pred_fallthru
        _
      // Predicated region
      $region17: #{encoder_forward.9} parent=11 // pred_check
        %p385 = pneg %p89
      $region18: #{encoder_forward.9} parent=11 // pred_check_branch
        %387 = sbr.rel (%p385) target = $region20
      $region19: #{encoder_forward.9} parent=11 // pred_region
        _
      $region20: #{encoder_forward.9} parent=11 // pred_fallthru
        _
      // Predicated region
      $region21: #{encoder_forward.9} parent=11 // pred_check
        %p388 = pneg %p110
      $region22: #{encoder_forward.9} parent=11 // pred_check_branch
        %390 = sbr.rel (%p388) target = $region24
      $region23: #{encoder_forward.9} parent=11 // pred_region
        _
      $region24: #{encoder_forward.9} parent=11 // pred_fallthru
        _
      // Predicated region
      $region25: #{encoder_forward.9} parent=11 // pred_check
        %p391 = pneg %p131
      $region26: #{encoder_forward.9} parent=11 // pred_check_branch
        %393 = sbr.rel (%p391) target = $region28
      $region27: #{encoder_forward.9} parent=11 // pred_region
        _
      $region28: #{encoder_forward.9} parent=11 // pred_fallthru
        _
      // Predicated region
      $region29: #{encoder_forward.9} parent=11 // pred_check
        %p394 = pneg %p152
      $region30: #{encoder_forward.9} parent=11 // pred_check_branch
        %396 = sbr.rel (%p394) target = $region32
      $region31: #{encoder_forward.9} parent=11 // pred_region
        _
      $region32: #{encoder_forward.9} parent=11 // pred_fallthru
        _
      // Predicated region
      $region33: #{encoder_forward.9} parent=11 // pred_check
        %p397 = pneg %p173
      $region34: #{encoder_forward.9} parent=11 // pred_check_branch
        %399 = sbr.rel (%p397) target = $region36
      $region35: #{encoder_forward.9} parent=11 // pred_region
        _
      $region36: #{encoder_forward.9} parent=11 // pred_fallthru
        _
      // Predicated region
      $region37: #{encoder_forward.9} parent=11 // pred_check
        %p400 = pneg %p194
      $region38: #{encoder_forward.9} parent=11 // pred_check_branch
        %402 = sbr.rel (%p400) target = $region40
      $region39: #{encoder_forward.9} parent=11 // pred_region
        _
      $region40: #{encoder_forward.9} parent=11 // pred_fallthru
        _
      // Predicated region
      $region41: #{encoder_forward.9} parent=11 // pred_check
        %p403 = pneg %p215
      $region42: #{encoder_forward.9} parent=11 // pred_check_branch
        %405 = sbr.rel (%p403) target = $region44
      $region43: #{encoder_forward.9} parent=11 // pred_region
        _
      $region44: #{encoder_forward.9} parent=11 // pred_fallthru
        _
      // Predicated region
      $region45: #{encoder_forward.9} parent=11 // pred_check
        %p406 = pneg %p236
      $region46: #{encoder_forward.9} parent=11 // pred_check_branch
        %408 = sbr.rel (%p406) target = $region48
      $region47: #{encoder_forward.9} parent=11 // pred_region
        _
      $region48: #{encoder_forward.9} parent=11 // pred_fallthru
        _
      // Predicated region
      $region49: #{encoder_forward.9} parent=11 // pred_check
        %p409 = pneg %p257
      $region50: #{encoder_forward.9} parent=11 // pred_check_branch
        %411 = sbr.rel (%p409) target = $region52
      $region51: #{encoder_forward.9} parent=11 // pred_region
        _
      $region52: #{encoder_forward.9} parent=11 // pred_fallthru
        _
      // Predicated region
      $region53: #{encoder_forward.9} parent=11 // pred_check
        %p412 = pneg %p278
      $region54: #{encoder_forward.9} parent=11 // pred_check_branch
        %414 = sbr.rel (%p412) target = $region56
      $region55: #{encoder_forward.9} parent=11 // pred_region
        _
      $region56: #{encoder_forward.9} parent=11 // pred_fallthru
        _
      // Predicated region
      $region57: #{encoder_forward.9} parent=11 // pred_check
        %p415 = pneg %p299
      $region58: #{encoder_forward.9} parent=11 // pred_check_branch
        %417 = sbr.rel (%p415) target = $region60
      $region59: #{encoder_forward.9} parent=11 // pred_region
        _
      $region60: #{encoder_forward.9} parent=11 // pred_fallthru
        _
      // Predicated region
      $region61: #{encoder_forward.9} parent=11 // pred_check
        %p418 = pneg %p320
      $region62: #{encoder_forward.9} parent=11 // pred_check_branch
        %420 = sbr.rel (%p418) target = $region64
      $region63: #{encoder_forward.9} parent=11 // pred_region
        _
      $region64: #{encoder_forward.9} parent=11 // pred_fallthru
        _
      // Predicated region
      $region65: #{encoder_forward.9} parent=11 // pred_check
        %p421 = pneg %p341
      $region66: #{encoder_forward.9} parent=11 // pred_check_branch
        %423 = sbr.rel (%p421) target = $region68
      $region67: #{encoder_forward.9} parent=11 // pred_region
        _
      $region68: #{encoder_forward.9} parent=11 // pred_fallthru
        _
    $region12: #{encoder_forward.9} parent=5 // pred_fallthru
      _
    %p424 = scmp.lt.s32.totalorder %s21, 2
    // Predicated region
    $region69: #{encoder_forward.9} parent=5 // pred_check
      %p425 = pneg %p424
    $region70: #{encoder_forward.9} parent=5 // pred_check_branch
      %427 = sbr.rel (%p425) target = $region72
    $region71: #{encoder_forward.9} parent=5 // pred_region
      // Predicated region
      $region73: #{encoder_forward.9} parent=71 // pred_check
        %p428 = pneg %p41
      $region74: #{encoder_forward.9} parent=71 // pred_check_branch
        %430 = sbr.rel (%p428) target = $region76
      $region75: #{encoder_forward.9} parent=71 // pred_region
        %p431 = scmp.lt.s32.totalorder %s21, 1
        %s432 = scalar_select %p431, %s21, 1
        %s433 = smul.addr %s432, 8
        %s434 = scalar_lea.vmem %s0, %s433
      $region76: #{encoder_forward.9} parent=71 // pred_fallthru
        _
    $region72: #{encoder_forward.9} parent=5 // pred_fallthru
      _
    %p435 = scmp.le.s32.totalorder 1, %s21
    %p436 = scmp.lt.s32.totalorder %s21, 3
    %p437 = pnand %p435, %p436
    %p438 = pneg %p437
    // Predicated region
    $region77: #{encoder_forward.9} parent=5 // pred_check
      _
    $region78: #{encoder_forward.9} parent=5 // pred_check_branch
      %440 = sbr.rel (%p437) target = $region80
    $region79: #{encoder_forward.9} parent=5 // pred_region
      %s441 = ssub.s32 %s21, 1
      %p442 = scmp.lt.s32.totalorder %s26, 1
      %s443 = scalar_select %p442, %s26, 1
      %s444 = smul.addr %s443, 8
      %s445 = scalar_lea.vmem %s0, %s444
      %p446 = pneg %p47
      %p447 = pneg %p44
      %p448 = pneg %p68
      %p449 = pneg %p65
      %p450 = pneg %p89
      %p451 = pneg %p86
      %p452 = pneg %p110
      %p453 = pneg %p107
      %p454 = pneg %p131
      %p455 = pneg %p128
      %p456 = pneg %p152
      %p457 = pneg %p149
      %p458 = pneg %p173
      %p459 = pneg %p170
      %p460 = pneg %p194
      %p461 = pneg %p191
      %p462 = pneg %p215
      %p463 = pneg %p212
      %p464 = pneg %p236
      %p465 = pneg %p233
      %p466 = pneg %p257
      %p467 = pneg %p254
      %p468 = pneg %p278
      %p469 = pneg %p275
      %p470 = pneg %p299
      %p471 = pneg %p296
      %p472 = pneg %p320
      %p473 = pneg %p317
      %p474 = pneg %p341
      %p475 = pneg %p338
      %p476 = pneg %p367
      %p477 = pneg %p364
      %p478 = scmp.lt.s32.totalorder %s26, 1
      %s479 = scalar_select %p478, %s26, 1
      %s480 = smul.addr %s479, 2
      %s481 = smul.addr %s480, 8
      %s482 = scalar_lea.vmem %s15, %s481
      %p483 = scmp.lt.s32.totalorder %s26, 1
      %s484 = scalar_select %p483, %s26, 1
      %s485 = smul.addr %s484, 8
      %s486 = scalar_lea.vmem %s0, %s485
      %p487 = scmp.lt.s32.totalorder %s26, 1
      %s488 = scalar_select %p487, %s26, 1
      %s489 = smul.addr %s488, 2
      %s490 = smul.addr %s489, 8
      %s491 = scalar_lea.vmem %s15, %s490
      %v493 = vld [vmem:[%s486] sm:$0xff]
      %v494 = vld [vmem:[%s1] sm:$0xff]
      %496 = vset.pattern.permute.xlu0 0
      %497 = vperm.xlu0 %496, %v494
      %v498 = vpop.permute.xlu0 %497
      %v500 = vmul.f32 %v493, %v498
      %v501 = vld [vmem:[%s2] sm:$0xff]
      %503 = vset.pattern.permute.xlu0 0
      %504 = vperm.xlu0 %503, %v501
      %v505 = vpop.permute.xlu0 %504
      %v507 = vadd.f32 %v500, %v505
      %v508 = vmax.f32 %v507, 0.0
      %v509 = vld [vmem:[%s3] sm:$0xf]
      %v510 = vpack.c.bf16 %v508, %v508
      %vm511 = vcmask 64512
      %v513 = vsel %vm511, %v509, 0
      %vm515 = vcmask 1043456
      %v517 = vsel %vm515, %v510, 0
      %519 = vmatpush.bf16.msra.mxu0 0
      %520 = vmatpush.bf16.msra.mxu0 0
      %521 = vmatpush.bf16.msra.mxu0 0
      %522 = vmatpush.bf16.msra.mxu0 0
      %523 = vmatpush.bf16.msra.mxu0 0
      %524 = vmatpush.bf16.msra.mxu0 0
      %525 = vmatpush.bf16.msra.mxu0 0
      %526 = vmatpush.bf16.msra.mxu0 %v517
      %527 = vmatmul.bf16.gmra.mxu0 %v513
      %v528 = vpop.f32.mrf.mxu0
      %v529 = vadd.f32 0.0, %v528
      %v530 = vpop.f32.mrf.mxu0
      %531 = vdwg.mxu0
      %v532 = vld [vmem:[%s4] sm:$0xff]
      %534 = vset.pattern.permute.xlu0 0
      %535 = vperm.xlu0 %534, %v532
      %v536 = vpop.permute.xlu0 %535
      %v538 = vmul.f32 %v529, %v536
      %v539 = vld [vmem:[%s5] sm:$0xff]
      %541 = vset.pattern.permute.xlu0 0
      %542 = vperm.xlu0 %541, %v539
      %v543 = vpop.permute.xlu0 %542
      %v545 = vadd.f32 %v538, %v543
      %v546 = vmax.f32 %v545, 0.0
      %v547 = vlaneseq
      %v548 = vand.u32 %v547, 127
      %vm549 = vcmp.lt.s32.totalorder %v548, 0
      %v550 = vsub.s32 0, %v548
      %v551 = vsel %vm549, %v550, %v548
      %v552 = vshrl.u32 %v551, 1
      %v553 = vand.u32 %v551, 1
      %v554 = vsub.s32 0, %v553
      %v555 = vsel %vm549, %v554, %v553
      %vm556 = vcmp.ne.s32.totalorder %v555, 0
      %vm557 = vcmp.lt.s32.totalorder %v555, 0
      %vm558 = vmand %vm557, %vm556
      %v559 = vadd.s32 %v555, 2
      %v560 = vsel %vm558, %v559, %v555
      %vm561 = vcmp.ge.s32.totalorder %v560, 1
      %vm562 = vcmp.le.s32.totalorder %v560, 0
      %564 = vrot.lane.b32.xlu0 %v546, 3
      %v565 = vpop.permute.xlu0 %564
      %vm567 = vcmask 23552
      %v568 = vsel %vm567, 0.0, %v565
      %vm569 = vcmask 56320
      %v570 = vsel %vm569, %v568, 0.0
      %v571 = vsel %vm561, 1, 0
      %vm572 = vcmp.eq.s32.totalorder %v571, 1
      %v573 = vsel %vm572, %v570, 0.0
      %v574 = vsel %vm562, 1, 0
      %vm575 = vcmp.eq.s32.totalorder %v574, 1
      %577 = vrot.lane.b32.xlu0 %v570, 126
      %v578 = vpop.permute.xlu0 %577
      %v580 = vsel %vm575, %v578, 0.0
      %v581 = vsel %vm572, %v578, 0.0
      %582 = vrot.lane.b32.xlu0 %v570, 124
      %v583 = vpop.permute.xlu0 %582
      %v585 = vsel %vm575, %v583, 0.0
      %v586 = vsel %vm572, %v583, 0.0
      %587 = vrot.lane.b32.xlu0 %v570, 122
      %v588 = vpop.permute.xlu0 %587
      %v590 = vsel %vm575, %v588, 0.0
      %591 = vrot.lane.b32.xlu0 %v570, 127
      %v592 = vpop.permute.xlu0 %591
      %594 = vrot.lane.b32.xlu0 %v570, 125
      %v595 = vpop.permute.xlu0 %594
      %597 = vrot.lane.b32.xlu0 %v570, 123
      %v598 = vpop.permute.xlu0 %597
      %v600 = vpack.c.bf16 %v592, %v573
      %v601 = vpack.c.bf16 %v581, %v580
      %v602 = vpack.c.bf16 %v585, %v595
      %v603 = vpack.c.bf16 %v598, %v586
      %v604 = vpack.c.bf16 %v590, %v590
      %v605 = vld [vmem:[%s6] sm:$0x3]
      %vm606 = vcmask 588800
      %v608 = vsel %vm606, %v605, 0
      %v611 = vsel %vm515, %v604, 0
      %613 = vmatpush.bf16.msra.mxu0 0
      %614 = vmatpush.bf16.msra.mxu0 0
      %615 = vmatpush.bf16.msra.mxu0 0
      %616 = vmatpush.bf16.msra.mxu0 %v611
      %617 = vmatpush.bf16.msra.mxu0 %v603
      %618 = vmatpush.bf16.msra.mxu0 %v602
      %619 = vmatpush.bf16.msra.mxu0 %v601
      %620 = vmatpush.bf16.msra.mxu0 %v600
      %621 = vmatmul.bf16.gmra.mxu0 %v608
      %v622 = vpop.f32.mrf.mxu0
      %v623 = vadd.f32 0.0, %v622
      %v624 = vpop.f32.mrf.mxu0
      %625 = vdwg.mxu0
      %v626 = vld [vmem:[%s7] sm:$0xff]
      %v627 = vld [vmem:[%s7 + $0x8] sm:$0xf]
      %629 = vset.pattern.permute.xlu0 0
      %630 = vperm.xlu0 %629, %v626
      %v631 = vpop.permute.xlu0 %630
      %634 = vset.pattern.permute.xlu0 0
      %635 = vperm.xlu0 %634, %v627
      %v636 = vpop.permute.xlu0 %635
      %v638 = vmul.f32 %v493, %v631
      %v639 = vmul.f32 %v623, %v636
      %v640 = vld [vmem:[%s8] sm:$0xff]
      %v641 = vld [vmem:[%s8 + $0x8] sm:$0xf]
      %643 = vset.pattern.permute.xlu0 0
      %644 = vperm.xlu0 %643, %v640
      %v645 = vpop.permute.xlu0 %644
      %648 = vset.pattern.permute.xlu0 0
      %649 = vperm.xlu0 %648, %v641
      %v650 = vpop.permute.xlu0 %649
      %v652 = vadd.f32 %v638, %v645
      %v653 = vadd.f32 %v639, %v650
      %v654 = vmax.f32 %v652, 0.0
      %v655 = vmax.f32 %v653, 0.0
      %v656 = vld [vmem:[%s9] sm:$0xf]
      %v657 = vpack.c.bf16 %v655, %v654
      %vm658 = vcmask 97280
      %v660 = vsel %vm658, %v656, 0
      %vm662 = vcmask 1045504
      %v664 = vsel %vm662, %v657, 0
      %666 = vmatpush.bf16.msra.mxu0 0
      %667 = vmatpush.bf16.msra.mxu0 0
      %668 = vmatpush.bf16.msra.mxu0 0
      %669 = vmatpush.bf16.msra.mxu0 0
      %670 = vmatpush.bf16.msra.mxu0 0
      %671 = vmatpush.bf16.msra.mxu0 0
      %672 = vmatpush.bf16.msra.mxu0 0
      %673 = vmatpush.bf16.msra.mxu0 %v664
      %674 = vmatmul.bf16.gmra.mxu0 %v660
      %v675 = vpop.f32.mrf.mxu0
      %v676 = vadd.f32 0.0, %v675
      %v677 = vpop.f32.mrf.mxu0
      %678 = vdwg.mxu0
      %v679 = vld [vmem:[%s10] sm:$0xff]
      %681 = vset.pattern.permute.xlu0 0
      %682 = vperm.xlu0 %681, %v679
      %v683 = vpop.permute.xlu0 %682
      %v685 = vmul.f32 %v676, %v683
      %v686 = vld [vmem:[%s11] sm:$0xff]
      %688 = vset.pattern.permute.xlu0 0
      %689 = vperm.xlu0 %688, %v686
      %v690 = vpop.permute.xlu0 %689
      %v692 = vadd.f32 %v685, %v690
      %v693 = vmax.f32 %v692, 0.0
      %695 = vrot.lane.b32.xlu0 %v693, 3
      %v696 = vpop.permute.xlu0 %695
      %v698 = vsel %vm567, 0.0, %v696
      %v699 = vsel %vm569, %v698, 0.0
      %v700 = vsel %vm572, %v699, 0.0
      %702 = vrot.lane.b32.xlu0 %v699, 126
      %v703 = vpop.permute.xlu0 %702
      %v705 = vsel %vm575, %v703, 0.0
      %v706 = vsel %vm572, %v703, 0.0
      %707 = vrot.lane.b32.xlu0 %v699, 124
      %v708 = vpop.permute.xlu0 %707
      %v710 = vsel %vm575, %v708, 0.0
      %v711 = vsel %vm572, %v708, 0.0
      %712 = vrot.lane.b32.xlu0 %v699, 122
      %v713 = vpop.permute.xlu0 %712
      %v715 = vsel %vm575, %v713, 0.0
      %716 = vrot.lane.b32.xlu0 %v699, 127
      %v717 = vpop.permute.xlu0 %716
      %719 = vrot.lane.b32.xlu0 %v699, 125
      %v720 = vpop.permute.xlu0 %719
      %722 = vrot.lane.b32.xlu0 %v699, 123
      %v723 = vpop.permute.xlu0 %722
      %v725 = vpack.c.bf16 %v717, %v700
      %v726 = vpack.c.bf16 %v706, %v705
      %v727 = vpack.c.bf16 %v710, %v720
      %v728 = vpack.c.bf16 %v723, %v711
      %v729 = vpack.c.bf16 %v715, %v715
      %v730 = vld [vmem:[%s12] sm:$0x3]
      %v732 = vsel %vm606, %v730, 0
      %v735 = vsel %vm515, %v729, 0
      %737 = vmatpush.bf16.msra.mxu0 0
      %738 = vmatpush.bf16.msra.mxu0 0
      %739 = vmatpush.bf16.msra.mxu0 0
      %740 = vmatpush.bf16.msra.mxu0 %v735
      %741 = vmatpush.bf16.msra.mxu0 %v728
      %742 = vmatpush.bf16.msra.mxu0 %v727
      %743 = vmatpush.bf16.msra.mxu0 %v726
      %744 = vmatpush.bf16.msra.mxu0 %v725
      %745 = vmatmul.bf16.gmra.mxu0 %v732
      %v746 = vpop.f32.mrf.mxu0
      %v747 = vadd.f32 0.0, %v746
      %v748 = vpop.f32.mrf.mxu0
      %749 = vdwg.mxu0
      %v751 = vrot.slane %v747, 4
      %v753 = vsel %vm515, %v623, %v751
      %v754 = vld [vmem:[%s13] sm:$0xff]
      %v755 = vld [vmem:[%s13 + $0x8] sm:$0xff]
      %757 = vset.pattern.permute.xlu0 0
      %758 = vperm.xlu0 %757, %v754
      %v759 = vpop.permute.xlu0 %758
      %762 = vset.pattern.permute.xlu0 0
      %763 = vperm.xlu0 %762, %v755
      %v764 = vpop.permute.xlu0 %763
      %v766 = vmul.f32 %v493, %v759
      %v767 = vmul.f32 %v753, %v764
      %v768 = vld [vmem:[%s14] sm:$0xff]
      %v769 = vld [vmem:[%s14 + $0x8] sm:$0xff]
      %771 = vset.pattern.permute.xlu0 0
      %772 = vperm.xlu0 %771, %v768
      %v773 = vpop.permute.xlu0 %772
      %776 = vset.pattern.permute.xlu0 0
      %777 = vperm.xlu0 %776, %v769
      %v778 = vpop.permute.xlu0 %777
      %v780 = vadd.f32 %v766, %v773
      %v781 = vadd.f32 %v767, %v778
      %vm782 = vcmask 31744
      %783 = vst.msk [vmem:[%s491] sm:$0xff] %vm782, %v780
      %784 = vst.msk [vmem:[%s491 + $0x8] sm:$0xff] %vm782, %v781
      %p785 = scmp.lt.s32.totalorder %s26, 1
      %s786 = scalar_select %p785, %s26, 1
      %s787 = smul.addr %s786, 2
      %s788 = smul.addr %s787, 8
      %s789 = scalar_lea.vmem %s15, %s788
      // Predicated region
      $region81: #{encoder_forward.9} parent=79 // pred_check
        %p790 = pneg %p364
      $region82: #{encoder_forward.9} parent=79 // pred_check_branch
        %792 = sbr.rel (%p790) target = $region84
      $region83: #{encoder_forward.9} parent=79 // pred_region
        _
      $region84: #{encoder_forward.9} parent=79 // pred_fallthru
        _
    $region80: #{encoder_forward.9} parent=5 // pred_fallthru
      _
    %p793 = scmp.le.s32.totalorder 2, %s21
    // Predicated region
    $region85: #{encoder_forward.9} parent=5 // pred_check
      %p794 = pneg %p793
    $region86: #{encoder_forward.9} parent=5 // pred_check_branch
      %796 = sbr.rel (%p794) target = $region88
    $region87: #{encoder_forward.9} parent=5 // pred_region
      %s797 = ssub.s32 %s21, 2
      // Predicated region
      $region89: #{encoder_forward.9} parent=87 // pred_check
        %p798 = pneg %p370
      $region90: #{encoder_forward.9} parent=87 // pred_check_branch
        %800 = sbr.rel (%p798) target = $region92
      $region91: #{encoder_forward.9} parent=87 // pred_region
        %p801 = scmp.lt.s32.totalorder %s27, 1
        %s802 = scalar_select %p801, %s27, 1
        %s803 = smul.addr %s802, 2
        %s804 = smul.addr %s803, 8
        %s805 = scalar_lea.vmem %s15, %s804
      $region92: #{encoder_forward.9} parent=87 // pred_fallthru
        _
    $region88: #{encoder_forward.9} parent=5 // pred_fallthru
      _
  $region6: #{encoder_forward.9} parent=0 // loop_footer
    %s25 = sadd.s32 1, %s21
  $region7: #{encoder_forward.9} parent=0 // loop_footer_branch
    %20 = sbr.rel target = $region3
  $region8: #{encoder_forward.9} parent=0 // loop_exit
    _

// kernel: encoder_forward.7
$region0: #{encoder_forward.7}
  #allocation0 [shape = 'u32[]', space=smem, size = 0x4, offset = 0x4, fixed_abs, tag = 'smem constant byte address 0x4 - core index']
  #allocation1 [shape = 'u32[72,128]{1,0:T(1,128)}', space=vmem, size = 0x9000, scoped, tag = 'internal scratch']
  %s0 = inlined_call_operand.vmem [shape: f32[2,8,64], index: 0, kind: input, shape index: {}]
  %s1 = inlined_call_operand.vmem [shape: f32[8,1], index: 1, kind: input, shape index: {}]
  %s2 = inlined_call_operand.vmem [shape: f32[8,1], index: 2, kind: input, shape index: {}]
  %s3 = inlined_call_operand.vmem [shape: bf16[8,8], index: 3, kind: input, shape index: {}]
  %s4 = inlined_call_operand.vmem [shape: f32[8,1], index: 4, kind: input, shape index: {}]
  %s5 = inlined_call_operand.vmem [shape: f32[8,1], index: 5, kind: input, shape index: {}]
  %s6 = inlined_call_operand.vmem [shape: bf16[4,72], index: 6, kind: input, shape index: {}]
  %s7 = inlined_call_operand.vmem [shape: f32[12,1], index: 7, kind: input, shape index: {}]
  %s8 = inlined_call_operand.vmem [shape: f32[12,1], index: 8, kind: input, shape index: {}]
  %s9 = inlined_call_operand.vmem [shape: bf16[8,12], index: 9, kind: input, shape index: {}]
  %s10 = inlined_call_operand.vmem [shape: f32[8,1], index: 10, kind: input, shape index: {}]
  %s11 = inlined_call_operand.vmem [shape: f32[8,1], index: 11, kind: input, shape index: {}]
  %s12 = inlined_call_operand.vmem [shape: bf16[4,72], index: 12, kind: input, shape index: {}]
  %s13 = inlined_call_operand.vmem [shape: f32[16,1], index: 13, kind: input, shape index: {}]
  %s14 = inlined_call_operand.vmem [shape: f32[16,1], index: 14, kind: input, shape index: {}]
  %s15 = inlined_call_operand.vmem [shape: bf16[8,16], index: 15, kind: input, shape index: {}]
  %s16 = inlined_call_operand.vmem [shape: bf16[64,16], index: 16, kind: input, shape index: {}]
  %s17 = inlined_call_operand.vmem [shape: f32[2,8,16], index: 17, kind: output, shape index: {}]
  %s18 = sld [smem:[#allocation0]]
  $region101: #{encoder_forward.7} parent=0
    _
  %s20 = ssub.s32 1, %s18
  %s21 = scalar_select 0, %s20, %s18
  loop: start=0, step=1, limit=4
  $region2: #{encoder_forward.7} parent=0 // loop_pre_header
    _
  $region3: #{encoder_forward.7} parent=0 // loop_header
    %s23 = sphi 0, %s27
    %p24 = scmp.ge.s32.totalorder %s23, 4
    %s33 = sphi 0, %s35
    %s36 = sphi 0, %s33
    %s37 = sphi 0, %s36
    %s53 = sphi 0, %s37
    %s57 = sphi 0, %s57
    %s59 = sphi 0, %s57
    %s60 = sphi 0, %s59
    %s74 = sphi 0, %s60
    %s78 = sphi 0, %s78
    %s80 = sphi 0, %s78
    %s81 = sphi 0, %s80
    %s95 = sphi 0, %s81
    %s99 = sphi 0, %s99
    %s101 = sphi 0, %s99
    %s102 = sphi 0, %s101
    %s116 = sphi 0, %s102
    %s120 = sphi 0, %s120
    %s122 = sphi 0, %s120
    %s123 = sphi 0, %s122
    %s137 = sphi 0, %s123
    %s141 = sphi 0, %s141
    %s143 = sphi 0, %s141
    %s144 = sphi 0, %s143
    %s158 = sphi 0, %s144
    %s162 = sphi 0, %s162
    %s164 = sphi 0, %s162
    %s165 = sphi 0, %s164
    %s179 = sphi 0, %s165
    %s183 = sphi 0, %s183
    %s185 = sphi 0, %s183
    %s186 = sphi 0, %s185
    %s200 = sphi 0, %s186
    %s204 = sphi 0, %s204
    %s206 = sphi 0, %s204
    %s207 = sphi 0, %s206
    %s221 = sphi 0, %s207
    %s225 = sphi 0, %s225
    %s227 = sphi 0, %s225
    %s228 = sphi 0, %s227
    %s242 = sphi 0, %s228
    %s246 = sphi 0, %s246
    %s248 = sphi 0, %s246
    %s249 = sphi 0, %s248
    %s263 = sphi 0, %s249
    %s267 = sphi 0, %s267
    %s269 = sphi 0, %s267
    %s270 = sphi 0, %s269
    %s284 = sphi 0, %s270
    %s288 = sphi 0, %s288
    %s290 = sphi 0, %s288
    %s291 = sphi 0, %s290
    %s305 = sphi 0, %s291
    %s309 = sphi 0, %s309
    %s311 = sphi 0, %s309
    %s312 = sphi 0, %s311
    %s326 = sphi 0, %s312
    %s330 = sphi 0, %s330
    %s332 = sphi 0, %s330
    %s333 = sphi 0, %s332
    %s347 = sphi 0, %s333
    %s351 = sphi 0, %s351
    %s353 = sphi 0, %s351
    %s354 = sphi 0, %s353
    %s368 = sphi 0, %s354
    %s372 = sphi 0, %s372
    %s374 = sphi 0, %s372
    %s375 = sphi 0, %s374
    %s389 = sphi 0, %s375
    %s395 = sphi 0, %s397
    %s398 = sphi 0, %s395
    %s399 = sphi 0, %s398
    %s415 = sphi 0, %s399
  $region4: #{encoder_forward.7} parent=0 // loop_header_branch
    %26 = sbr.rel (%p24) target = $region8
  $region5: #{encoder_forward.7} parent=0 // loop_body
    %s28 = ssub.s32 %s23, 1
    %s29 = ssub.s32 %s23, 2
    %s30 = sadd.s32 %s23, 1
    %s31 = ssub.s32 %s23, %s30
    %p32 = scmp.eq.s32.totalorder %s31, 0
    %s34 = sadd.s32 %s33, 1
    %s35 = scalar_select %p32, %s33, %s34
    %p38 = pneg %p32
    %p39 = scmp.eq.s32.totalorder %s23, 1
    %p40 = por %p38, %p39
    %p41 = scmp.ne.s32.totalorder %s33, %s36
    %p42 = scmp.eq.s32.totalorder %s23, 0
    %p43 = por %p41, %p42
    %p44 = scmp.ne.s32.totalorder %s33, %s36
    %p45 = scmp.eq.s32.totalorder %s28, 1
    %p46 = por %p44, %p45
    %p47 = scmp.ne.s32.totalorder %s36, %s37
    %p48 = scmp.eq.s32.totalorder %s28, 0
    %p49 = por %p47, %p48
    %p50 = scmp.ne.s32.totalorder %s36, %s37
    %p51 = scmp.eq.s32.totalorder %s29, 1
    %p52 = por %p50, %p51
    %p54 = scmp.ne.s32.totalorder %s37, %s53
    %p55 = scmp.eq.s32.totalorder %s29, 0
    %p56 = por %p54, %p55
    %s58 = sadd.s32 %s57, 1
    %p61 = scmp.eq.s32.totalorder %s23, 1
    %p62 = scmp.ne.s32.totalorder %s57, %s59
    %p63 = scmp.eq.s32.totalorder %s23, 0
    %p64 = por %p62, %p63
    %p65 = scmp.ne.s32.totalorder %s57, %s59
    %p66 = scmp.eq.s32.totalorder %s28, 1
    %p67 = por %p65, %p66
    %p68 = scmp.ne.s32.totalorder %s59, %s60
    %p69 = scmp.eq.s32.totalorder %s28, 0
    %p70 = por %p68, %p69
    %p71 = scmp.ne.s32.totalorder %s59, %s60
    %p72 = scmp.eq.s32.totalorder %s29, 1
    %p73 = por %p71, %p72
    %p75 = scmp.ne.s32.totalorder %s60, %s74
    %p76 = scmp.eq.s32.totalorder %s29, 0
    %p77 = por %p75, %p76
    %s79 = sadd.s32 %s78, 1
    %p82 = scmp.eq.s32.totalorder %s23, 1
    %p83 = scmp.ne.s32.totalorder %s78, %s80
    %p84 = scmp.eq.s32.totalorder %s23, 0
    %p85 = por %p83, %p84
    %p86 = scmp.ne.s32.totalorder %s78, %s80
    %p87 = scmp.eq.s32.totalorder %s28, 1
    %p88 = por %p86, %p87
    %p89 = scmp.ne.s32.totalorder %s80, %s81
    %p90 = scmp.eq.s32.totalorder %s28, 0
    %p91 = por %p89, %p90
    %p92 = scmp.ne.s32.totalorder %s80, %s81
    %p93 = scmp.eq.s32.totalorder %s29, 1
    %p94 = por %p92, %p93
    %p96 = scmp.ne.s32.totalorder %s81, %s95
    %p97 = scmp.eq.s32.totalorder %s29, 0
    %p98 = por %p96, %p97
    %s100 = sadd.s32 %s99, 1
    %p103 = scmp.eq.s32.totalorder %s23, 1
    %p104 = scmp.ne.s32.totalorder %s99, %s101
    %p105 = scmp.eq.s32.totalorder %s23, 0
    %p106 = por %p104, %p105
    %p107 = scmp.ne.s32.totalorder %s99, %s101
    %p108 = scmp.eq.s32.totalorder %s28, 1
    %p109 = por %p107, %p108
    %p110 = scmp.ne.s32.totalorder %s101, %s102
    %p111 = scmp.eq.s32.totalorder %s28, 0
    %p112 = por %p110, %p111
    %p113 = scmp.ne.s32.totalorder %s101, %s102
    %p114 = scmp.eq.s32.totalorder %s29, 1
    %p115 = por %p113, %p114
    %p117 = scmp.ne.s32.totalorder %s102, %s116
    %p118 = scmp.eq.s32.totalorder %s29, 0
    %p119 = por %p117, %p118
    %s121 = sadd.s32 %s120, 1
    %p124 = scmp.eq.s32.totalorder %s23, 1
    %p125 = scmp.ne.s32.totalorder %s120, %s122
    %p126 = scmp.eq.s32.totalorder %s23, 0
    %p127 = por %p125, %p126
    %p128 = scmp.ne.s32.totalorder %s120, %s122
    %p129 = scmp.eq.s32.totalorder %s28, 1
    %p130 = por %p128, %p129
    %p131 = scmp.ne.s32.totalorder %s122, %s123
    %p132 = scmp.eq.s32.totalorder %s28, 0
    %p133 = por %p131, %p132
    %p134 = scmp.ne.s32.totalorder %s122, %s123
    %p135 = scmp.eq.s32.totalorder %s29, 1
    %p136 = por %p134, %p135
    %p138 = scmp.ne.s32.totalorder %s123, %s137
    %p139 = scmp.eq.s32.totalorder %s29, 0
    %p140 = por %p138, %p139
    %s142 = sadd.s32 %s141, 1
    %p145 = scmp.eq.s32.totalorder %s23, 1
    %p146 = scmp.ne.s32.totalorder %s141, %s143
    %p147 = scmp.eq.s32.totalorder %s23, 0
    %p148 = por %p146, %p147
    %p149 = scmp.ne.s32.totalorder %s141, %s143
    %p150 = scmp.eq.s32.totalorder %s28, 1
    %p151 = por %p149, %p150
    %p152 = scmp.ne.s32.totalorder %s143, %s144
    %p153 = scmp.eq.s32.totalorder %s28, 0
    %p154 = por %p152, %p153
    %p155 = scmp.ne.s32.totalorder %s143, %s144
    %p156 = scmp.eq.s32.totalorder %s29, 1
    %p157 = por %p155, %p156
    %p159 = scmp.ne.s32.totalorder %s144, %s158
    %p160 = scmp.eq.s32.totalorder %s29, 0
    %p161 = por %p159, %p160
    %s163 = sadd.s32 %s162, 1
    %p166 = scmp.eq.s32.totalorder %s23, 1
    %p167 = scmp.ne.s32.totalorder %s162, %s164
    %p168 = scmp.eq.s32.totalorder %s23, 0
    %p169 = por %p167, %p168
    %p170 = scmp.ne.s32.totalorder %s162, %s164
    %p171 = scmp.eq.s32.totalorder %s28, 1
    %p172 = por %p170, %p171
    %p173 = scmp.ne.s32.totalorder %s164, %s165
    %p174 = scmp.eq.s32.totalorder %s28, 0
    %p175 = por %p173, %p174
    %p176 = scmp.ne.s32.totalorder %s164, %s165
    %p177 = scmp.eq.s32.totalorder %s29, 1
    %p178 = por %p176, %p177
    %p180 = scmp.ne.s32.totalorder %s165, %s179
    %p181 = scmp.eq.s32.totalorder %s29, 0
    %p182 = por %p180, %p181
    %s184 = sadd.s32 %s183, 1
    %p187 = scmp.eq.s32.totalorder %s23, 1
    %p188 = scmp.ne.s32.totalorder %s183, %s185
    %p189 = scmp.eq.s32.totalorder %s23, 0
    %p190 = por %p188, %p189
    %p191 = scmp.ne.s32.totalorder %s183, %s185
    %p192 = scmp.eq.s32.totalorder %s28, 1
    %p193 = por %p191, %p192
    %p194 = scmp.ne.s32.totalorder %s185, %s186
    %p195 = scmp.eq.s32.totalorder %s28, 0
    %p196 = por %p194, %p195
    %p197 = scmp.ne.s32.totalorder %s185, %s186
    %p198 = scmp.eq.s32.totalorder %s29, 1
    %p199 = por %p197, %p198
    %p201 = scmp.ne.s32.totalorder %s186, %s200
    %p202 = scmp.eq.s32.totalorder %s29, 0
    %p203 = por %p201, %p202
    %s205 = sadd.s32 %s204, 1
    %p208 = scmp.eq.s32.totalorder %s23, 1
    %p209 = scmp.ne.s32.totalorder %s204, %s206
    %p210 = scmp.eq.s32.totalorder %s23, 0
    %p211 = por %p209, %p210
    %p212 = scmp.ne.s32.totalorder %s204, %s206
    %p213 = scmp.eq.s32.totalorder %s28, 1
    %p214 = por %p212, %p213
    %p215 = scmp.ne.s32.totalorder %s206, %s207
    %p216 = scmp.eq.s32.totalorder %s28, 0
    %p217 = por %p215, %p216
    %p218 = scmp.ne.s32.totalorder %s206, %s207
    %p219 = scmp.eq.s32.totalorder %s29, 1
    %p220 = por %p218, %p219
    %p222 = scmp.ne.s32.totalorder %s207, %s221
    %p223 = scmp.eq.s32.totalorder %s29, 0
    %p224 = por %p222, %p223
    %s226 = sadd.s32 %s225, 1
    %p229 = scmp.eq.s32.totalorder %s23, 1
    %p230 = scmp.ne.s32.totalorder %s225, %s227
    %p231 = scmp.eq.s32.totalorder %s23, 0
    %p232 = por %p230, %p231
    %p233 = scmp.ne.s32.totalorder %s225, %s227
    %p234 = scmp.eq.s32.totalorder %s28, 1
    %p235 = por %p233, %p234
    %p236 = scmp.ne.s32.totalorder %s227, %s228
    %p237 = scmp.eq.s32.totalorder %s28, 0
    %p238 = por %p236, %p237
    %p239 = scmp.ne.s32.totalorder %s227, %s228
    %p240 = scmp.eq.s32.totalorder %s29, 1
    %p241 = por %p239, %p240
    %p243 = scmp.ne.s32.totalorder %s228, %s242
    %p244 = scmp.eq.s32.totalorder %s29, 0
    %p245 = por %p243, %p244
    %s247 = sadd.s32 %s246, 1
    %p250 = scmp.eq.s32.totalorder %s23, 1
    %p251 = scmp.ne.s32.totalorder %s246, %s248
    %p252 = scmp.eq.s32.totalorder %s23, 0
    %p253 = por %p251, %p252
    %p254 = scmp.ne.s32.totalorder %s246, %s248
    %p255 = scmp.eq.s32.totalorder %s28, 1
    %p256 = por %p254, %p255
    %p257 = scmp.ne.s32.totalorder %s248, %s249
    %p258 = scmp.eq.s32.totalorder %s28, 0
    %p259 = por %p257, %p258
    %p260 = scmp.ne.s32.totalorder %s248, %s249
    %p261 = scmp.eq.s32.totalorder %s29, 1
    %p262 = por %p260, %p261
    %p264 = scmp.ne.s32.totalorder %s249, %s263
    %p265 = scmp.eq.s32.totalorder %s29, 0
    %p266 = por %p264, %p265
    %s268 = sadd.s32 %s267, 1
    %p271 = scmp.eq.s32.totalorder %s23, 1
    %p272 = scmp.ne.s32.totalorder %s267, %s269
    %p273 = scmp.eq.s32.totalorder %s23, 0
    %p274 = por %p272, %p273
    %p275 = scmp.ne.s32.totalorder %s267, %s269
    %p276 = scmp.eq.s32.totalorder %s28, 1
    %p277 = por %p275, %p276
    %p278 = scmp.ne.s32.totalorder %s269, %s270
    %p279 = scmp.eq.s32.totalorder %s28, 0
    %p280 = por %p278, %p279
    %p281 = scmp.ne.s32.totalorder %s269, %s270
    %p282 = scmp.eq.s32.totalorder %s29, 1
    %p283 = por %p281, %p282
    %p285 = scmp.ne.s32.totalorder %s270, %s284
    %p286 = scmp.eq.s32.totalorder %s29, 0
    %p287 = por %p285, %p286
    %s289 = sadd.s32 %s288, 1
    %p292 = scmp.eq.s32.totalorder %s23, 1
    %p293 = scmp.ne.s32.totalorder %s288, %s290
    %p294 = scmp.eq.s32.totalorder %s23, 0
    %p295 = por %p293, %p294
    %p296 = scmp.ne.s32.totalorder %s288, %s290
    %p297 = scmp.eq.s32.totalorder %s28, 1
    %p298 = por %p296, %p297
    %p299 = scmp.ne.s32.totalorder %s290, %s291
    %p300 = scmp.eq.s32.totalorder %s28, 0
    %p301 = por %p299, %p300
    %p302 = scmp.ne.s32.totalorder %s290, %s291
    %p303 = scmp.eq.s32.totalorder %s29, 1
    %p304 = por %p302, %p303
    %p306 = scmp.ne.s32.totalorder %s291, %s305
    %p307 = scmp.eq.s32.totalorder %s29, 0
    %p308 = por %p306, %p307
    %s310 = sadd.s32 %s309, 1
    %p313 = scmp.eq.s32.totalorder %s23, 1
    %p314 = scmp.ne.s32.totalorder %s309, %s311
    %p315 = scmp.eq.s32.totalorder %s23, 0
    %p316 = por %p314, %p315
    %p317 = scmp.ne.s32.totalorder %s309, %s311
    %p318 = scmp.eq.s32.totalorder %s28, 1
    %p319 = por %p317, %p318
    %p320 = scmp.ne.s32.totalorder %s311, %s312
    %p321 = scmp.eq.s32.totalorder %s28, 0
    %p322 = por %p320, %p321
    %p323 = scmp.ne.s32.totalorder %s311, %s312
    %p324 = scmp.eq.s32.totalorder %s29, 1
    %p325 = por %p323, %p324
    %p327 = scmp.ne.s32.totalorder %s312, %s326
    %p328 = scmp.eq.s32.totalorder %s29, 0
    %p329 = por %p327, %p328
    %s331 = sadd.s32 %s330, 1
    %p334 = scmp.eq.s32.totalorder %s23, 1
    %p335 = scmp.ne.s32.totalorder %s330, %s332
    %p336 = scmp.eq.s32.totalorder %s23, 0
    %p337 = por %p335, %p336
    %p338 = scmp.ne.s32.totalorder %s330, %s332
    %p339 = scmp.eq.s32.totalorder %s28, 1
    %p340 = por %p338, %p339
    %p341 = scmp.ne.s32.totalorder %s332, %s333
    %p342 = scmp.eq.s32.totalorder %s28, 0
    %p343 = por %p341, %p342
    %p344 = scmp.ne.s32.totalorder %s332, %s333
    %p345 = scmp.eq.s32.totalorder %s29, 1
    %p346 = por %p344, %p345
    %p348 = scmp.ne.s32.totalorder %s333, %s347
    %p349 = scmp.eq.s32.totalorder %s29, 0
    %p350 = por %p348, %p349
    %s352 = sadd.s32 %s351, 1
    %p355 = scmp.eq.s32.totalorder %s23, 1
    %p356 = scmp.ne.s32.totalorder %s351, %s353
    %p357 = scmp.eq.s32.totalorder %s23, 0
    %p358 = por %p356, %p357
    %p359 = scmp.ne.s32.totalorder %s351, %s353
    %p360 = scmp.eq.s32.totalorder %s28, 1
    %p361 = por %p359, %p360
    %p362 = scmp.ne.s32.totalorder %s353, %s354
    %p363 = scmp.eq.s32.totalorder %s28, 0
    %p364 = por %p362, %p363
    %p365 = scmp.ne.s32.totalorder %s353, %s354
    %p366 = scmp.eq.s32.totalorder %s29, 1
    %p367 = por %p365, %p366
    %p369 = scmp.ne.s32.totalorder %s354, %s368
    %p370 = scmp.eq.s32.totalorder %s29, 0
    %p371 = por %p369, %p370
    %s373 = sadd.s32 %s372, 1
    %p376 = scmp.eq.s32.totalorder %s23, 1
    %p377 = scmp.ne.s32.totalorder %s372, %s374
    %p378 = scmp.eq.s32.totalorder %s23, 0
    %p379 = por %p377, %p378
    %p380 = scmp.ne.s32.totalorder %s372, %s374
    %p381 = scmp.eq.s32.totalorder %s28, 1
    %p382 = por %p380, %p381
    %p383 = scmp.ne.s32.totalorder %s374, %s375
    %p384 = scmp.eq.s32.totalorder %s28, 0
    %p385 = por %p383, %p384
    %p386 = scmp.ne.s32.totalorder %s374, %s375
    %p387 = scmp.eq.s32.totalorder %s29, 1
    %p388 = por %p386, %p387
    %p390 = scmp.ne.s32.totalorder %s375, %s389
    %p391 = scmp.eq.s32.totalorder %s29, 0
    %p392 = por %p390, %p391
    %s393 = ssub.s32 %s23, %s30
    %p394 = scmp.eq.s32.totalorder %s393, 0
    %s396 = sadd.s32 %s395, 1
    %s397 = scalar_select %p394, %s395, %s396
    %p400 = pneg %p394
    %p401 = scmp.eq.s32.totalorder %s23, 1
    %p402 = por %p400, %p401
    %p403 = scmp.ne.s32.totalorder %s395, %s398
    %p404 = scmp.eq.s32.totalorder %s23, 0
    %p405 = por %p403, %p404
    %p406 = scmp.ne.s32.totalorder %s395, %s398
    %p407 = scmp.eq.s32.totalorder %s28, 1
    %p408 = por %p406, %p407
    %p409 = scmp.ne.s32.totalorder %s398, %s399
    %p410 = scmp.eq.s32.totalorder %s28, 0
    %p411 = por %p409, %p410
    %p412 = scmp.ne.s32.totalorder %s398, %s399
    %p413 = scmp.eq.s32.totalorder %s29, 1
    %p414 = por %p412, %p413
    %p416 = scmp.ne.s32.totalorder %s399, %s415
    %p417 = scmp.eq.s32.totalorder %s29, 0
    %p418 = por %p416, %p417
    %p419 = scmp.le.s32.totalorder 1, %s23
    %p420 = scmp.lt.s32.totalorder %s23, 3
    %p421 = pnand %p419, %p420
    %p422 = pneg %p421
    // Predicated region
    $region9: #{encoder_forward.7} parent=5 // pred_check
      _
    $region10: #{encoder_forward.7} parent=5 // pred_check_branch
      %424 = sbr.rel (%p421) target = $region12
    $region11: #{encoder_forward.7} parent=5 // pred_region
      %s425 = ssub.s32 %s23, 1
      // Predicated region
      $region13: #{encoder_forward.7} parent=11 // pred_check
        %p426 = pneg %p70
      $region14: #{encoder_forward.7} parent=11 // pred_check_branch
        %428 = sbr.rel (%p426) target = $region16
      $region15: #{encoder_forward.7} parent=11 // pred_region
        _
      $region16: #{encoder_forward.7} parent=11 // pred_fallthru
        _
      // Predicated region
      $region17: #{encoder_forward.7} parent=11 // pred_check
        %p429 = pneg %p91
      $region18: #{encoder_forward.7} parent=11 // pred_check_branch
        %431 = sbr.rel (%p429) target = $region20
      $region19: #{encoder_forward.7} parent=11 // pred_region
        _
      $region20: #{encoder_forward.7} parent=11 // pred_fallthru
        _
      // Predicated region
      $region21: #{encoder_forward.7} parent=11 // pred_check
        %p432 = pneg %p112
      $region22: #{encoder_forward.7} parent=11 // pred_check_branch
        %434 = sbr.rel (%p432) target = $region24
      $region23: #{encoder_forward.7} parent=11 // pred_region
        _
      $region24: #{encoder_forward.7} parent=11 // pred_fallthru
        _
      // Predicated region
      $region25: #{encoder_forward.7} parent=11 // pred_check
        %p435 = pneg %p133
      $region26: #{encoder_forward.7} parent=11 // pred_check_branch
        %437 = sbr.rel (%p435) target = $region28
      $region27: #{encoder_forward.7} parent=11 // pred_region
        _
      $region28: #{encoder_forward.7} parent=11 // pred_fallthru
        _
      // Predicated region
      $region29: #{encoder_forward.7} parent=11 // pred_check
        %p438 = pneg %p154
      $region30: #{encoder_forward.7} parent=11 // pred_check_branch
        %440 = sbr.rel (%p438) target = $region32
      $region31: #{encoder_forward.7} parent=11 // pred_region
        _
      $region32: #{encoder_forward.7} parent=11 // pred_fallthru
        _
      // Predicated region
      $region33: #{encoder_forward.7} parent=11 // pred_check
        %p441 = pneg %p175
      $region34: #{encoder_forward.7} parent=11 // pred_check_branch
        %443 = sbr.rel (%p441) target = $region36
      $region35: #{encoder_forward.7} parent=11 // pred_region
        _
      $region36: #{encoder_forward.7} parent=11 // pred_fallthru
        _
      // Predicated region
      $region37: #{encoder_forward.7} parent=11 // pred_check
        %p444 = pneg %p196
      $region38: #{encoder_forward.7} parent=11 // pred_check_branch
        %446 = sbr.rel (%p444) target = $region40
      $region39: #{encoder_forward.7} parent=11 // pred_region
        _
      $region40: #{encoder_forward.7} parent=11 // pred_fallthru
        _
      // Predicated region
      $region41: #{encoder_forward.7} parent=11 // pred_check
        %p447 = pneg %p217
      $region42: #{encoder_forward.7} parent=11 // pred_check_branch
        %449 = sbr.rel (%p447) target = $region44
      $region43: #{encoder_forward.7} parent=11 // pred_region
        _
      $region44: #{encoder_forward.7} parent=11 // pred_fallthru
        _
      // Predicated region
      $region45: #{encoder_forward.7} parent=11 // pred_check
        %p450 = pneg %p238
      $region46: #{encoder_forward.7} parent=11 // pred_check_branch
        %452 = sbr.rel (%p450) target = $region48
      $region47: #{encoder_forward.7} parent=11 // pred_region
        _
      $region48: #{encoder_forward.7} parent=11 // pred_fallthru
        _
      // Predicated region
      $region49: #{encoder_forward.7} parent=11 // pred_check
        %p453 = pneg %p259
      $region50: #{encoder_forward.7} parent=11 // pred_check_branch
        %455 = sbr.rel (%p453) target = $region52
      $region51: #{encoder_forward.7} parent=11 // pred_region
        _
      $region52: #{encoder_forward.7} parent=11 // pred_fallthru
        _
      // Predicated region
      $region53: #{encoder_forward.7} parent=11 // pred_check
        %p456 = pneg %p280
      $region54: #{encoder_forward.7} parent=11 // pred_check_branch
        %458 = sbr.rel (%p456) target = $region56
      $region55: #{encoder_forward.7} parent=11 // pred_region
        _
      $region56: #{encoder_forward.7} parent=11 // pred_fallthru
        _
      // Predicated region
      $region57: #{encoder_forward.7} parent=11 // pred_check
        %p459 = pneg %p301
      $region58: #{encoder_forward.7} parent=11 // pred_check_branch
        %461 = sbr.rel (%p459) target = $region60
      $region59: #{encoder_forward.7} parent=11 // pred_region
        _
      $region60: #{encoder_forward.7} parent=11 // pred_fallthru
        _
      // Predicated region
      $region61: #{encoder_forward.7} parent=11 // pred_check
        %p462 = pneg %p322
      $region62: #{encoder_forward.7} parent=11 // pred_check_branch
        %464 = sbr.rel (%p462) target = $region64
      $region63: #{encoder_forward.7} parent=11 // pred_region
        _
      $region64: #{encoder_forward.7} parent=11 // pred_fallthru
        _
      // Predicated region
      $region65: #{encoder_forward.7} parent=11 // pred_check
        %p465 = pneg %p343
      $region66: #{encoder_forward.7} parent=11 // pred_check_branch
        %467 = sbr.rel (%p465) target = $region68
      $region67: #{encoder_forward.7} parent=11 // pred_region
        _
      $region68: #{encoder_forward.7} parent=11 // pred_fallthru
        _
      // Predicated region
      $region69: #{encoder_forward.7} parent=11 // pred_check
        %p468 = pneg %p364
      $region70: #{encoder_forward.7} parent=11 // pred_check_branch
        %470 = sbr.rel (%p468) target = $region72
      $region71: #{encoder_forward.7} parent=11 // pred_region
        _
      $region72: #{encoder_forward.7} parent=11 // pred_fallthru
        _
      // Predicated region
      $region73: #{encoder_forward.7} parent=11 // pred_check
        %p471 = pneg %p385
      $region74: #{encoder_forward.7} parent=11 // pred_check_branch
        %473 = sbr.rel (%p471) target = $region76
      $region75: #{encoder_forward.7} parent=11 // pred_region
        _
      $region76: #{encoder_forward.7} parent=11 // pred_fallthru
        _
    $region12: #{encoder_forward.7} parent=5 // pred_fallthru
      _
    %p474 = scmp.lt.s32.totalorder %s23, 2
    // Predicated region
    $region77: #{encoder_forward.7} parent=5 // pred_check
      %p475 = pneg %p474
    $region78: #{encoder_forward.7} parent=5 // pred_check_branch
      %477 = sbr.rel (%p475) target = $region80
    $region79: #{encoder_forward.7} parent=5 // pred_region
      // Predicated region
      $region81: #{encoder_forward.7} parent=79 // pred_check
        %p478 = pneg %p43
      $region82: #{encoder_forward.7} parent=79 // pred_check_branch
        %480 = sbr.rel (%p478) target = $region84
      $region83: #{encoder_forward.7} parent=79 // pred_region
        %p481 = scmp.lt.s32.totalorder %s23, 1
        %s482 = scalar_select %p481, %s23, 1
        %s483 = smul.addr %s482, 8
        %s484 = scalar_lea.vmem %s0, %s483
      $region84: #{encoder_forward.7} parent=79 // pred_fallthru
        _
    $region80: #{encoder_forward.7} parent=5 // pred_fallthru
      _
    %p485 = scmp.le.s32.totalorder 1, %s23
    %p486 = scmp.lt.s32.totalorder %s23, 3
    %p487 = pnand %p485, %p486
    %p488 = pneg %p487
    // Predicated region
    $region85: #{encoder_forward.7} parent=5 // pred_check
      _
    $region86: #{encoder_forward.7} parent=5 // pred_check_branch
      %490 = sbr.rel (%p487) target = $region88
    $region87: #{encoder_forward.7} parent=5 // pred_region
      %s491 = ssub.s32 %s23, 1
      %p492 = scmp.lt.s32.totalorder %s28, 1
      %s493 = scalar_select %p492, %s28, 1
      %s494 = smul.addr %s493, 8
      %s495 = scalar_lea.vmem %s0, %s494
      %p496 = pneg %p49
      %p497 = pneg %p46
      %p498 = pneg %p70
      %p499 = pneg %p67
      %p500 = pneg %p91
      %p501 = pneg %p88
      %p502 = pneg %p112
      %p503 = pneg %p109
      %p504 = pneg %p133
      %p505 = pneg %p130
      %p506 = pneg %p154
      %p507 = pneg %p151
      %p508 = pneg %p175
      %p509 = pneg %p172
      %p510 = pneg %p196
      %p511 = pneg %p193
      %p512 = pneg %p217
      %p513 = pneg %p214
      %p514 = pneg %p238
      %p515 = pneg %p235
      %p516 = pneg %p259
      %p517 = pneg %p256
      %p518 = pneg %p280
      %p519 = pneg %p277
      %p520 = pneg %p301
      %p521 = pneg %p298
      %p522 = pneg %p322
      %p523 = pneg %p319
      %p524 = pneg %p343
      %p525 = pneg %p340
      %p526 = pneg %p364
      %p527 = pneg %p361
      %p528 = pneg %p385
      %p529 = pneg %p382
      %p530 = pneg %p411
      %p531 = pneg %p408
      %p532 = scmp.lt.s32.totalorder %s28, 1
      %s533 = scalar_select %p532, %s28, 1
      %s534 = smul.addr %s533, 8
      %s535 = scalar_lea.vmem %s17, %s534
      %p536 = scmp.lt.s32.totalorder %s28, 1
      %s537 = scalar_select %p536, %s28, 1
      %s538 = smul.addr %s537, 8
      %s539 = scalar_lea.vmem %s0, %s538
      %p540 = scmp.lt.s32.totalorder %s28, 1
      %s541 = scalar_select %p540, %s28, 1
      %s542 = smul.addr %s541, 8
      %s543 = scalar_lea.vmem %s17, %s542
      %v545 = vld [vmem:[%s539] sm:$0xff]
      %v546 = vld [vmem:[%s1] sm:$0xff]
      %548 = vset.pattern.permute.xlu0 0
      %549 = vperm.xlu0 %548, %v546
      %v550 = vpop.permute.xlu0 %549
      %v552 = vmul.f32 %v545, %v550
      %v553 = vld [vmem:[%s2] sm:$0xff]
      %555 = vset.pattern.permute.xlu0 0
      %556 = vperm.xlu0 %555, %v553
      %v557 = vpop.permute.xlu0 %556
      %v559 = vadd.f32 %v552, %v557
      %v560 = vmax.f32 %v559, 0.0
      %v561 = vld [vmem:[%s3] sm:$0xf]
      %v562 = vpack.c.bf16 %v560, %v560
      %vm563 = vcmask 64512
      %v565 = vsel %vm563, %v561, 0
      %vm567 = vcmask 1043456
      %v569 = vsel %vm567, %v562, 0
      %571 = vmatpush.bf16.msra.mxu0 0
      %572 = vmatpush.bf16.msra.mxu0 0
      %573 = vmatpush.bf16.msra.mxu0 0
      %574 = vmatpush.bf16.msra.mxu0 0
      %575 = vmatpush.bf16.msra.mxu0 0
      %576 = vmatpush.bf16.msra.mxu0 0
      %577 = vmatpush.bf16.msra.mxu0 0
      %578 = vmatpush.bf16.msra.mxu0 %v569
      %579 = vmatmul.bf16.gmra.mxu0 %v565
      %v580 = vpop.f32.mrf.mxu0
      %v581 = vadd.f32 0.0, %v580
      %v582 = vpop.f32.mrf.mxu0
      %583 = vdwg.mxu0
      %v584 = vld [vmem:[%s4] sm:$0xff]
      %586 = vset.pattern.permute.xlu0 0
      %587 = vperm.xlu0 %586, %v584
      %v588 = vpop.permute.xlu0 %587
      %v590 = vmul.f32 %v581, %v588
      %v591 = vld [vmem:[%s5] sm:$0xff]
      %593 = vset.pattern.permute.xlu0 0
      %594 = vperm.xlu0 %593, %v591
      %v595 = vpop.permute.xlu0 %594
      %v597 = vadd.f32 %v590, %v595
      %v598 = vmax.f32 %v597, 0.0
      %v599 = vlaneseq
      %v600 = vand.u32 %v599, 127
      %vm601 = vcmp.lt.s32.totalorder %v600, 0
      %v602 = vsub.s32 0, %v600
      %v603 = vsel %vm601, %v602, %v600
      %v604 = vshrl.u32 %v603, 3
      %v605 = vand.u32 %v603, 7
      %v606 = vsub.s32 0, %v605
      %v607 = vsel %vm601, %v606, %v605
      %vm608 = vcmp.ne.s32.totalorder %v607, 0
      %vm609 = vcmp.lt.s32.totalorder %v607, 0
      %vm610 = vmand %vm609, %vm608
      %v611 = vadd.s32 %v607, 8
      %v612 = vsel %vm610, %v611, %v607
      %vm613 = vcmp.ge.s32.totalorder %v612, 1
      %vm614 = vcmp.le.s32.totalorder %v612, 6
      %616 = vrot.lane.b32.xlu0 %v598, 9
      %v617 = vpop.permute.xlu0 %616
      %vm619 = vcmask 72704
      %v620 = vsel %vm619, 0.0, %v617
      %vm621 = vcmask 596992
      %v622 = vsel %vm621, %v620, 0.0
      %v623 = vsel %vm613, 1, 0
      %vm624 = vcmp.eq.s32.totalorder %v623, 1
      %v625 = vsel %vm624, %v622, 0.0
      %v626 = vsel %vm614, 1, 0
      %vm627 = vcmp.eq.s32.totalorder %v626, 1
      %629 = vrot.lane.b32.xlu0 %v622, 126
      %v630 = vpop.permute.xlu0 %629
      %v632 = vsel %vm627, %v630, 0.0
      %633 = vrot.lane.b32.xlu0 %v622, 120
      %v634 = vpop.permute.xlu0 %633
      %v636 = vsel %vm624, %v634, 0.0
      %637 = vrot.lane.b32.xlu0 %v622, 118
      %v638 = vpop.permute.xlu0 %637
      %v640 = vsel %vm627, %v638, 0.0
      %641 = vrot.lane.b32.xlu0 %v622, 112
      %v642 = vpop.permute.xlu0 %641
      %v644 = vsel %vm624, %v642, 0.0
      %645 = vrot.lane.b32.xlu0 %v622, 110
      %v646 = vpop.permute.xlu0 %645
      %v648 = vsel %vm627, %v646, 0.0
      %649 = vrot.lane.b32.xlu0 %v622, 127
      %v650 = vpop.permute.xlu0 %649
      %652 = vrot.lane.b32.xlu0 %v622, 119
      %v653 = vpop.permute.xlu0 %652
      %655 = vrot.lane.b32.xlu0 %v622, 111
      %v656 = vpop.permute.xlu0 %655
      %v658 = vpack.c.bf16 %v650, %v625
      %v659 = vpack.c.bf16 %v636, %v632
      %v660 = vpack.c.bf16 %v640, %v653
      %v661 = vpack.c.bf16 %v656, %v644
      %v662 = vpack.c.bf16 %v648, %v648
      %v663 = vld [vmem:[%s6] sm:$0x3]
      %vm664 = vcmask 588800
      %v666 = vsel %vm664, %v663, 0
      %v669 = vsel %vm567, %v662, 0
      %671 = vmatpush.bf16.msra.mxu0 0
      %672 = vmatpush.bf16.msra.mxu0 0
      %673 = vmatpush.bf16.msra.mxu0 0
      %674 = vmatpush.bf16.msra.mxu0 %v669
      %675 = vmatpush.bf16.msra.mxu0 %v661
      %676 = vmatpush.bf16.msra.mxu0 %v660
      %677 = vmatpush.bf16.msra.mxu0 %v659
      %678 = vmatpush.bf16.msra.mxu0 %v658
      %679 = vmatmul.bf16.gmra.mxu0 %v666
      %v680 = vpop.f32.mrf.mxu0
      %v681 = vadd.f32 0.0, %v680
      %v682 = vpop.f32.mrf.mxu0
      %683 = vdwg.mxu0
      %v684 = vld [vmem:[%s7] sm:$0xff]
      %v685 = vld [vmem:[%s7 + $0x8] sm:$0xf]
      %687 = vset.pattern.permute.xlu0 0
      %688 = vperm.xlu0 %687, %v684
      %v689 = vpop.permute.xlu0 %688
      %692 = vset.pattern.permute.xlu0 0
      %693 = vperm.xlu0 %692, %v685
      %v694 = vpop.permute.xlu0 %693
      %v696 = vmul.f32 %v545, %v689
      %v697 = vmul.f32 %v681, %v694
      %v698 = vld [vmem:[%s8] sm:$0xff]
      %v699 = vld [vmem:[%s8 + $0x8] sm:$0xf]
      %701 = vset.pattern.permute.xlu0 0
      %702 = vperm.xlu0 %701, %v698
      %v703 = vpop.permute.xlu0 %702
      %706 = vset.pattern.permute.xlu0 0
      %707 = vperm.xlu0 %706, %v699
      %v708 = vpop.permute.xlu0 %707
      %v710 = vadd.f32 %v696, %v703
      %v711 = vadd.f32 %v697, %v708
      %v712 = vmax.f32 %v710, 0.0
      %v713 = vmax.f32 %v711, 0.0
      %v714 = vld [vmem:[%s9] sm:$0xf]
      %v715 = vpack.c.bf16 %v713, %v712
      %vm716 = vcmask 97280
      %v718 = vsel %vm716, %v714, 0
      %vm720 = vcmask 1045504
      %v722 = vsel %vm720, %v715, 0
      %724 = vmatpush.bf16.msra.mxu0 0
      %725 = vmatpush.bf16.msra.mxu0 0
      %726 = vmatpush.bf16.msra.mxu0 0
      %727 = vmatpush.bf16.msra.mxu0 0
      %728 = vmatpush.bf16.msra.mxu0 0
      %729 = vmatpush.bf16.msra.mxu0 0
      %730 = vmatpush.bf16.msra.mxu0 0
      %731 = vmatpush.bf16.msra.mxu0 %v722
      %732 = vmatmul.bf16.gmra.mxu0 %v718
      %v733 = vpop.f32.mrf.mxu0
      %v734 = vadd.f32 0.0, %v733
      %v735 = vpop.f32.mrf.mxu0
      %736 = vdwg.mxu0
      %v737 = vld [vmem:[%s10] sm:$0xff]
      %739 = vset.pattern.permute.xlu0 0
      %740 = vperm.xlu0 %739, %v737
      %v741 = vpop.permute.xlu0 %740
      %v743 = vmul.f32 %v734, %v741
      %v744 = vld [vmem:[%s11] sm:$0xff]
      %746 = vset.pattern.permute.xlu0 0
      %747 = vperm.xlu0 %746, %v744
      %v748 = vpop.permute.xlu0 %747
      %v750 = vadd.f32 %v743, %v748
      %v751 = vmax.f32 %v750, 0.0
      %753 = vrot.lane.b32.xlu0 %v751, 9
      %v754 = vpop.permute.xlu0 %753
      %v756 = vsel %vm619, 0.0, %v754
      %v757 = vsel %vm621, %v756, 0.0
      %v758 = vsel %vm624, %v757, 0.0
      %760 = vrot.lane.b32.xlu0 %v757, 126
      %v761 = vpop.permute.xlu0 %760
      %v763 = vsel %vm627, %v761, 0.0
      %764 = vrot.lane.b32.xlu0 %v757, 120
      %v765 = vpop.permute.xlu0 %764
      %v767 = vsel %vm624, %v765, 0.0
      %768 = vrot.lane.b32.xlu0 %v757, 118
      %v769 = vpop.permute.xlu0 %768
      %v771 = vsel %vm627, %v769, 0.0
      %772 = vrot.lane.b32.xlu0 %v757, 112
      %v773 = vpop.permute.xlu0 %772
      %v775 = vsel %vm624, %v773, 0.0
      %776 = vrot.lane.b32.xlu0 %v757, 110
      %v777 = vpop.permute.xlu0 %776
      %v779 = vsel %vm627, %v777, 0.0
      %780 = vrot.lane.b32.xlu0 %v757, 127
      %v781 = vpop.permute.xlu0 %780
      %783 = vrot.lane.b32.xlu0 %v757, 119
      %v784 = vpop.permute.xlu0 %783
      %786 = vrot.lane.b32.xlu0 %v757, 111
      %v787 = vpop.permute.xlu0 %786
      %v789 = vpack.c.bf16 %v781, %v758
      %v790 = vpack.c.bf16 %v767, %v763
      %v791 = vpack.c.bf16 %v771, %v784
      %v792 = vpack.c.bf16 %v787, %v775
      %v793 = vpack.c.bf16 %v779, %v779
      %v794 = vld [vmem:[%s12] sm:$0x3]
      %v796 = vsel %vm664, %v794, 0
      %v799 = vsel %vm567, %v793, 0
      %801 = vmatpush.bf16.msra.mxu0 0
      %802 = vmatpush.bf16.msra.mxu0 0
      %803 = vmatpush.bf16.msra.mxu0 0
      %804 = vmatpush.bf16.msra.mxu0 %v799
      %805 = vmatpush.bf16.msra.mxu0 %v792
      %806 = vmatpush.bf16.msra.mxu0 %v791
      %807 = vmatpush.bf16.msra.mxu0 %v790
      %808 = vmatpush.bf16.msra.mxu0 %v789
      %809 = vmatmul.bf16.gmra.mxu0 %v796
      %v810 = vpop.f32.mrf.mxu0
      %v811 = vadd.f32 0.0, %v810
      %v812 = vpop.f32.mrf.mxu0
      %813 = vdwg.mxu0
      %v815 = vrot.slane %v811, 4
      %v817 = vsel %vm567, %v681, %v815
      %v818 = vld [vmem:[%s13] sm:$0xff]
      %v819 = vld [vmem:[%s13 + $0x8] sm:$0xff]
      %821 = vset.pattern.permute.xlu0 0
      %822 = vperm.xlu0 %821, %v818
      %v823 = vpop.permute.xlu0 %822
      %826 = vset.pattern.permute.xlu0 0
      %827 = vperm.xlu0 %826, %v819
      %v828 = vpop.permute.xlu0 %827
      %v830 = vmul.f32 %v545, %v823
      %v831 = vmul.f32 %v817, %v828
      %v832 = vld [vmem:[%s14] sm:$0xff]
      %v833 = vld [vmem:[%s14 + $0x8] sm:$0xff]
      %835 = vset.pattern.permute.xlu0 0
      %836 = vperm.xlu0 %835, %v832
      %v837 = vpop.permute.xlu0 %836
      %840 = vset.pattern.permute.xlu0 0
      %841 = vperm.xlu0 %840, %v833
      %v842 = vpop.permute.xlu0 %841
      %v844 = vadd.f32 %v830, %v837
      %v845 = vadd.f32 %v831, %v842
      %v846 = vmax.f32 %v844, 0.0
      %v847 = vmax.f32 %v845, 0.0
      %v848 = vld [vmem:[%s15] sm:$0xf]
      %v849 = vpack.c.bf16 %v847, %v846
      %vm850 = vcmask 130048
      %v852 = vsel %vm850, %v848, 0
      %854 = vmatpush.bf16.msra.mxu0 0
      %855 = vmatpush.bf16.msra.mxu0 0
      %856 = vmatpush.bf16.msra.mxu0 0
      %857 = vmatpush.bf16.msra.mxu0 0
      %858 = vmatpush.bf16.msra.mxu0 0
      %859 = vmatpush.bf16.msra.mxu0 0
      %860 = vmatpush.bf16.msra.mxu0 0
      %861 = vmatpush.bf16.msra.mxu0 %v849
      %862 = vmatmul.bf16.gmra.mxu0 %v852
      %v863 = vpop.f32.mrf.mxu0
      %v864 = vadd.f32 0.0, %v863
      %v865 = vpop.f32.mrf.mxu0
      %866 = vdwg.mxu0
      %v867 = vpack.c.bf16 %v864, %v864
      %v868 = vld [vmem:[%s16] sm:$0xf]
      %v869 = vld [vmem:[%s16 + $0x4] sm:$0xf]
      %v870 = vld [vmem:[%s16 + $0x8] sm:$0xf]
      %v871 = vld [vmem:[%s16 + $0xc] sm:$0xf]
      %v872 = vld [vmem:[%s16 + $0x10] sm:$0xf]
      %v873 = vld [vmem:[%s16 + $0x14] sm:$0xf]
      %v874 = vld [vmem:[%s16 + $0x18] sm:$0xf]
      %v875 = vld [vmem:[%s16 + $0x1c] sm:$0xf]
      %v884 = vunpack.c.l.b16 %v868
      %v885 = vunpack.c.l.b16 %v869
      %v886 = vunpack.c.l.b16 %v870
      %v887 = vunpack.c.l.b16 %v871
      %v888 = vunpack.c.l.b16 %v872
      %v889 = vunpack.c.l.b16 %v873
      %v890 = vunpack.c.l.b16 %v874
      %v891 = vunpack.c.l.b16 %v875
      %v892 = vpack.c.b16 %v885, %v884
      %v893 = vpack.c.b16 %v887, %v886
      %v894 = vpack.c.b16 %v889, %v888
      %v895 = vpack.c.b16 %v891, %v890
      %vm900 = vcmask 523264
      %v902 = vsel %vm900, %v867, 0
      %904 = vmatpush.bf16.msra.mxu0 0
      %905 = vmatpush.bf16.msra.mxu0 0
      %906 = vmatpush.bf16.msra.mxu0 0
      %907 = vmatpush.bf16.msra.mxu0 0
      %908 = vmatpush.bf16.msra.mxu0 %v895
      %909 = vmatpush.bf16.msra.mxu0 %v894
      %910 = vmatpush.bf16.msra.mxu0 %v893
      %911 = vmatpush.bf16.msra.mxu0 %v892
      %912 = vmatmul.bf16.gmra.mxu0 %v902
      %v913 = vpop.f32.mrf.mxu0
      %v914 = vadd.f32 0.0, %v913
      %v915 = vpop.f32.mrf.mxu0
      %916 = vdwg.mxu0
      %917 = vst.msk [vmem:[%s543] sm:$0xff] %vm850, %v914
      %p918 = scmp.lt.s32.totalorder %s28, 1
      %s919 = scalar_select %p918, %s28, 1
      %s920 = smul.addr %s919, 8
      %s921 = scalar_lea.vmem %s17, %s920
      // Predicated region
      $region89: #{encoder_forward.7} parent=87 // pred_check
        %p922 = pneg %p408
      $region90: #{encoder_forward.7} parent=87 // pred_check_branch
        %924 = sbr.rel (%p922) target = $region92
      $region91: #{encoder_forward.7} parent=87 // pred_region
        _
      $region92: #{encoder_forward.7} parent=87 // pred_fallthru
        _
    $region88: #{encoder_forward.7} parent=5 // pred_fallthru
      _
    %p925 = scmp.le.s32.totalorder 2, %s23
    // Predicated region
    $region93: #{encoder_forward.7} parent=5 // pred_check
      %p926 = pneg %p925
    $region94: #{encoder_forward.7} parent=5 // pred_check_branch
      %928 = sbr.rel (%p926) target = $region96
    $region95: #{encoder_forward.7} parent=5 // pred_region
      %s929 = ssub.s32 %s23, 2
      // Predicated region
      $region97: #{encoder_forward.7} parent=95 // pred_check
        %p930 = pneg %p414
      $region98: #{encoder_forward.7} parent=95 // pred_check_branch
        %932 = sbr.rel (%p930) target = $region100
      $region99: #{encoder_forward.7} parent=95 // pred_region
        %p933 = scmp.lt.s32.totalorder %s29, 1
        %s934 = scalar_select %p933, %s29, 1
        %s935 = smul.addr %s934, 8
        %s936 = scalar_lea.vmem %s17, %s935
      $region100: #{encoder_forward.7} parent=95 // pred_fallthru
        _
    $region96: #{encoder_forward.7} parent=5 // pred_fallthru
      _
  $region6: #{encoder_forward.7} parent=0 // loop_footer
    %s27 = sadd.s32 1, %s23
  $region7: #{encoder_forward.7} parent=0 // loop_footer_branch
    %22 = sbr.rel target = $region3
  $region8: #{encoder_forward.7} parent=0 // loop_exit
    _

// kernel: encoder_forward.8
$region0: #{encoder_forward.8}
  #allocation0 [shape = 'u32[]', space=smem, size = 0x4, offset = 0x4, fixed_abs, tag = 'smem constant byte address 0x4 - core index']
  #allocation1 [shape = 'u32[72,128]{1,0:T(1,128)}', space=vmem, size = 0x9000, scoped, tag = 'internal scratch']
  %s0 = inlined_call_operand.vmem [shape: f32[2,8,16], index: 0, kind: input, shape index: {}]
  %s1 = inlined_call_operand.vmem [shape: f32[8,1], index: 1, kind: input, shape index: {}]
  %s2 = inlined_call_operand.vmem [shape: f32[8,1], index: 2, kind: input, shape index: {}]
  %s3 = inlined_call_operand.vmem [shape: bf16[8,8], index: 3, kind: input, shape index: {}]
  %s4 = inlined_call_operand.vmem [shape: f32[8,1], index: 4, kind: input, shape index: {}]
  %s5 = inlined_call_operand.vmem [shape: f32[8,1], index: 5, kind: input, shape index: {}]
  %s6 = inlined_call_operand.vmem [shape: bf16[4,72], index: 6, kind: input, shape index: {}]
  %s7 = inlined_call_operand.vmem [shape: f32[12,1], index: 7, kind: input, shape index: {}]
  %s8 = inlined_call_operand.vmem [shape: f32[12,1], index: 8, kind: input, shape index: {}]
  %s9 = inlined_call_operand.vmem [shape: bf16[8,12], index: 9, kind: input, shape index: {}]
  %s10 = inlined_call_operand.vmem [shape: f32[8,1], index: 10, kind: input, shape index: {}]
  %s11 = inlined_call_operand.vmem [shape: f32[8,1], index: 11, kind: input, shape index: {}]
  %s12 = inlined_call_operand.vmem [shape: bf16[4,72], index: 12, kind: input, shape index: {}]
  %s13 = inlined_call_operand.vmem [shape: f32[16,1], index: 13, kind: input, shape index: {}]
  %s14 = inlined_call_operand.vmem [shape: f32[16,1], index: 14, kind: input, shape index: {}]
  %s15 = inlined_call_operand.vmem [shape: bf16[8,16], index: 15, kind: input, shape index: {}]
  %s16 = inlined_call_operand.vmem [shape: bf16[16,4], index: 16, kind: input, shape index: {}]
  %s17 = inlined_call_operand.vmem [shape: f32[2,8,4], index: 17, kind: output, shape index: {}]
  %s18 = sld [smem:[#allocation0]]
  $region101: #{encoder_forward.8} parent=0
    _
  %s20 = ssub.s32 1, %s18
  %s21 = scalar_select 0, %s20, %s18
  loop: start=0, step=1, limit=4
  $region2: #{encoder_forward.8} parent=0 // loop_pre_header
    _
  $region3: #{encoder_forward.8} parent=0 // loop_header
    %s23 = sphi 0, %s27
    %p24 = scmp.ge.s32.totalorder %s23, 4
    %s33 = sphi 0, %s35
    %s36 = sphi 0, %s33
    %s37 = sphi 0, %s36
    %s53 = sphi 0, %s37
    %s57 = sphi 0, %s57
    %s59 = sphi 0, %s57
    %s60 = sphi 0, %s59
    %s74 = sphi 0, %s60
    %s78 = sphi 0, %s78
    %s80 = sphi 0, %s78
    %s81 = sphi 0, %s80
    %s95 = sphi 0, %s81
    %s99 = sphi 0, %s99
    %s101 = sphi 0, %s99
    %s102 = sphi 0, %s101
    %s116 = sphi 0, %s102
    %s120 = sphi 0, %s120
    %s122 = sphi 0, %s120
    %s123 = sphi 0, %s122
    %s137 = sphi 0, %s123
    %s141 = sphi 0, %s141
    %s143 = sphi 0, %s141
    %s144 = sphi 0, %s143
    %s158 = sphi 0, %s144
    %s162 = sphi 0, %s162
    %s164 = sphi 0, %s162
    %s165 = sphi 0, %s164
    %s179 = sphi 0, %s165
    %s183 = sphi 0, %s183
    %s185 = sphi 0, %s183
    %s186 = sphi 0, %s185
    %s200 = sphi 0, %s186
    %s204 = sphi 0, %s204
    %s206 = sphi 0, %s204
    %s207 = sphi 0, %s206
    %s221 = sphi 0, %s207
    %s225 = sphi 0, %s225
    %s227 = sphi 0, %s225
    %s228 = sphi 0, %s227
    %s242 = sphi 0, %s228
    %s246 = sphi 0, %s246
    %s248 = sphi 0, %s246
    %s249 = sphi 0, %s248
    %s263 = sphi 0, %s249
    %s267 = sphi 0, %s267
    %s269 = sphi 0, %s267
    %s270 = sphi 0, %s269
    %s284 = sphi 0, %s270
    %s288 = sphi 0, %s288
    %s290 = sphi 0, %s288
    %s291 = sphi 0, %s290
    %s305 = sphi 0, %s291
    %s309 = sphi 0, %s309
    %s311 = sphi 0, %s309
    %s312 = sphi 0, %s311
    %s326 = sphi 0, %s312
    %s330 = sphi 0, %s330
    %s332 = sphi 0, %s330
    %s333 = sphi 0, %s332
    %s347 = sphi 0, %s333
    %s351 = sphi 0, %s351
    %s353 = sphi 0, %s351
    %s354 = sphi 0, %s353
    %s368 = sphi 0, %s354
    %s372 = sphi 0, %s372
    %s374 = sphi 0, %s372
    %s375 = sphi 0, %s374
    %s389 = sphi 0, %s375
    %s395 = sphi 0, %s397
    %s398 = sphi 0, %s395
    %s399 = sphi 0, %s398
    %s415 = sphi 0, %s399
  $region4: #{encoder_forward.8} parent=0 // loop_header_branch
    %26 = sbr.rel (%p24) target = $region8
  $region5: #{encoder_forward.8} parent=0 // loop_body
    %s28 = ssub.s32 %s23, 1
    %s29 = ssub.s32 %s23, 2
    %s30 = sadd.s32 %s23, 1
    %s31 = ssub.s32 %s23, %s30
    %p32 = scmp.eq.s32.totalorder %s31, 0
    %s34 = sadd.s32 %s33, 1
    %s35 = scalar_select %p32, %s33, %s34
    %p38 = pneg %p32
    %p39 = scmp.eq.s32.totalorder %s23, 1
    %p40 = por %p38, %p39
    %p41 = scmp.ne.s32.totalorder %s33, %s36
    %p42 = scmp.eq.s32.totalorder %s23, 0
    %p43 = por %p41, %p42
    %p44 = scmp.ne.s32.totalorder %s33, %s36
    %p45 = scmp.eq.s32.totalorder %s28, 1
    %p46 = por %p44, %p45
    %p47 = scmp.ne.s32.totalorder %s36, %s37
    %p48 = scmp.eq.s32.totalorder %s28, 0
    %p49 = por %p47, %p48
    %p50 = scmp.ne.s32.totalorder %s36, %s37
    %p51 = scmp.eq.s32.totalorder %s29, 1
    %p52 = por %p50, %p51
    %p54 = scmp.ne.s32.totalorder %s37, %s53
    %p55 = scmp.eq.s32.totalorder %s29, 0
    %p56 = por %p54, %p55
    %s58 = sadd.s32 %s57, 1
    %p61 = scmp.eq.s32.totalorder %s23, 1
    %p62 = scmp.ne.s32.totalorder %s57, %s59
    %p63 = scmp.eq.s32.totalorder %s23, 0
    %p64 = por %p62, %p63
    %p65 = scmp.ne.s32.totalorder %s57, %s59
    %p66 = scmp.eq.s32.totalorder %s28, 1
    %p67 = por %p65, %p66
    %p68 = scmp.ne.s32.totalorder %s59, %s60
    %p69 = scmp.eq.s32.totalorder %s28, 0
    %p70 = por %p68, %p69
    %p71 = scmp.ne.s32.totalorder %s59, %s60
    %p72 = scmp.eq.s32.totalorder %s29, 1
    %p73 = por %p71, %p72
    %p75 = scmp.ne.s32.totalorder %s60, %s74
    %p76 = scmp.eq.s32.totalorder %s29, 0
    %p77 = por %p75, %p76
    %s79 = sadd.s32 %s78, 1
    %p82 = scmp.eq.s32.totalorder %s23, 1
    %p83 = scmp.ne.s32.totalorder %s78, %s80
    %p84 = scmp.eq.s32.totalorder %s23, 0
    %p85 = por %p83, %p84
    %p86 = scmp.ne.s32.totalorder %s78, %s80
    %p87 = scmp.eq.s32.totalorder %s28, 1
    %p88 = por %p86, %p87
    %p89 = scmp.ne.s32.totalorder %s80, %s81
    %p90 = scmp.eq.s32.totalorder %s28, 0
    %p91 = por %p89, %p90
    %p92 = scmp.ne.s32.totalorder %s80, %s81
    %p93 = scmp.eq.s32.totalorder %s29, 1
    %p94 = por %p92, %p93
    %p96 = scmp.ne.s32.totalorder %s81, %s95
    %p97 = scmp.eq.s32.totalorder %s29, 0
    %p98 = por %p96, %p97
    %s100 = sadd.s32 %s99, 1
    %p103 = scmp.eq.s32.totalorder %s23, 1
    %p104 = scmp.ne.s32.totalorder %s99, %s101
    %p105 = scmp.eq.s32.totalorder %s23, 0
    %p106 = por %p104, %p105
    %p107 = scmp.ne.s32.totalorder %s99, %s101
    %p108 = scmp.eq.s32.totalorder %s28, 1
    %p109 = por %p107, %p108
    %p110 = scmp.ne.s32.totalorder %s101, %s102
    %p111 = scmp.eq.s32.totalorder %s28, 0
    %p112 = por %p110, %p111
    %p113 = scmp.ne.s32.totalorder %s101, %s102
    %p114 = scmp.eq.s32.totalorder %s29, 1
    %p115 = por %p113, %p114
    %p117 = scmp.ne.s32.totalorder %s102, %s116
    %p118 = scmp.eq.s32.totalorder %s29, 0
    %p119 = por %p117, %p118
    %s121 = sadd.s32 %s120, 1
    %p124 = scmp.eq.s32.totalorder %s23, 1
    %p125 = scmp.ne.s32.totalorder %s120, %s122
    %p126 = scmp.eq.s32.totalorder %s23, 0
    %p127 = por %p125, %p126
    %p128 = scmp.ne.s32.totalorder %s120, %s122
    %p129 = scmp.eq.s32.totalorder %s28, 1
    %p130 = por %p128, %p129
    %p131 = scmp.ne.s32.totalorder %s122, %s123
    %p132 = scmp.eq.s32.totalorder %s28, 0
    %p133 = por %p131, %p132
    %p134 = scmp.ne.s32.totalorder %s122, %s123
    %p135 = scmp.eq.s32.totalorder %s29, 1
    %p136 = por %p134, %p135
    %p138 = scmp.ne.s32.totalorder %s123, %s137
    %p139 = scmp.eq.s32.totalorder %s29, 0
    %p140 = por %p138, %p139
    %s142 = sadd.s32 %s141, 1
    %p145 = scmp.eq.s32.totalorder %s23, 1
    %p146 = scmp.ne.s32.totalorder %s141, %s143
    %p147 = scmp.eq.s32.totalorder %s23, 0
    %p148 = por %p146, %p147
    %p149 = scmp.ne.s32.totalorder %s141, %s143
    %p150 = scmp.eq.s32.totalorder %s28, 1
    %p151 = por %p149, %p150
    %p152 = scmp.ne.s32.totalorder %s143, %s144
    %p153 = scmp.eq.s32.totalorder %s28, 0
    %p154 = por %p152, %p153
    %p155 = scmp.ne.s32.totalorder %s143, %s144
    %p156 = scmp.eq.s32.totalorder %s29, 1
    %p157 = por %p155, %p156
    %p159 = scmp.ne.s32.totalorder %s144, %s158
    %p160 = scmp.eq.s32.totalorder %s29, 0
    %p161 = por %p159, %p160
    %s163 = sadd.s32 %s162, 1
    %p166 = scmp.eq.s32.totalorder %s23, 1
    %p167 = scmp.ne.s32.totalorder %s162, %s164
    %p168 = scmp.eq.s32.totalorder %s23, 0
    %p169 = por %p167, %p168
    %p170 = scmp.ne.s32.totalorder %s162, %s164
    %p171 = scmp.eq.s32.totalorder %s28, 1
    %p172 = por %p170, %p171
    %p173 = scmp.ne.s32.totalorder %s164, %s165
    %p174 = scmp.eq.s32.totalorder %s28, 0
    %p175 = por %p173, %p174
    %p176 = scmp.ne.s32.totalorder %s164, %s165
    %p177 = scmp.eq.s32.totalorder %s29, 1
    %p178 = por %p176, %p177
    %p180 = scmp.ne.s32.totalorder %s165, %s179
    %p181 = scmp.eq.s32.totalorder %s29, 0
    %p182 = por %p180, %p181
    %s184 = sadd.s32 %s183, 1
    %p187 = scmp.eq.s32.totalorder %s23, 1
    %p188 = scmp.ne.s32.totalorder %s183, %s185
    %p189 = scmp.eq.s32.totalorder %s23, 0
    %p190 = por %p188, %p189
    %p191 = scmp.ne.s32.totalorder %s183, %s185
    %p192 = scmp.eq.s32.totalorder %s28, 1
    %p193 = por %p191, %p192
    %p194 = scmp.ne.s32.totalorder %s185, %s186
    %p195 = scmp.eq.s32.totalorder %s28, 0
    %p196 = por %p194, %p195
    %p197 = scmp.ne.s32.totalorder %s185, %s186
    %p198 = scmp.eq.s32.totalorder %s29, 1
    %p199 = por %p197, %p198
    %p201 = scmp.ne.s32.totalorder %s186, %s200
    %p202 = scmp.eq.s32.totalorder %s29, 0
    %p203 = por %p201, %p202
    %s205 = sadd.s32 %s204, 1
    %p208 = scmp.eq.s32.totalorder %s23, 1
    %p209 = scmp.ne.s32.totalorder %s204, %s206
    %p210 = scmp.eq.s32.totalorder %s23, 0
    %p211 = por %p209, %p210
    %p212 = scmp.ne.s32.totalorder %s204, %s206
    %p213 = scmp.eq.s32.totalorder %s28, 1
    %p214 = por %p212, %p213
    %p215 = scmp.ne.s32.totalorder %s206, %s207
    %p216 = scmp.eq.s32.totalorder %s28, 0
    %p217 = por %p215, %p216
    %p218 = scmp.ne.s32.totalorder %s206, %s207
    %p219 = scmp.eq.s32.totalorder %s29, 1
    %p220 = por %p218, %p219
    %p222 = scmp.ne.s32.totalorder %s207, %s221
    %p223 = scmp.eq.s32.totalorder %s29, 0
    %p224 = por %p222, %p223
    %s226 = sadd.s32 %s225, 1
    %p229 = scmp.eq.s32.totalorder %s23, 1
    %p230 = scmp.ne.s32.totalorder %s225, %s227
    %p231 = scmp.eq.s32.totalorder %s23, 0
    %p232 = por %p230, %p231
    %p233 = scmp.ne.s32.totalorder %s225, %s227
    %p234 = scmp.eq.s32.totalorder %s28, 1
    %p235 = por %p233, %p234
    %p236 = scmp.ne.s32.totalorder %s227, %s228
    %p237 = scmp.eq.s32.totalorder %s28, 0
    %p238 = por %p236, %p237
    %p239 = scmp.ne.s32.totalorder %s227, %s228
    %p240 = scmp.eq.s32.totalorder %s29, 1
    %p241 = por %p239, %p240
    %p243 = scmp.ne.s32.totalorder %s228, %s242
    %p244 = scmp.eq.s32.totalorder %s29, 0
    %p245 = por %p243, %p244
    %s247 = sadd.s32 %s246, 1
    %p250 = scmp.eq.s32.totalorder %s23, 1
    %p251 = scmp.ne.s32.totalorder %s246, %s248
    %p252 = scmp.eq.s32.totalorder %s23, 0
    %p253 = por %p251, %p252
    %p254 = scmp.ne.s32.totalorder %s246, %s248
    %p255 = scmp.eq.s32.totalorder %s28, 1
    %p256 = por %p254, %p255
    %p257 = scmp.ne.s32.totalorder %s248, %s249
    %p258 = scmp.eq.s32.totalorder %s28, 0
    %p259 = por %p257, %p258
    %p260 = scmp.ne.s32.totalorder %s248, %s249
    %p261 = scmp.eq.s32.totalorder %s29, 1
    %p262 = por %p260, %p261
    %p264 = scmp.ne.s32.totalorder %s249, %s263
    %p265 = scmp.eq.s32.totalorder %s29, 0
    %p266 = por %p264, %p265
    %s268 = sadd.s32 %s267, 1
    %p271 = scmp.eq.s32.totalorder %s23, 1
    %p272 = scmp.ne.s32.totalorder %s267, %s269
    %p273 = scmp.eq.s32.totalorder %s23, 0
    %p274 = por %p272, %p273
    %p275 = scmp.ne.s32.totalorder %s267, %s269
    %p276 = scmp.eq.s32.totalorder %s28, 1
    %p277 = por %p275, %p276
    %p278 = scmp.ne.s32.totalorder %s269, %s270
    %p279 = scmp.eq.s32.totalorder %s28, 0
    %p280 = por %p278, %p279
    %p281 = scmp.ne.s32.totalorder %s269, %s270
    %p282 = scmp.eq.s32.totalorder %s29, 1
    %p283 = por %p281, %p282
    %p285 = scmp.ne.s32.totalorder %s270, %s284
    %p286 = scmp.eq.s32.totalorder %s29, 0
    %p287 = por %p285, %p286
    %s289 = sadd.s32 %s288, 1
    %p292 = scmp.eq.s32.totalorder %s23, 1
    %p293 = scmp.ne.s32.totalorder %s288, %s290
    %p294 = scmp.eq.s32.totalorder %s23, 0
    %p295 = por %p293, %p294
    %p296 = scmp.ne.s32.totalorder %s288, %s290
    %p297 = scmp.eq.s32.totalorder %s28, 1
    %p298 = por %p296, %p297
    %p299 = scmp.ne.s32.totalorder %s290, %s291
    %p300 = scmp.eq.s32.totalorder %s28, 0
    %p301 = por %p299, %p300
    %p302 = scmp.ne.s32.totalorder %s290, %s291
    %p303 = scmp.eq.s32.totalorder %s29, 1
    %p304 = por %p302, %p303
    %p306 = scmp.ne.s32.totalorder %s291, %s305
    %p307 = scmp.eq.s32.totalorder %s29, 0
    %p308 = por %p306, %p307
    %s310 = sadd.s32 %s309, 1
    %p313 = scmp.eq.s32.totalorder %s23, 1
    %p314 = scmp.ne.s32.totalorder %s309, %s311
    %p315 = scmp.eq.s32.totalorder %s23, 0
    %p316 = por %p314, %p315
    %p317 = scmp.ne.s32.totalorder %s309, %s311
    %p318 = scmp.eq.s32.totalorder %s28, 1
    %p319 = por %p317, %p318
    %p320 = scmp.ne.s32.totalorder %s311, %s312
    %p321 = scmp.eq.s32.totalorder %s28, 0
    %p322 = por %p320, %p321
    %p323 = scmp.ne.s32.totalorder %s311, %s312
    %p324 = scmp.eq.s32.totalorder %s29, 1
    %p325 = por %p323, %p324
    %p327 = scmp.ne.s32.totalorder %s312, %s326
    %p328 = scmp.eq.s32.totalorder %s29, 0
    %p329 = por %p327, %p328
    %s331 = sadd.s32 %s330, 1
    %p334 = scmp.eq.s32.totalorder %s23, 1
    %p335 = scmp.ne.s32.totalorder %s330, %s332
    %p336 = scmp.eq.s32.totalorder %s23, 0
    %p337 = por %p335, %p336
    %p338 = scmp.ne.s32.totalorder %s330, %s332
    %p339 = scmp.eq.s32.totalorder %s28, 1
    %p340 = por %p338, %p339
    %p341 = scmp.ne.s32.totalorder %s332, %s333
    %p342 = scmp.eq.s32.totalorder %s28, 0
    %p343 = por %p341, %p342
    %p344 = scmp.ne.s32.totalorder %s332, %s333
    %p345 = scmp.eq.s32.totalorder %s29, 1
    %p346 = por %p344, %p345
    %p348 = scmp.ne.s32.totalorder %s333, %s347
    %p349 = scmp.eq.s32.totalorder %s29, 0
    %p350 = por %p348, %p349
    %s352 = sadd.s32 %s351, 1
    %p355 = scmp.eq.s32.totalorder %s23, 1
    %p356 = scmp.ne.s32.totalorder %s351, %s353
    %p357 = scmp.eq.s32.totalorder %s23, 0
    %p358 = por %p356, %p357
    %p359 = scmp.ne.s32.totalorder %s351, %s353
    %p360 = scmp.eq.s32.totalorder %s28, 1
    %p361 = por %p359, %p360
    %p362 = scmp.ne.s32.totalorder %s353, %s354
    %p363 = scmp.eq.s32.totalorder %s28, 0
    %p364 = por %p362, %p363
    %p365 = scmp.ne.s32.totalorder %s353, %s354
    %p366 = scmp.eq.s32.totalorder %s29, 1
    %p367 = por %p365, %p366
    %p369 = scmp.ne.s32.totalorder %s354, %s368
    %p370 = scmp.eq.s32.totalorder %s29, 0
    %p371 = por %p369, %p370
    %s373 = sadd.s32 %s372, 1
    %p376 = scmp.eq.s32.totalorder %s23, 1
    %p377 = scmp.ne.s32.totalorder %s372, %s374
    %p378 = scmp.eq.s32.totalorder %s23, 0
    %p379 = por %p377, %p378
    %p380 = scmp.ne.s32.totalorder %s372, %s374
    %p381 = scmp.eq.s32.totalorder %s28, 1
    %p382 = por %p380, %p381
    %p383 = scmp.ne.s32.totalorder %s374, %s375
    %p384 = scmp.eq.s32.totalorder %s28, 0
    %p385 = por %p383, %p384
    %p386 = scmp.ne.s32.totalorder %s374, %s375
    %p387 = scmp.eq.s32.totalorder %s29, 1
    %p388 = por %p386, %p387
    %p390 = scmp.ne.s32.totalorder %s375, %s389
    %p391 = scmp.eq.s32.totalorder %s29, 0
    %p392 = por %p390, %p391
    %s393 = ssub.s32 %s23, %s30
    %p394 = scmp.eq.s32.totalorder %s393, 0
    %s396 = sadd.s32 %s395, 1
    %s397 = scalar_select %p394, %s395, %s396
    %p400 = pneg %p394
    %p401 = scmp.eq.s32.totalorder %s23, 1
    %p402 = por %p400, %p401
    %p403 = scmp.ne.s32.totalorder %s395, %s398
    %p404 = scmp.eq.s32.totalorder %s23, 0
    %p405 = por %p403, %p404
    %p406 = scmp.ne.s32.totalorder %s395, %s398
    %p407 = scmp.eq.s32.totalorder %s28, 1
    %p408 = por %p406, %p407
    %p409 = scmp.ne.s32.totalorder %s398, %s399
    %p410 = scmp.eq.s32.totalorder %s28, 0
    %p411 = por %p409, %p410
    %p412 = scmp.ne.s32.totalorder %s398, %s399
    %p413 = scmp.eq.s32.totalorder %s29, 1
    %p414 = por %p412, %p413
    %p416 = scmp.ne.s32.totalorder %s399, %s415
    %p417 = scmp.eq.s32.totalorder %s29, 0
    %p418 = por %p416, %p417
    %p419 = scmp.le.s32.totalorder 1, %s23
    %p420 = scmp.lt.s32.totalorder %s23, 3
    %p421 = pnand %p419, %p420
    %p422 = pneg %p421
    // Predicated region
    $region9: #{encoder_forward.8} parent=5 // pred_check
      _
    $region10: #{encoder_forward.8} parent=5 // pred_check_branch
      %424 = sbr.rel (%p421) target = $region12
    $region11: #{encoder_forward.8} parent=5 // pred_region
      %s425 = ssub.s32 %s23, 1
      // Predicated region
      $region13: #{encoder_forward.8} parent=11 // pred_check
        %p426 = pneg %p70
      $region14: #{encoder_forward.8} parent=11 // pred_check_branch
        %428 = sbr.rel (%p426) target = $region16
      $region15: #{encoder_forward.8} parent=11 // pred_region
        _
      $region16: #{encoder_forward.8} parent=11 // pred_fallthru
        _
      // Predicated region
      $region17: #{encoder_forward.8} parent=11 // pred_check
        %p429 = pneg %p91
      $region18: #{encoder_forward.8} parent=11 // pred_check_branch
        %431 = sbr.rel (%p429) target = $region20
      $region19: #{encoder_forward.8} parent=11 // pred_region
        _
      $region20: #{encoder_forward.8} parent=11 // pred_fallthru
        _
      // Predicated region
      $region21: #{encoder_forward.8} parent=11 // pred_check
        %p432 = pneg %p112
      $region22: #{encoder_forward.8} parent=11 // pred_check_branch
        %434 = sbr.rel (%p432) target = $region24
      $region23: #{encoder_forward.8} parent=11 // pred_region
        _
      $region24: #{encoder_forward.8} parent=11 // pred_fallthru
        _
      // Predicated region
      $region25: #{encoder_forward.8} parent=11 // pred_check
        %p435 = pneg %p133
      $region26: #{encoder_forward.8} parent=11 // pred_check_branch
        %437 = sbr.rel (%p435) target = $region28
      $region27: #{encoder_forward.8} parent=11 // pred_region
        _
      $region28: #{encoder_forward.8} parent=11 // pred_fallthru
        _
      // Predicated region
      $region29: #{encoder_forward.8} parent=11 // pred_check
        %p438 = pneg %p154
      $region30: #{encoder_forward.8} parent=11 // pred_check_branch
        %440 = sbr.rel (%p438) target = $region32
      $region31: #{encoder_forward.8} parent=11 // pred_region
        _
      $region32: #{encoder_forward.8} parent=11 // pred_fallthru
        _
      // Predicated region
      $region33: #{encoder_forward.8} parent=11 // pred_check
        %p441 = pneg %p175
      $region34: #{encoder_forward.8} parent=11 // pred_check_branch
        %443 = sbr.rel (%p441) target = $region36
      $region35: #{encoder_forward.8} parent=11 // pred_region
        _
      $region36: #{encoder_forward.8} parent=11 // pred_fallthru
        _
      // Predicated region
      $region37: #{encoder_forward.8} parent=11 // pred_check
        %p444 = pneg %p196
      $region38: #{encoder_forward.8} parent=11 // pred_check_branch
        %446 = sbr.rel (%p444) target = $region40
      $region39: #{encoder_forward.8} parent=11 // pred_region
        _
      $region40: #{encoder_forward.8} parent=11 // pred_fallthru
        _
      // Predicated region
      $region41: #{encoder_forward.8} parent=11 // pred_check
        %p447 = pneg %p217
      $region42: #{encoder_forward.8} parent=11 // pred_check_branch
        %449 = sbr.rel (%p447) target = $region44
      $region43: #{encoder_forward.8} parent=11 // pred_region
        _
      $region44: #{encoder_forward.8} parent=11 // pred_fallthru
        _
      // Predicated region
      $region45: #{encoder_forward.8} parent=11 // pred_check
        %p450 = pneg %p238
      $region46: #{encoder_forward.8} parent=11 // pred_check_branch
        %452 = sbr.rel (%p450) target = $region48
      $region47: #{encoder_forward.8} parent=11 // pred_region
        _
      $region48: #{encoder_forward.8} parent=11 // pred_fallthru
        _
      // Predicated region
      $region49: #{encoder_forward.8} parent=11 // pred_check
        %p453 = pneg %p259
      $region50: #{encoder_forward.8} parent=11 // pred_check_branch
        %455 = sbr.rel (%p453) target = $region52
      $region51: #{encoder_forward.8} parent=11 // pred_region
        _
      $region52: #{encoder_forward.8} parent=11 // pred_fallthru
        _
      // Predicated region
      $region53: #{encoder_forward.8} parent=11 // pred_check
        %p456 = pneg %p280
      $region54: #{encoder_forward.8} parent=11 // pred_check_branch
        %458 = sbr.rel (%p456) target = $region56
      $region55: #{encoder_forward.8} parent=11 // pred_region
        _
      $region56: #{encoder_forward.8} parent=11 // pred_fallthru
        _
      // Predicated region
      $region57: #{encoder_forward.8} parent=11 // pred_check
        %p459 = pneg %p301
      $region58: #{encoder_forward.8} parent=11 // pred_check_branch
        %461 = sbr.rel (%p459) target = $region60
      $region59: #{encoder_forward.8} parent=11 // pred_region
        _
      $region60: #{encoder_forward.8} parent=11 // pred_fallthru
        _
      // Predicated region
      $region61: #{encoder_forward.8} parent=11 // pred_check
        %p462 = pneg %p322
      $region62: #{encoder_forward.8} parent=11 // pred_check_branch
        %464 = sbr.rel (%p462) target = $region64
      $region63: #{encoder_forward.8} parent=11 // pred_region
        _
      $region64: #{encoder_forward.8} parent=11 // pred_fallthru
        _
      // Predicated region
      $region65: #{encoder_forward.8} parent=11 // pred_check
        %p465 = pneg %p343
      $region66: #{encoder_forward.8} parent=11 // pred_check_branch
        %467 = sbr.rel (%p465) target = $region68
      $region67: #{encoder_forward.8} parent=11 // pred_region
        _
      $region68: #{encoder_forward.8} parent=11 // pred_fallthru
        _
      // Predicated region
      $region69: #{encoder_forward.8} parent=11 // pred_check
        %p468 = pneg %p364
      $region70: #{encoder_forward.8} parent=11 // pred_check_branch
        %470 = sbr.rel (%p468) target = $region72
      $region71: #{encoder_forward.8} parent=11 // pred_region
        _
      $region72: #{encoder_forward.8} parent=11 // pred_fallthru
        _
      // Predicated region
      $region73: #{encoder_forward.8} parent=11 // pred_check
        %p471 = pneg %p385
      $region74: #{encoder_forward.8} parent=11 // pred_check_branch
        %473 = sbr.rel (%p471) target = $region76
      $region75: #{encoder_forward.8} parent=11 // pred_region
        _
      $region76: #{encoder_forward.8} parent=11 // pred_fallthru
        _
    $region12: #{encoder_forward.8} parent=5 // pred_fallthru
      _
    %p474 = scmp.lt.s32.totalorder %s23, 2
    // Predicated region
    $region77: #{encoder_forward.8} parent=5 // pred_check
      %p475 = pneg %p474
    $region78: #{encoder_forward.8} parent=5 // pred_check_branch
      %477 = sbr.rel (%p475) target = $region80
    $region79: #{encoder_forward.8} parent=5 // pred_region
      // Predicated region
      $region81: #{encoder_forward.8} parent=79 // pred_check
        %p478 = pneg %p43
      $region82: #{encoder_forward.8} parent=79 // pred_check_branch
        %480 = sbr.rel (%p478) target = $region84
      $region83: #{encoder_forward.8} parent=79 // pred_region
        %p481 = scmp.lt.s32.totalorder %s23, 1
        %s482 = scalar_select %p481, %s23, 1
        %s483 = smul.addr %s482, 8
        %s484 = scalar_lea.vmem %s0, %s483
      $region84: #{encoder_forward.8} parent=79 // pred_fallthru
        _
    $region80: #{encoder_forward.8} parent=5 // pred_fallthru
      _
    %p485 = scmp.le.s32.totalorder 1, %s23
    %p486 = scmp.lt.s32.totalorder %s23, 3
    %p487 = pnand %p485, %p486
    %p488 = pneg %p487
    // Predicated region
    $region85: #{encoder_forward.8} parent=5 // pred_check
      _
    $region86: #{encoder_forward.8} parent=5 // pred_check_branch
      %490 = sbr.rel (%p487) target = $region88
    $region87: #{encoder_forward.8} parent=5 // pred_region
      %s491 = ssub.s32 %s23, 1
      %p492 = scmp.lt.s32.totalorder %s28, 1
      %s493 = scalar_select %p492, %s28, 1
      %s494 = smul.addr %s493, 8
      %s495 = scalar_lea.vmem %s0, %s494
      %p496 = pneg %p49
      %p497 = pneg %p46
      %p498 = pneg %p70
      %p499 = pneg %p67
      %p500 = pneg %p91
      %p501 = pneg %p88
      %p502 = pneg %p112
      %p503 = pneg %p109
      %p504 = pneg %p133
      %p505 = pneg %p130
      %p506 = pneg %p154
      %p507 = pneg %p151
      %p508 = pneg %p175
      %p509 = pneg %p172
      %p510 = pneg %p196
      %p511 = pneg %p193
      %p512 = pneg %p217
      %p513 = pneg %p214
      %p514 = pneg %p238
      %p515 = pneg %p235
      %p516 = pneg %p259
      %p517 = pneg %p256
      %p518 = pneg %p280
      %p519 = pneg %p277
      %p520 = pneg %p301
      %p521 = pneg %p298
      %p522 = pneg %p322
      %p523 = pneg %p319
      %p524 = pneg %p343
      %p525 = pneg %p340
      %p526 = pneg %p364
      %p527 = pneg %p361
      %p528 = pneg %p385
      %p529 = pneg %p382
      %p530 = pneg %p411
      %p531 = pneg %p408
      %p532 = scmp.lt.s32.totalorder %s28, 1
      %s533 = scalar_select %p532, %s28, 1
      %s534 = smul.addr %s533, 8
      %s535 = scalar_lea.vmem %s17, %s534
      %p536 = scmp.lt.s32.totalorder %s28, 1
      %s537 = scalar_select %p536, %s28, 1
      %s538 = smul.addr %s537, 8
      %s539 = scalar_lea.vmem %s0, %s538
      %p540 = scmp.lt.s32.totalorder %s28, 1
      %s541 = scalar_select %p540, %s28, 1
      %s542 = smul.addr %s541, 8
      %s543 = scalar_lea.vmem %s17, %s542
      %v545 = vld [vmem:[%s539] sm:$0xff]
      %v546 = vld [vmem:[%s1] sm:$0xff]
      %548 = vset.pattern.permute.xlu0 0
      %549 = vperm.xlu0 %548, %v546
      %v550 = vpop.permute.xlu0 %549
      %v552 = vmul.f32 %v545, %v550
      %v553 = vld [vmem:[%s2] sm:$0xff]
      %555 = vset.pattern.permute.xlu0 0
      %556 = vperm.xlu0 %555, %v553
      %v557 = vpop.permute.xlu0 %556
      %v559 = vadd.f32 %v552, %v557
      %v560 = vmax.f32 %v559, 0.0
      %v561 = vld [vmem:[%s3] sm:$0xf]
      %v562 = vpack.c.bf16 %v560, %v560
      %vm563 = vcmask 64512
      %v565 = vsel %vm563, %v561, 0
      %vm567 = vcmask 1043456
      %v569 = vsel %vm567, %v562, 0
      %571 = vmatpush.bf16.msra.mxu0 0
      %572 = vmatpush.bf16.msra.mxu0 0
      %573 = vmatpush.bf16.msra.mxu0 0
      %574 = vmatpush.bf16.msra.mxu0 0
      %575 = vmatpush.bf16.msra.mxu0 0
      %576 = vmatpush.bf16.msra.mxu0 0
      %577 = vmatpush.bf16.msra.mxu0 0
      %578 = vmatpush.bf16.msra.mxu0 %v569
      %579 = vmatmul.bf16.gmra.mxu0 %v565
      %v580 = vpop.f32.mrf.mxu0
      %v581 = vadd.f32 0.0, %v580
      %v582 = vpop.f32.mrf.mxu0
      %583 = vdwg.mxu0
      %v584 = vld [vmem:[%s4] sm:$0xff]
      %586 = vset.pattern.permute.xlu0 0
      %587 = vperm.xlu0 %586, %v584
      %v588 = vpop.permute.xlu0 %587
      %v590 = vmul.f32 %v581, %v588
      %v591 = vld [vmem:[%s5] sm:$0xff]
      %593 = vset.pattern.permute.xlu0 0
      %594 = vperm.xlu0 %593, %v591
      %v595 = vpop.permute.xlu0 %594
      %v597 = vadd.f32 %v590, %v595
      %v598 = vmax.f32 %v597, 0.0
      %v599 = vlaneseq
      %v600 = vand.u32 %v599, 127
      %vm601 = vcmp.lt.s32.totalorder %v600, 0
      %v602 = vsub.s32 0, %v600
      %v603 = vsel %vm601, %v602, %v600
      %v604 = vshrl.u32 %v603, 2
      %v605 = vand.u32 %v603, 3
      %v606 = vsub.s32 0, %v605
      %v607 = vsel %vm601, %v606, %v605
      %vm608 = vcmp.ne.s32.totalorder %v607, 0
      %vm609 = vcmp.lt.s32.totalorder %v607, 0
      %vm610 = vmand %vm609, %vm608
      %v611 = vadd.s32 %v607, 4
      %v612 = vsel %vm610, %v611, %v607
      %vm613 = vcmp.ge.s32.totalorder %v612, 1
      %vm614 = vcmp.le.s32.totalorder %v612, 2
      %616 = vrot.lane.b32.xlu0 %v598, 5
      %v617 = vpop.permute.xlu0 %616
      %vm619 = vcmask 39936
      %v620 = vsel %vm619, 0.0, %v617
      %vm621 = vcmask 171008
      %v622 = vsel %vm621, %v620, 0.0
      %v623 = vsel %vm613, 1, 0
      %vm624 = vcmp.eq.s32.totalorder %v623, 1
      %v625 = vsel %vm624, %v622, 0.0
      %v626 = vsel %vm614, 1, 0
      %vm627 = vcmp.eq.s32.totalorder %v626, 1
      %629 = vrot.lane.b32.xlu0 %v622, 126
      %v630 = vpop.permute.xlu0 %629
      %v632 = vsel %vm627, %v630, 0.0
      %633 = vrot.lane.b32.xlu0 %v622, 124
      %v634 = vpop.permute.xlu0 %633
      %v636 = vsel %vm624, %v634, 0.0
      %637 = vrot.lane.b32.xlu0 %v622, 122
      %v638 = vpop.permute.xlu0 %637
      %v640 = vsel %vm627, %v638, 0.0
      %641 = vrot.lane.b32.xlu0 %v622, 120
      %v642 = vpop.permute.xlu0 %641
      %v644 = vsel %vm624, %v642, 0.0
      %645 = vrot.lane.b32.xlu0 %v622, 118
      %v646 = vpop.permute.xlu0 %645
      %v648 = vsel %vm627, %v646, 0.0
      %649 = vrot.lane.b32.xlu0 %v622, 127
      %v650 = vpop.permute.xlu0 %649
      %652 = vrot.lane.b32.xlu0 %v622, 123
      %v653 = vpop.permute.xlu0 %652
      %655 = vrot.lane.b32.xlu0 %v622, 119
      %v656 = vpop.permute.xlu0 %655
      %v658 = vpack.c.bf16 %v650, %v625
      %v659 = vpack.c.bf16 %v636, %v632
      %v660 = vpack.c.bf16 %v640, %v653
      %v661 = vpack.c.bf16 %v656, %v644
      %v662 = vpack.c.bf16 %v648, %v648
      %v663 = vld [vmem:[%s6] sm:$0x3]
      %vm664 = vcmask 588800
      %v666 = vsel %vm664, %v663, 0
      %v669 = vsel %vm567, %v662, 0
      %671 = vmatpush.bf16.msra.mxu0 0
      %672 = vmatpush.bf16.msra.mxu0 0
      %673 = vmatpush.bf16.msra.mxu0 0
      %674 = vmatpush.bf16.msra.mxu0 %v669
      %675 = vmatpush.bf16.msra.mxu0 %v661
      %676 = vmatpush.bf16.msra.mxu0 %v660
      %677 = vmatpush.bf16.msra.mxu0 %v659
      %678 = vmatpush.bf16.msra.mxu0 %v658
      %679 = vmatmul.bf16.gmra.mxu0 %v666
      %v680 = vpop.f32.mrf.mxu0
      %v681 = vadd.f32 0.0, %v680
      %v682 = vpop.f32.mrf.mxu0
      %683 = vdwg.mxu0
      %v684 = vld [vmem:[%s7] sm:$0xff]
      %v685 = vld [vmem:[%s7 + $0x8] sm:$0xf]
      %687 = vset.pattern.permute.xlu0 0
      %688 = vperm.xlu0 %687, %v684
      %v689 = vpop.permute.xlu0 %688
      %692 = vset.pattern.permute.xlu0 0
      %693 = vperm.xlu0 %692, %v685
      %v694 = vpop.permute.xlu0 %693
      %v696 = vmul.f32 %v545, %v689
      %v697 = vmul.f32 %v681, %v694
      %v698 = vld [vmem:[%s8] sm:$0xff]
      %v699 = vld [vmem:[%s8 + $0x8] sm:$0xf]
      %701 = vset.pattern.permute.xlu0 0
      %702 = vperm.xlu0 %701, %v698
      %v703 = vpop.permute.xlu0 %702
      %706 = vset.pattern.permute.xlu0 0
      %707 = vperm.xlu0 %706, %v699
      %v708 = vpop.permute.xlu0 %707
      %v710 = vadd.f32 %v696, %v703
      %v711 = vadd.f32 %v697, %v708
      %v712 = vmax.f32 %v710, 0.0
      %v713 = vmax.f32 %v711, 0.0
      %v714 = vld [vmem:[%s9] sm:$0xf]
      %v715 = vpack.c.bf16 %v713, %v712
      %vm716 = vcmask 97280
      %v718 = vsel %vm716, %v714, 0
      %vm720 = vcmask 1045504
      %v722 = vsel %vm720, %v715, 0
      %724 = vmatpush.bf16.msra.mxu0 0
      %725 = vmatpush.bf16.msra.mxu0 0
      %726 = vmatpush.bf16.msra.mxu0 0
      %727 = vmatpush.bf16.msra.mxu0 0
      %728 = vmatpush.bf16.msra.mxu0 0
      %729 = vmatpush.bf16.msra.mxu0 0
      %730 = vmatpush.bf16.msra.mxu0 0
      %731 = vmatpush.bf16.msra.mxu0 %v722
      %732 = vmatmul.bf16.gmra.mxu0 %v718
      %v733 = vpop.f32.mrf.mxu0
      %v734 = vadd.f32 0.0, %v733
      %v735 = vpop.f32.mrf.mxu0
      %736 = vdwg.mxu0
      %v737 = vld [vmem:[%s10] sm:$0xff]
      %739 = vset.pattern.permute.xlu0 0
      %740 = vperm.xlu0 %739, %v737
      %v741 = vpop.permute.xlu0 %740
      %v743 = vmul.f32 %v734, %v741
      %v744 = vld [vmem:[%s11] sm:$0xff]
      %746 = vset.pattern.permute.xlu0 0
      %747 = vperm.xlu0 %746, %v744
      %v748 = vpop.permute.xlu0 %747
      %v750 = vadd.f32 %v743, %v748
      %v751 = vmax.f32 %v750, 0.0
      %753 = vrot.lane.b32.xlu0 %v751, 5
      %v754 = vpop.permute.xlu0 %753
      %v756 = vsel %vm619, 0.0, %v754
      %v757 = vsel %vm621, %v756, 0.0
      %v758 = vsel %vm624, %v757, 0.0
      %760 = vrot.lane.b32.xlu0 %v757, 126
      %v761 = vpop.permute.xlu0 %760
      %v763 = vsel %vm627, %v761, 0.0
      %764 = vrot.lane.b32.xlu0 %v757, 124
      %v765 = vpop.permute.xlu0 %764
      %v767 = vsel %vm624, %v765, 0.0
      %768 = vrot.lane.b32.xlu0 %v757, 122
      %v769 = vpop.permute.xlu0 %768
      %v771 = vsel %vm627, %v769, 0.0
      %772 = vrot.lane.b32.xlu0 %v757, 120
      %v773 = vpop.permute.xlu0 %772
      %v775 = vsel %vm624, %v773, 0.0
      %776 = vrot.lane.b32.xlu0 %v757, 118
      %v777 = vpop.permute.xlu0 %776
      %v779 = vsel %vm627, %v777, 0.0
      %780 = vrot.lane.b32.xlu0 %v757, 127
      %v781 = vpop.permute.xlu0 %780
      %783 = vrot.lane.b32.xlu0 %v757, 123
      %v784 = vpop.permute.xlu0 %783
      %786 = vrot.lane.b32.xlu0 %v757, 119
      %v787 = vpop.permute.xlu0 %786
      %v789 = vpack.c.bf16 %v781, %v758
      %v790 = vpack.c.bf16 %v767, %v763
      %v791 = vpack.c.bf16 %v771, %v784
      %v792 = vpack.c.bf16 %v787, %v775
      %v793 = vpack.c.bf16 %v779, %v779
      %v794 = vld [vmem:[%s12] sm:$0x3]
      %v796 = vsel %vm664, %v794, 0
      %v799 = vsel %vm567, %v793, 0
      %801 = vmatpush.bf16.msra.mxu0 0
      %802 = vmatpush.bf16.msra.mxu0 0
      %803 = vmatpush.bf16.msra.mxu0 0
      %804 = vmatpush.bf16.msra.mxu0 %v799
      %805 = vmatpush.bf16.msra.mxu0 %v792
      %806 = vmatpush.bf16.msra.mxu0 %v791
      %807 = vmatpush.bf16.msra.mxu0 %v790
      %808 = vmatpush.bf16.msra.mxu0 %v789
      %809 = vmatmul.bf16.gmra.mxu0 %v796
      %v810 = vpop.f32.mrf.mxu0
      %v811 = vadd.f32 0.0, %v810
      %v812 = vpop.f32.mrf.mxu0
      %813 = vdwg.mxu0
      %v815 = vrot.slane %v811, 4
      %v817 = vsel %vm567, %v681, %v815
      %v818 = vld [vmem:[%s13] sm:$0xff]
      %v819 = vld [vmem:[%s13 + $0x8] sm:$0xff]
      %821 = vset.pattern.permute.xlu0 0
      %822 = vperm.xlu0 %821, %v818
      %v823 = vpop.permute.xlu0 %822
      %826 = vset.pattern.permute.xlu0 0
      %827 = vperm.xlu0 %826, %v819
      %v828 = vpop.permute.xlu0 %827
      %v830 = vmul.f32 %v545, %v823
      %v831 = vmul.f32 %v817, %v828
      %v832 = vld [vmem:[%s14] sm:$0xff]
      %v833 = vld [vmem:[%s14 + $0x8] sm:$0xff]
      %835 = vset.pattern.permute.xlu0 0
      %836 = vperm.xlu0 %835, %v832
      %v837 = vpop.permute.xlu0 %836
      %840 = vset.pattern.permute.xlu0 0
      %841 = vperm.xlu0 %840, %v833
      %v842 = vpop.permute.xlu0 %841
      %v844 = vadd.f32 %v830, %v837
      %v845 = vadd.f32 %v831, %v842
      %v846 = vmax.f32 %v844, 0.0
      %v847 = vmax.f32 %v845, 0.0
      %v848 = vld [vmem:[%s15] sm:$0xf]
      %v849 = vpack.c.bf16 %v847, %v846
      %vm850 = vcmask 130048
      %v852 = vsel %vm850, %v848, 0
      %854 = vmatpush.bf16.msra.mxu0 0
      %855 = vmatpush.bf16.msra.mxu0 0
      %856 = vmatpush.bf16.msra.mxu0 0
      %857 = vmatpush.bf16.msra.mxu0 0
      %858 = vmatpush.bf16.msra.mxu0 0
      %859 = vmatpush.bf16.msra.mxu0 0
      %860 = vmatpush.bf16.msra.mxu0 0
      %861 = vmatpush.bf16.msra.mxu0 %v849
      %862 = vmatmul.bf16.gmra.mxu0 %v852
      %v863 = vpop.f32.mrf.mxu0
      %v864 = vadd.f32 0.0, %v863
      %v865 = vpop.f32.mrf.mxu0
      %866 = vdwg.mxu0
      %v867 = vpack.c.bf16 %v864, %v864
      %v868 = vld [vmem:[%s16] sm:$0xf]
      %v869 = vld [vmem:[%s16 + $0x4] sm:$0xf]
      %v872 = vunpack.c.l.b16 %v868
      %v873 = vunpack.c.l.b16 %v869
      %v874 = vpack.c.b16 %v873, %v872
      %v877 = vsel %vm850, %v867, 0
      %879 = vmatpush.bf16.msra.mxu0 0
      %880 = vmatpush.bf16.msra.mxu0 0
      %881 = vmatpush.bf16.msra.mxu0 0
      %882 = vmatpush.bf16.msra.mxu0 0
      %883 = vmatpush.bf16.msra.mxu0 0
      %884 = vmatpush.bf16.msra.mxu0 0
      %885 = vmatpush.bf16.msra.mxu0 0
      %886 = vmatpush.bf16.msra.mxu0 %v874
      %887 = vmatmul.bf16.gmra.mxu0 %v877
      %v888 = vpop.f32.mrf.mxu0
      %v889 = vadd.f32 0.0, %v888
      %v890 = vpop.f32.mrf.mxu0
      %891 = vdwg.mxu0
      %vm892 = vcmask 31744
      %893 = vst.msk [vmem:[%s543] sm:$0xff] %vm892, %v889
      %p894 = scmp.lt.s32.totalorder %s28, 1
      %s895 = scalar_select %p894, %s28, 1
      %s896 = smul.addr %s895, 8
      %s897 = scalar_lea.vmem %s17, %s896
      // Predicated region
      $region89: #{encoder_forward.8} parent=87 // pred_check
        %p898 = pneg %p408
      $region90: #{encoder_forward.8} parent=87 // pred_check_branch
        %900 = sbr.rel (%p898) target = $region92
      $region91: #{encoder_forward.8} parent=87 // pred_region
        _
      $region92: #{encoder_forward.8} parent=87 // pred_fallthru
        _
    $region88: #{encoder_forward.8} parent=5 // pred_fallthru
      _
    %p901 = scmp.le.s32.totalorder 2, %s23
    // Predicated region
    $region93: #{encoder_forward.8} parent=5 // pred_check
      %p902 = pneg %p901
    $region94: #{encoder_forward.8} parent=5 // pred_check_branch
      %904 = sbr.rel (%p902) target = $region96
    $region95: #{encoder_forward.8} parent=5 // pred_region
      %s905 = ssub.s32 %s23, 2
      // Predicated region
      $region97: #{encoder_forward.8} parent=95 // pred_check
        %p906 = pneg %p414
      $region98: #{encoder_forward.8} parent=95 // pred_check_branch
        %908 = sbr.rel (%p906) target = $region100
      $region99: #{encoder_forward.8} parent=95 // pred_region
        %p909 = scmp.lt.s32.totalorder %s29, 1
        %s910 = scalar_select %p909, %s29, 1
        %s911 = smul.addr %s910, 8
        %s912 = scalar_lea.vmem %s17, %s911
      $region100: #{encoder_forward.8} parent=95 // pred_fallthru
        _
    $region96: #{encoder_forward.8} parent=5 // pred_fallthru
      _
  $region6: #{encoder_forward.8} parent=0 // loop_footer
    %s27 = sadd.s32 1, %s23
  $region7: #{encoder_forward.8} parent=0 // loop_footer_branch
    %22 = sbr.rel target = $region3
  $region8: #{encoder_forward.8} parent=0 // loop_exit
    _

</llo_original>
